<compile_context>
chip_gen: v7x
topology: tpu7x:2x2x1
jax: 0.10.0
libtpu: 0.0.40
codegen_flags: <defaults>
</compile_context>

<pallas_src>
import functools

import jax
import jax.numpy as jnp
from jax import lax
from jax.experimental import pallas as pl
from jax.experimental.pallas import tpu as pltpu


def _per_step_vmem_bytes(R, W, Cin, Cmid, Cout):
    """Rough per-grid-step VMEM estimate (double-buffered blocks + live values)."""
    bf2, f4 = 2, 4
    io = 2 * ((R + 4) * (W + 2) * Cin * bf2 + R * W * Cout * f4)   # dbl-buffered I/O
    wts = 9 * Cin * Cmid * bf2 + 9 * Cmid * Cout * bf2 + 2 * (Cmid + Cout) * f4
    live = ((R + 4) * (W + 2) * Cin * bf2            # main+halo row slab (bf16)
            + (R + 2) * W * 3 * Cin * bf2            # one conv1 dy tap slab (bf16)
            + (R + 2) * W * Cmid * (f4 + bf2)        # conv1 acc/y1 (f32) + bf16 copy
            + (R + 2) * (W + 2) * Cmid * bf2         # conv2 padded intermediate
            + R * W * 3 * Cmid * bf2                 # one conv2 dy tap slab (bf16)
            + R * W * Cout * f4)                     # conv2 acc (f32)
    return io + wts + live


def _pick_row_block(N, H, W, Cin, Cmid, Cout, budget_bytes=40 * 2**20):
    """Largest VMEM-fitting R (multiple of 4, divides H); big R amortizes the
    ~0.35 us/step overhead, the 2/R halo recompute and the 4/R duplicate DMA."""
    if H % 4 != 0 or W % 8 != 0:
        raise NotImplementedError(
            "DoubleConv Pallas kernel requires H % 4 == 0 and W % 8 == 0")
    cands = [R for R in (256, 128, 64, 32, 16, 8, 4) if R <= H and H % R == 0]
    if N == 1:  # keep >= 2 row blocks so both v7x TensorCores get work
        two = [R for R in cands if H // R >= 2]
        cands = two or cands
    for R in cands:
        if _per_step_vmem_bytes(R, W, Cin, Cmid, Cout) <= budget_bytes:
            return R
    return cands[-1]


def _double_conv_kernel(x_main_ref, x_halo_ref, w1_ref, s1_ref, b1_ref,
                        w2_ref, s2_ref, b2_ref, o_ref):
    """R output rows of (conv3x3 -> BN -> ReLU) x 2 for one image.

    x_main_ref : (1, R, W+2, Cin) bf16   padded-input rows [r*R, r*R+R)
    x_halo_ref : (1, 4, W+2, Cin) bf16   padded-input rows [r*R+R, r*R+R+4)
    w1_ref     : (3, 3*Cin, Cmid) bf16   dy-split im2col conv1 weights
    s1_ref/b1_ref : (1, Cmid) f32        folded BN1 scale / bias
    w2_ref     : (3, 3*Cmid, Cout) bf16  dy-split im2col conv2 weights
    s2_ref/b2_ref : (1, Cout) f32        folded BN2 scale / bias
    o_ref      : (1, R, W, Cout)  f32    output rows [r*R, r*R+R)
    """
    _, R, Wp2, Cin = x_main_ref.shape
    W = Wp2 - 2
    Cmid = w1_ref.shape[2]
    Cout = o_ref.shape[3]
    r = pl.program_id(1)
    nb = pl.num_programs(1)

    # bf16 row slab covering the R output rows + the +-1-row "mid" halo support.
    x_ext = jnp.concatenate([x_main_ref[0], x_halo_ref[0]], axis=0)  # (R+4, W+2, Cin)

    # ---- conv1: dy-split im2col (3 accumulated dots, K = 3*Cin each) ----
    acc1 = jnp.zeros(((R + 2) * W, Cmid), jnp.float32)
    for dy in range(3):
        slab = jnp.concatenate(
            [x_ext[dy:dy + R + 2, dx:dx + W, :] for dx in range(3)], axis=-1)
        slab = slab.reshape((R + 2) * W, 3 * Cin)                     # bf16
        acc1 = acc1 + jnp.dot(slab, w1_ref[dy],
                              preferred_element_type=jnp.float32)

    y1 = jnp.maximum(acc1 * s1_ref[0] + b1_ref[0], 0.0)               # BN1 + ReLU
    y1 = y1.reshape(R + 2, W, Cmid)

    # Only the first/last halo rows of y1 can fall outside the image; zero them
    # there so they act as conv2's zero padding in H (no full-slab select).
    top_keep = jnp.where(r > 0, 1.0, 0.0)
    bot_keep = jnp.where(r < nb - 1, 1.0, 0.0)
    y1 = jnp.concatenate(
        [y1[0:1] * top_keep, y1[1:R + 1], y1[R + 1:R + 2] * bot_keep], axis=0)
    y1 = y1.astype(jnp.bfloat16)

    # conv2's zero padding in W: two bf16 zero columns (keeps matmul reshapes
    # W-aligned; small next to the dy tap slabs).
    zcol = jnp.zeros((R + 2, 1, Cmid), jnp.bfloat16)
    y1p = jnp.concatenate([zcol, y1, zcol], axis=1)                   # (R+2, W+2, Cmid)

    # ---- conv2: dy-split im2col (3 accumulated dots, K = 3*Cmid each) ----
    acc2 = jnp.zeros((R * W, Cout), jnp.float32)
    for dy in range(3):
        slab = jnp.concatenate(
            [y1p[dy:dy + R, dx:dx + W, :] for dx in range(3)], axis=-1)
        slab = slab.reshape(R * W, 3 * Cmid)                          # bf16
        acc2 = acc2 + jnp.dot(slab, w2_ref[dy],
                              preferred_element_type=jnp.float32)

    y2 = jnp.maximum(acc2 * s2_ref[0] + b2_ref[0], 0.0)               # BN2 + ReLU
    o_ref[0] = y2.reshape(R, W, Cout).astype(o_ref.dtype)


def _fold_bn(conv_bias, gamma, beta, mean, var, eps=1e-5):
    scale = gamma / jnp.sqrt(var + eps)
    bias = scale * (conv_bias - mean) + beta
    return scale, bias


@jax.jit
def double_conv_pallas(x_nchw, params):
    """Forward pass of DoubleConv. x_nchw: (N, Cin, H, W) f32 -> (N, Cout, H, W)."""
    (w1, b1c, g1, bt1, m1, v1, w2, b2c, g2, bt2, m2, v2) = params
    N, Cin, H, W = x_nchw.shape
    Cmid = w1.shape[0]
    Cout = w2.shape[0]
    R = _pick_row_block(N, H, W, Cin, Cmid, Cout)
    nb = H // R

    # NCHW -> NHWC (channels on lanes); pad rows by 2 (conv1 pad + conv2 halo)
    # and cols by 1 (conv1 pad); bf16 halves the input DMA.
    x = jnp.transpose(x_nchw, (0, 2, 3, 1)).astype(jnp.bfloat16)
    x = jnp.pad(x, ((0, 0), (2, 2), (1, 1), (0, 0)))          # (N, H+4, W+2, Cin)

    # (C_out, C_in, 3, 3) -> (dy, dx*C_in, C_out) dy-split im2col layout, bf16.
    w1m = jnp.transpose(w1, (2, 3, 1, 0)).reshape(3, 3 * Cin, Cmid).astype(jnp.bfloat16)
    w2m = jnp.transpose(w2, (2, 3, 1, 0)).reshape(3, 3 * Cmid, Cout).astype(jnp.bfloat16)

    s1, bb1 = _fold_bn(b1c, g1, bt1, m1, v1)
    s2, bb2 = _fold_bn(b2c, g2, bt2, m2, v2)
    s1 = s1.reshape(1, Cmid).astype(jnp.float32)
    bb1 = bb1.reshape(1, Cmid).astype(jnp.float32)
    s2 = s2.reshape(1, Cout).astype(jnp.float32)
    bb2 = bb2.reshape(1, Cout).astype(jnp.float32)

    est = _per_step_vmem_bytes(R, W, Cin, Cmid, Cout)
    vmem_limit = int(min(48 * 2**20, max(8 * 2**20, 3 * est)))
    cost = pl.CostEstimate(
        flops=2 * N * H * W * 9 * (Cin * Cmid + Cmid * Cout),
        transcendentals=0,
        bytes_accessed=(N * (H + 4) * (W + 2) * Cin * 2
                        + 9 * Cin * Cmid * 2 + 9 * Cmid * Cout * 2
                        + 2 * (Cmid + Cout) * 4 + N * H * W * Cout * 4))

    out_nhwc = pl.pallas_call(
        _double_conv_kernel,
        out_shape=jax.ShapeDtypeStruct((N, H, W, Cout), jnp.float32),
        grid_spec=pltpu.PrefetchScalarGridSpec(
            num_scalar_prefetch=0,
            grid=(N, nb),
            in_specs=[
                # main R rows of the padded input for row-block r
                pl.BlockSpec((1, R, W + 2, Cin), lambda n, r: (n, r, 0, 0)),
                # 4-row bottom halo (rows [r*R+R, r*R+R+4) of the padded input)
                pl.BlockSpec((1, 4, W + 2, Cin),
                             lambda n, r: (n, (r + 1) * (R // 4), 0, 0)),
                # weights / folded BN params: constant index maps -> resident
                pl.BlockSpec((3, 3 * Cin, Cmid), lambda n, r: (0, 0, 0)),
                pl.BlockSpec((1, Cmid), lambda n, r: (0, 0)),
                pl.BlockSpec((1, Cmid), lambda n, r: (0, 0)),
                pl.BlockSpec((3, 3 * Cmid, Cout), lambda n, r: (0, 0, 0)),
                pl.BlockSpec((1, Cout), lambda n, r: (0, 0)),
                pl.BlockSpec((1, Cout), lambda n, r: (0, 0)),
            ],
            out_specs=pl.BlockSpec((1, R, W, Cout), lambda n, r: (n, r, 0, 0)),
        ),
        compiler_params=pltpu.CompilerParams(
            dimension_semantics=("parallel", "parallel"),
            vmem_limit_bytes=vmem_limit),
        cost_estimate=cost,
    )(x, x, w1m, s1, bb1, w2m, s2, bb2)

    # NHWC -> NCHW to match the PyTorch output convention.
    return jnp.transpose(out_nhwc, (0, 3, 1, 2))


def double_conv_reference(x_nchw, params, eps=1e-5):
    """Pure-JAX f32 reference (lax.conv) for correctness checking."""
    (w1, b1c, g1, bt1, m1, v1, w2, b2c, g2, bt2, m2, v2) = params

    def conv_bn_relu(x, w, b, g, bt, m, v):
        y = lax.conv_general_dilated(
            x, w, window_strides=(1, 1), padding=((1, 1), (1, 1)),
            dimension_numbers=("NCHW", "OIHW", "NCHW"))
        y = y + b[None, :, None, None]
        y = (y - m[None, :, None, None]) / jnp.sqrt(v[None, :, None, None] + eps)
        y = y * g[None, :, None, None] + bt[None, :, None, None]
        return jnp.maximum(y, 0.0)

    y = conv_bn_relu(x_nchw, w1, b1c, g1, bt1, m1, v1)
    y = conv_bn_relu(y, w2, b2c, g2, bt2, m2, v2)
    return y


def make_params(key, in_channels, mid_channels, out_channels):
    ks = jax.random.split(key, 12)
    w1 = jax.random.normal(ks[0], (mid_channels, in_channels, 3, 3), jnp.float32) * 0.1
    b1c = jax.random.normal(ks[1], (mid_channels,), jnp.float32) * 0.1
    g1 = 1.0 + 0.1 * jax.random.normal(ks[2], (mid_channels,), jnp.float32)
    bt1 = 0.1 * jax.random.normal(ks[3], (mid_channels,), jnp.float32)
    m1 = 0.1 * jax.random.normal(ks[4], (mid_channels,), jnp.float32)
    v1 = 1.0 + 0.1 * jax.nn.softplus(jax.random.normal(ks[5], (mid_channels,), jnp.float32))
    w2 = jax.random.normal(ks[6], (out_channels, mid_channels, 3, 3), jnp.float32) * 0.1
    b2c = jax.random.normal(ks[7], (out_channels,), jnp.float32) * 0.1
    g2 = 1.0 + 0.1 * jax.random.normal(ks[8], (out_channels,), jnp.float32)
    bt2 = 0.1 * jax.random.normal(ks[9], (out_channels,), jnp.float32)
    m2 = 0.1 * jax.random.normal(ks[10], (out_channels,), jnp.float32)
    v2 = 1.0 + 0.1 * jax.nn.softplus(jax.random.normal(ks[11], (out_channels,), jnp.float32))
    return (w1, b1c, g1, bt1, m1, v1, w2, b2c, g2, bt2, m2, v2)


if __name__ == "__main__":
    key = jax.random.PRNGKey(0)
    k_x, k_p = jax.random.split(key)

    N, Cin, H, W = 2, 4, 16, 16
    Cmid = Cout = 8

    x = jax.random.normal(k_x, (N, Cin, H, W), jnp.float32)
    params = make_params(k_p, Cin, Cmid, Cout)

    out = jax.block_until_ready(double_conv_pallas(x, params))
    ref = double_conv_reference(x, params)

    assert out.shape == (N, Cout, H, W), out.shape
    max_err = jnp.max(jnp.abs(out - ref))
    # bf16 matmul inputs -> loosened tolerance vs. the f32 reference.
    assert jnp.allclose(out, ref, atol=5e-2, rtol=5e-2), f"max err {max_err}"

    print("KERNEL_OK")
</pallas_src>

<mosaic_0001>
module attributes {stable_mosaic.version = 11 : i64} {
  func.func @_double_conv_kernel(%arg0: i32, %arg1: i32, %arg2: memref<1x16x18x4xbf16, #tpu.memory_space<vmem>>, %arg3: memref<1x4x18x4xbf16, #tpu.memory_space<vmem>>, %arg4: memref<3x12x8xbf16, #tpu.memory_space<vmem>>, %arg5: memref<1x8xf32, #tpu.memory_space<vmem>>, %arg6: memref<1x8xf32, #tpu.memory_space<vmem>>, %arg7: memref<3x24x8xbf16, #tpu.memory_space<vmem>>, %arg8: memref<1x8xf32, #tpu.memory_space<vmem>>, %arg9: memref<1x8xf32, #tpu.memory_space<vmem>>, %arg10: memref<1x16x16x8xf32, #tpu.memory_space<vmem>>) attributes {dimension_semantics = [#tpu.dimension_semantics<parallel>, #tpu.dimension_semantics<parallel>], iteration_bounds = array<i64: 2, 1>, scalar_prefetch = 0 : i64, scratch_operands = 0 : i64, tpu.core_type = #tpu.core_type<tc>, window_params = [{transform_indices = @transform_0, window_bounds = array<i64: 1, 16, 18, 4>}, {transform_indices = @transform_1, window_bounds = array<i64: 1, 4, 18, 4>}, {pipeline_mode = #tpu.pipeline_mode<synchronous>, transform_indices = @transform_2, window_bounds = array<i64: 3, 12, 8>}, {pipeline_mode = #tpu.pipeline_mode<synchronous>, transform_indices = @transform_3, window_bounds = array<i64: 1, 8>}, {pipeline_mode = #tpu.pipeline_mode<synchronous>, transform_indices = @transform_4, window_bounds = array<i64: 1, 8>}, {pipeline_mode = #tpu.pipeline_mode<synchronous>, transform_indices = @transform_5, window_bounds = array<i64: 3, 24, 8>}, {pipeline_mode = #tpu.pipeline_mode<synchronous>, transform_indices = @transform_6, window_bounds = array<i64: 1, 8>}, {pipeline_mode = #tpu.pipeline_mode<synchronous>, transform_indices = @transform_7, window_bounds = array<i64: 1, 8>}, {transform_indices = @transform_8, window_bounds = array<i64: 1, 16, 16, 8>}]} {
    %c0 = arith.constant 0 : index
    %c0_0 = arith.constant 0 : index
    %c0_1 = arith.constant 0 : index
    %c0_2 = arith.constant 0 : index
    %0 = vector.load %arg2[%c0, %c0_0, %c0_1, %c0_2] : memref<1x16x18x4xbf16, #tpu.memory_space<vmem>>, vector<1x16x18x4xbf16>
    %1 = vector.shape_cast %0 : vector<1x16x18x4xbf16> to vector<16x18x4xbf16>
    %c0_3 = arith.constant 0 : index
    %c0_4 = arith.constant 0 : index
    %c0_5 = arith.constant 0 : index
    %c0_6 = arith.constant 0 : index
    %2 = vector.load %arg3[%c0_3, %c0_4, %c0_5, %c0_6] : memref<1x4x18x4xbf16, #tpu.memory_space<vmem>>, vector<1x4x18x4xbf16>
    %3 = vector.shape_cast %2 : vector<1x4x18x4xbf16> to vector<4x18x4xbf16>
    %4 = tpu.concatenate %1, %3 in 0 : vector<16x18x4xbf16>, vector<4x18x4xbf16> -> vector<20x18x4xbf16>
    %cst = arith.constant 0.000000e+00 : f32
    %5 = vector.broadcast %cst : f32 to vector<288x8xf32>
    %6 = vector.extract_strided_slice %4 {offsets = [0, 0, 0], sizes = [18, 16, 4], strides = [1, 1, 1]} : vector<20x18x4xbf16> to vector<18x16x4xbf16>
    %7 = vector.extract_strided_slice %4 {offsets = [0, 1, 0], sizes = [18, 16, 4], strides = [1, 1, 1]} : vector<20x18x4xbf16> to vector<18x16x4xbf16>
    %8 = vector.extract_strided_slice %4 {offsets = [0, 2, 0], sizes = [18, 16, 4], strides = [1, 1, 1]} : vector<20x18x4xbf16> to vector<18x16x4xbf16>
    %9 = tpu.concatenate %6, %7, %8 in 2 : vector<18x16x4xbf16>, vector<18x16x4xbf16>, vector<18x16x4xbf16> -> vector<18x16x12xbf16>
    %10 = vector.shape_cast %9 : vector<18x16x12xbf16> to vector<288x12xbf16>
    %c0_7 = arith.constant 0 : index
    %c0_8 = arith.constant 0 : index
    %c0_9 = arith.constant 0 : index
    %11 = vector.load %arg4[%c0_7, %c0_8, %c0_9] : memref<3x12x8xbf16, #tpu.memory_space<vmem>>, vector<1x12x8xbf16>
    %12 = vector.shape_cast %11 : vector<1x12x8xbf16> to vector<12x8xbf16>
    %cst_10 = arith.constant dense<0.000000e+00> : vector<288x8xf32>
    %13 = tpu.matmul %10, %12, %cst_10 {dimension_numbers = #tpu.dot_dimension_numbers<[1], [0], [0], [1], [0, 0, 1, 1], [], []>} : vector<288x12xbf16>, vector<12x8xbf16>, vector<288x8xf32> -> vector<288x8xf32>
    %14 = arith.addf %5, %13 : vector<288x8xf32>
    %15 = vector.extract_strided_slice %4 {offsets = [1, 0, 0], sizes = [18, 16, 4], strides = [1, 1, 1]} : vector<20x18x4xbf16> to vector<18x16x4xbf16>
    %16 = vector.extract_strided_slice %4 {offsets = [1, 1, 0], sizes = [18, 16, 4], strides = [1, 1, 1]} : vector<20x18x4xbf16> to vector<18x16x4xbf16>
    %17 = vector.extract_strided_slice %4 {offsets = [1, 2, 0], sizes = [18, 16, 4], strides = [1, 1, 1]} : vector<20x18x4xbf16> to vector<18x16x4xbf16>
    %18 = tpu.concatenate %15, %16, %17 in 2 : vector<18x16x4xbf16>, vector<18x16x4xbf16>, vector<18x16x4xbf16> -> vector<18x16x12xbf16>
    %19 = vector.shape_cast %18 : vector<18x16x12xbf16> to vector<288x12xbf16>
    %c1 = arith.constant 1 : index
    %c0_11 = arith.constant 0 : index
    %c0_12 = arith.constant 0 : index
    %20 = vector.load %arg4[%c1, %c0_11, %c0_12] : memref<3x12x8xbf16, #tpu.memory_space<vmem>>, vector<1x12x8xbf16>
    %21 = vector.shape_cast %20 : vector<1x12x8xbf16> to vector<12x8xbf16>
    %cst_13 = arith.constant dense<0.000000e+00> : vector<288x8xf32>
    %22 = tpu.matmul %19, %21, %cst_13 {dimension_numbers = #tpu.dot_dimension_numbers<[1], [0], [0], [1], [0, 0, 1, 1], [], []>} : vector<288x12xbf16>, vector<12x8xbf16>, vector<288x8xf32> -> vector<288x8xf32>
    %23 = arith.addf %14, %22 : vector<288x8xf32>
    %24 = vector.extract_strided_slice %4 {offsets = [2, 0, 0], sizes = [18, 16, 4], strides = [1, 1, 1]} : vector<20x18x4xbf16> to vector<18x16x4xbf16>
    %25 = vector.extract_strided_slice %4 {offsets = [2, 1, 0], sizes = [18, 16, 4], strides = [1, 1, 1]} : vector<20x18x4xbf16> to vector<18x16x4xbf16>
    %26 = vector.extract_strided_slice %4 {offsets = [2, 2, 0], sizes = [18, 16, 4], strides = [1, 1, 1]} : vector<20x18x4xbf16> to vector<18x16x4xbf16>
    %27 = tpu.concatenate %24, %25, %26 in 2 : vector<18x16x4xbf16>, vector<18x16x4xbf16>, vector<18x16x4xbf16> -> vector<18x16x12xbf16>
    %28 = vector.shape_cast %27 : vector<18x16x12xbf16> to vector<288x12xbf16>
    %c2 = arith.constant 2 : index
    %c0_14 = arith.constant 0 : index
    %c0_15 = arith.constant 0 : index
    %29 = vector.load %arg4[%c2, %c0_14, %c0_15] : memref<3x12x8xbf16, #tpu.memory_space<vmem>>, vector<1x12x8xbf16>
    %30 = vector.shape_cast %29 : vector<1x12x8xbf16> to vector<12x8xbf16>
    %cst_16 = arith.constant dense<0.000000e+00> : vector<288x8xf32>
    %31 = tpu.matmul %28, %30, %cst_16 {dimension_numbers = #tpu.dot_dimension_numbers<[1], [0], [0], [1], [0, 0, 1, 1], [], []>} : vector<288x12xbf16>, vector<12x8xbf16>, vector<288x8xf32> -> vector<288x8xf32>
    %32 = arith.addf %23, %31 : vector<288x8xf32>
    %c0_17 = arith.constant 0 : index
    %c0_18 = arith.constant 0 : index
    %33 = vector.load %arg5[%c0_17, %c0_18] : memref<1x8xf32, #tpu.memory_space<vmem>>, vector<1x8xf32>
    %34 = vector.shape_cast %33 : vector<1x8xf32> to vector<8xf32>
    %35 = vector.shape_cast %34 : vector<8xf32> to vector<1x8xf32>
    %36 = vector.broadcast %35 : vector<1x8xf32> to vector<288x8xf32>
    %37 = arith.mulf %32, %36 : vector<288x8xf32>
    %c0_19 = arith.constant 0 : index
    %c0_20 = arith.constant 0 : index
    %38 = vector.load %arg6[%c0_19, %c0_20] : memref<1x8xf32, #tpu.memory_space<vmem>>, vector<1x8xf32>
    %39 = vector.shape_cast %38 : vector<1x8xf32> to vector<8xf32>
    %40 = vector.shape_cast %39 : vector<8xf32> to vector<1x8xf32>
    %41 = vector.broadcast %40 : vector<1x8xf32> to vector<288x8xf32>
    %42 = arith.addf %37, %41 : vector<288x8xf32>
    %cst_21 = arith.constant 0.000000e+00 : f32
    %43 = vector.broadcast %cst_21 : f32 to vector<288x8xf32>
    %44 = arith.maximumf %42, %43 : vector<288x8xf32>
    %45 = vector.shape_cast %44 : vector<288x8xf32> to vector<18x16x8xf32>
    %c0_i32 = arith.constant 0 : i32
    %46 = arith.cmpi sgt, %arg1, %c0_i32 : i32
    %cst_22 = arith.constant 1.000000e+00 : f32
    %cst_23 = arith.constant 0.000000e+00 : f32
    %47 = arith.select %46, %cst_22, %cst_23 : f32
    %c0_i32_24 = arith.constant 0 : i32
    %48 = arith.cmpi slt, %arg1, %c0_i32_24 : i32
    %cst_25 = arith.constant 1.000000e+00 : f32
    %cst_26 = arith.constant 0.000000e+00 : f32
    %49 = arith.select %48, %cst_25, %cst_26 : f32
    %50 = vector.extract_strided_slice %45 {offsets = [0, 0, 0], sizes = [1, 16, 8], strides = [1, 1, 1]} : vector<18x16x8xf32> to vector<1x16x8xf32>
    %51 = vector.broadcast %47 : f32 to vector<1x16x8xf32>
    %52 = arith.mulf %50, %51 : vector<1x16x8xf32>
    %53 = vector.extract_strided_slice %45 {offsets = [1, 0, 0], sizes = [16, 16, 8], strides = [1, 1, 1]} : vector<18x16x8xf32> to vector<16x16x8xf32>
    %54 = vector.extract_strided_slice %45 {offsets = [17, 0, 0], sizes = [1, 16, 8], strides = [1, 1, 1]} : vector<18x16x8xf32> to vector<1x16x8xf32>
    %55 = vector.broadcast %49 : f32 to vector<1x16x8xf32>
    %56 = arith.mulf %54, %55 : vector<1x16x8xf32>
    %57 = tpu.concatenate %52, %53, %56 in 0 : vector<1x16x8xf32>, vector<16x16x8xf32>, vector<1x16x8xf32> -> vector<18x16x8xf32>
    %58 = arith.truncf %57 : vector<18x16x8xf32> to vector<18x16x8xbf16>
    %cst_27 = arith.constant 0.000000e+00 : bf16
    %59 = vector.broadcast %cst_27 : bf16 to vector<18x1x8xbf16>
    %60 = tpu.concatenate %59, %58, %59 in 1 : vector<18x1x8xbf16>, vector<18x16x8xbf16>, vector<18x1x8xbf16> -> vector<18x18x8xbf16>
    %cst_28 = arith.constant 0.000000e+00 : f32
    %61 = vector.broadcast %cst_28 : f32 to vector<256x8xf32>
    %62 = vector.extract_strided_slice %60 {offsets = [0, 0, 0], sizes = [16, 16, 8], strides = [1, 1, 1]} : vector<18x18x8xbf16> to vector<16x16x8xbf16>
    %63 = vector.extract_strided_slice %60 {offsets = [0, 1, 0], sizes = [16, 16, 8], strides = [1, 1, 1]} : vector<18x18x8xbf16> to vector<16x16x8xbf16>
    %64 = vector.extract_strided_slice %60 {offsets = [0, 2, 0], sizes = [16, 16, 8], strides = [1, 1, 1]} : vector<18x18x8xbf16> to vector<16x16x8xbf16>
    %65 = tpu.concatenate %62, %63, %64 in 2 : vector<16x16x8xbf16>, vector<16x16x8xbf16>, vector<16x16x8xbf16> -> vector<16x16x24xbf16>
    %66 = vector.shape_cast %65 : vector<16x16x24xbf16> to vector<256x24xbf16>
    %c0_29 = arith.constant 0 : index
    %c0_30 = arith.constant 0 : index
    %c0_31 = arith.constant 0 : index
    %67 = vector.load %arg7[%c0_29, %c0_30, %c0_31] : memref<3x24x8xbf16, #tpu.memory_space<vmem>>, vector<1x24x8xbf16>
    %68 = vector.shape_cast %67 : vector<1x24x8xbf16> to vector<24x8xbf16>
    %cst_32 = arith.constant dense<0.000000e+00> : vector<256x8xf32>
    %69 = tpu.matmul %66, %68, %cst_32 {dimension_numbers = #tpu.dot_dimension_numbers<[1], [0], [0], [1], [0, 0, 1, 1], [], []>} : vector<256x24xbf16>, vector<24x8xbf16>, vector<256x8xf32> -> vector<256x8xf32>
    %70 = arith.addf %61, %69 : vector<256x8xf32>
    %71 = vector.extract_strided_slice %60 {offsets = [1, 0, 0], sizes = [16, 16, 8], strides = [1, 1, 1]} : vector<18x18x8xbf16> to vector<16x16x8xbf16>
    %72 = vector.extract_strided_slice %60 {offsets = [1, 1, 0], sizes = [16, 16, 8], strides = [1, 1, 1]} : vector<18x18x8xbf16> to vector<16x16x8xbf16>
    %73 = vector.extract_strided_slice %60 {offsets = [1, 2, 0], sizes = [16, 16, 8], strides = [1, 1, 1]} : vector<18x18x8xbf16> to vector<16x16x8xbf16>
    %74 = tpu.concatenate %71, %72, %73 in 2 : vector<16x16x8xbf16>, vector<16x16x8xbf16>, vector<16x16x8xbf16> -> vector<16x16x24xbf16>
    %75 = vector.shape_cast %74 : vector<16x16x24xbf16> to vector<256x24xbf16>
    %c1_33 = arith.constant 1 : index
    %c0_34 = arith.constant 0 : index
    %c0_35 = arith.constant 0 : index
    %76 = vector.load %arg7[%c1_33, %c0_34, %c0_35] : memref<3x24x8xbf16, #tpu.memory_space<vmem>>, vector<1x24x8xbf16>
    %77 = vector.shape_cast %76 : vector<1x24x8xbf16> to vector<24x8xbf16>
    %cst_36 = arith.constant dense<0.000000e+00> : vector<256x8xf32>
    %78 = tpu.matmul %75, %77, %cst_36 {dimension_numbers = #tpu.dot_dimension_numbers<[1], [0], [0], [1], [0, 0, 1, 1], [], []>} : vector<256x24xbf16>, vector<24x8xbf16>, vector<256x8xf32> -> vector<256x8xf32>
    %79 = arith.addf %70, %78 : vector<256x8xf32>
    %80 = vector.extract_strided_slice %60 {offsets = [2, 0, 0], sizes = [16, 16, 8], strides = [1, 1, 1]} : vector<18x18x8xbf16> to vector<16x16x8xbf16>
    %81 = vector.extract_strided_slice %60 {offsets = [2, 1, 0], sizes = [16, 16, 8], strides = [1, 1, 1]} : vector<18x18x8xbf16> to vector<16x16x8xbf16>
    %82 = vector.extract_strided_slice %60 {offsets = [2, 2, 0], sizes = [16, 16, 8], strides = [1, 1, 1]} : vector<18x18x8xbf16> to vector<16x16x8xbf16>
    %83 = tpu.concatenate %80, %81, %82 in 2 : vector<16x16x8xbf16>, vector<16x16x8xbf16>, vector<16x16x8xbf16> -> vector<16x16x24xbf16>
    %84 = vector.shape_cast %83 : vector<16x16x24xbf16> to vector<256x24xbf16>
    %c2_37 = arith.constant 2 : index
    %c0_38 = arith.constant 0 : index
    %c0_39 = arith.constant 0 : index
    %85 = vector.load %arg7[%c2_37, %c0_38, %c0_39] : memref<3x24x8xbf16, #tpu.memory_space<vmem>>, vector<1x24x8xbf16>
    %86 = vector.shape_cast %85 : vector<1x24x8xbf16> to vector<24x8xbf16>
    %cst_40 = arith.constant dense<0.000000e+00> : vector<256x8xf32>
    %87 = tpu.matmul %84, %86, %cst_40 {dimension_numbers = #tpu.dot_dimension_numbers<[1], [0], [0], [1], [0, 0, 1, 1], [], []>} : vector<256x24xbf16>, vector<24x8xbf16>, vector<256x8xf32> -> vector<256x8xf32>
    %88 = arith.addf %79, %87 : vector<256x8xf32>
    %c0_41 = arith.constant 0 : index
    %c0_42 = arith.constant 0 : index
    %89 = vector.load %arg8[%c0_41, %c0_42] : memref<1x8xf32, #tpu.memory_space<vmem>>, vector<1x8xf32>
    %90 = vector.shape_cast %89 : vector<1x8xf32> to vector<8xf32>
    %91 = vector.shape_cast %90 : vector<8xf32> to vector<1x8xf32>
    %92 = vector.broadcast %91 : vector<1x8xf32> to vector<256x8xf32>
    %93 = arith.mulf %88, %92 : vector<256x8xf32>
    %c0_43 = arith.constant 0 : index
    %c0_44 = arith.constant 0 : index
    %94 = vector.load %arg9[%c0_43, %c0_44] : memref<1x8xf32, #tpu.memory_space<vmem>>, vector<1x8xf32>
    %95 = vector.shape_cast %94 : vector<1x8xf32> to vector<8xf32>
    %96 = vector.shape_cast %95 : vector<8xf32> to vector<1x8xf32>
    %97 = vector.broadcast %96 : vector<1x8xf32> to vector<256x8xf32>
    %98 = arith.addf %93, %97 : vector<256x8xf32>
    %cst_45 = arith.constant 0.000000e+00 : f32
    %99 = vector.broadcast %cst_45 : f32 to vector<256x8xf32>
    %100 = arith.maximumf %98, %99 : vector<256x8xf32>
    %101 = vector.shape_cast %100 : vector<256x8xf32> to vector<16x16x8xf32>
    %c0_46 = arith.constant 0 : index
    %c0_47 = arith.constant 0 : index
    %c0_48 = arith.constant 0 : index
    %c0_49 = arith.constant 0 : index
    %102 = vector.load %arg10[%c0_46, %c0_47, %c0_48, %c0_49] : memref<1x16x16x8xf32, #tpu.memory_space<vmem>>, vector<1x16x16x8xf32>
    %103 = vector.shape_cast %102 : vector<1x16x16x8xf32> to vector<16x16x8xf32>
    %104 = vector.shape_cast %101 : vector<16x16x8xf32> to vector<1x16x16x8xf32>
    tpu.vector_store %arg10[%c0_46, %c0_47, %c0_48, %c0_49], %104 {strides = array<i32>} : memref<1x16x16x8xf32, #tpu.memory_space<vmem>>, vector<1x16x16x8xf32>,
    return
  }
  func.func @transform_0(%arg0: i32, %arg1: i32) -> (i32, i32, i32, i32) {
    %c0_i32 = arith.constant 0 : i32
    %c0_i32_0 = arith.constant 0 : i32
    %c0_i32_1 = arith.constant 0 : i32
    return %arg0, %arg1, %c0_i32, %c0_i32_0 : i32, i32, i32, i32
  }
  func.func @transform_1(%arg0: i32, %arg1: i32) -> (i32, i32, i32, i32) {
    %c1_i32 = arith.constant 1 : i32
    %0 = arith.addi %arg1, %c1_i32 : i32
    %c4_i32 = arith.constant 4 : i32
    %1 = arith.muli %0, %c4_i32 : i32
    %c0_i32 = arith.constant 0 : i32
    %c0_i32_0 = arith.constant 0 : i32
    %c0_i32_1 = arith.constant 0 : i32
    return %arg0, %1, %c0_i32, %c0_i32_0 : i32, i32, i32, i32
  }
  func.func @transform_2(%arg0: i32, %arg1: i32) -> (i32, i32, i32) {
    %c0_i32 = arith.constant 0 : i32
    %c0_i32_0 = arith.constant 0 : i32
    %c0_i32_1 = arith.constant 0 : i32
    %c0_i32_2 = arith.constant 0 : i32
    return %c0_i32, %c0_i32_0, %c0_i32_1 : i32, i32, i32
  }
  func.func @transform_3(%arg0: i32, %arg1: i32) -> (i32, i32) {
    %c0_i32 = arith.constant 0 : i32
    %c0_i32_0 = arith.constant 0 : i32
    %c0_i32_1 = arith.constant 0 : i32
    return %c0_i32, %c0_i32_0 : i32, i32
  }
  func.func @transform_4(%arg0: i32, %arg1: i32) -> (i32, i32) {
    %c0_i32 = arith.constant 0 : i32
    %c0_i32_0 = arith.constant 0 : i32
    %c0_i32_1 = arith.constant 0 : i32
    return %c0_i32, %c0_i32_0 : i32, i32
  }
  func.func @transform_5(%arg0: i32, %arg1: i32) -> (i32, i32, i32) {
    %c0_i32 = arith.constant 0 : i32
    %c0_i32_0 = arith.constant 0 : i32
    %c0_i32_1 = arith.constant 0 : i32
    %c0_i32_2 = arith.constant 0 : i32
    return %c0_i32, %c0_i32_0, %c0_i32_1 : i32, i32, i32
  }
  func.func @transform_6(%arg0: i32, %arg1: i32) -> (i32, i32) {
    %c0_i32 = arith.constant 0 : i32
    %c0_i32_0 = arith.constant 0 : i32
    %c0_i32_1 = arith.constant 0 : i32
    return %c0_i32, %c0_i32_0 : i32, i32
  }
  func.func @transform_7(%arg0: i32, %arg1: i32) -> (i32, i32) {
    %c0_i32 = arith.constant 0 : i32
    %c0_i32_0 = arith.constant 0 : i32
    %c0_i32_1 = arith.constant 0 : i32
    return %c0_i32, %c0_i32_0 : i32, i32
  }
  func.func @transform_8(%arg0: i32, %arg1: i32) -> (i32, i32, i32, i32) {
    %c0_i32 = arith.constant 0 : i32
    %c0_i32_0 = arith.constant 0 : i32
    %c0_i32_1 = arith.constant 0 : i32
    return %arg0, %arg1, %c0_i32, %c0_i32_0 : i32, i32, i32, i32
  }
}

</mosaic_0001>

<llo_original>
// kernel: double_conv_pallas.1
$region0: #{double_conv_pallas.1}
  #allocation0 [shape = 'u32[]', space=smem, size = 0x4, offset = 0x4, fixed_abs, tag = 'smem constant byte address 0x4 - core index']
  #allocation1 [shape = 'u32[144,128]{1,0:T(1,128)}', space=vmem, size = 0x12000, scoped, tag = 'internal scratch']
  %s0 = inlined_call_operand.vmem [shape: bf16[2,20,18,4], index: 0, kind: input, shape index: {}, may-alias: {0,1}]
  %s1 = inlined_call_operand.vmem [shape: bf16[2,20,18,4], index: 1, kind: input, shape index: {}, may-alias: {0,1}]
  %s2 = inlined_call_operand.vmem [shape: bf16[3,12,8], index: 2, kind: input, shape index: {}]
  %s3 = inlined_call_operand.vmem [shape: f32[1,8], index: 3, kind: input, shape index: {}]
  %s4 = inlined_call_operand.vmem [shape: f32[1,8], index: 4, kind: input, shape index: {}]
  %s5 = inlined_call_operand.vmem [shape: bf16[3,24,8], index: 5, kind: input, shape index: {}]
  %s6 = inlined_call_operand.vmem [shape: f32[1,8], index: 6, kind: input, shape index: {}]
  %s7 = inlined_call_operand.vmem [shape: f32[1,8], index: 7, kind: input, shape index: {}]
  %s8 = inlined_call_operand.vmem [shape: f32[2,16,16,8], index: 8, kind: output, shape index: {}]
  %s9 = sld [smem:[#allocation0]]
  $region65: #{double_conv_pallas.1} parent=0
    _
  %s11 = ssub.s32 1, %s9
  %s12 = scalar_select 0, %s11, %s9
  loop: start=0, step=1, limit=4
  $region2: #{double_conv_pallas.1} parent=0 // loop_pre_header
    _
  $region3: #{double_conv_pallas.1} parent=0 // loop_header
    %s14 = sphi 0, %s18
    %p15 = scmp.ge.s32.totalorder %s14, 4
    %s21 = sphi 0, %s33
    %s22 = sphi 0, %s29
    %s23 = sphi 0, %s21
    %s24 = sphi 0, %s22
    %s25 = sphi 0, %s23
    %s26 = sphi 0, %s24
    %s38 = sphi 0, %s40
    %s41 = sphi 0, %s38
    %s42 = sphi 0, %s41
    %s58 = sphi 0, %s42
    %s70 = sphi 0, %s72
    %s73 = sphi 0, %s70
    %s74 = sphi 0, %s73
    %s90 = sphi 0, %s74
    %s94 = sphi 0, %s94
    %s96 = sphi 0, %s94
    %s97 = sphi 0, %s96
    %s111 = sphi 0, %s97
    %s115 = sphi 0, %s115
    %s117 = sphi 0, %s115
    %s118 = sphi 0, %s117
    %s132 = sphi 0, %s118
    %s136 = sphi 0, %s136
    %s138 = sphi 0, %s136
    %s139 = sphi 0, %s138
    %s153 = sphi 0, %s139
    %s157 = sphi 0, %s157
    %s159 = sphi 0, %s157
    %s160 = sphi 0, %s159
    %s174 = sphi 0, %s160
    %s178 = sphi 0, %s178
    %s180 = sphi 0, %s178
    %s181 = sphi 0, %s180
    %s195 = sphi 0, %s181
    %s199 = sphi 0, %s199
    %s201 = sphi 0, %s199
    %s202 = sphi 0, %s201
    %s216 = sphi 0, %s202
    %s224 = sphi 0, %s226
    %s227 = sphi 0, %s224
    %s228 = sphi 0, %s227
    %s244 = sphi 0, %s228
  $region4: #{double_conv_pallas.1} parent=0 // loop_header_branch
    %17 = sbr.rel (%p15) target = $region8
  $region5: #{double_conv_pallas.1} parent=0 // loop_body
    %s19 = ssub.s32 %s14, 1
    %s20 = ssub.s32 %s14, 2
    %s27 = sadd.s32 1, %s22
    %p28 = scmp.ge.s32.totalorder %s27, 1
    %s29 = scalar_select %p28, 0, %s27
    %s30 = sadd.s32 1, %s21
    %s31 = scalar_select %p28, %s30, %s21
    %p32 = scmp.ge.s32.totalorder %s31, 2
    %s33 = scalar_select %p32, 0, %s31
    %s34 = ssub.s32 %s21, %s33
    %s35 = ssub.s32 %s22, %s29
    %s36 = sor.u32 %s34, %s35
    %p37 = scmp.eq.s32.totalorder %s36, 0
    %s39 = sadd.s32 %s38, 1
    %s40 = scalar_select %p37, %s38, %s39
    %p43 = pneg %p37
    %p44 = scmp.eq.s32.totalorder %s14, 1
    %p45 = por %p43, %p44
    %p46 = scmp.ne.s32.totalorder %s38, %s41
    %p47 = scmp.eq.s32.totalorder %s14, 0
    %p48 = por %p46, %p47
    %p49 = scmp.ne.s32.totalorder %s38, %s41
    %p50 = scmp.eq.s32.totalorder %s19, 1
    %p51 = por %p49, %p50
    %p52 = scmp.ne.s32.totalorder %s41, %s42
    %p53 = scmp.eq.s32.totalorder %s19, 0
    %p54 = por %p52, %p53
    %p55 = scmp.ne.s32.totalorder %s41, %s42
    %p56 = scmp.eq.s32.totalorder %s20, 1
    %p57 = por %p55, %p56
    %p59 = scmp.ne.s32.totalorder %s42, %s58
    %p60 = scmp.eq.s32.totalorder %s20, 0
    %p61 = por %p59, %p60
    %s62 = sadd.s32 %s22, 1
    %s63 = smul.u32 %s62, 4
    %s64 = sadd.s32 %s29, 1
    %s65 = smul.u32 %s64, 4
    %s66 = ssub.s32 %s21, %s33
    %s67 = ssub.s32 %s63, %s65
    %s68 = sor.u32 %s66, %s67
    %p69 = scmp.eq.s32.totalorder %s68, 0
    %s71 = sadd.s32 %s70, 1
    %s72 = scalar_select %p69, %s70, %s71
    %p75 = pneg %p69
    %p76 = scmp.eq.s32.totalorder %s14, 1
    %p77 = por %p75, %p76
    %p78 = scmp.ne.s32.totalorder %s70, %s73
    %p79 = scmp.eq.s32.totalorder %s14, 0
    %p80 = por %p78, %p79
    %p81 = scmp.ne.s32.totalorder %s70, %s73
    %p82 = scmp.eq.s32.totalorder %s19, 1
    %p83 = por %p81, %p82
    %p84 = scmp.ne.s32.totalorder %s73, %s74
    %p85 = scmp.eq.s32.totalorder %s19, 0
    %p86 = por %p84, %p85
    %p87 = scmp.ne.s32.totalorder %s73, %s74
    %p88 = scmp.eq.s32.totalorder %s20, 1
    %p89 = por %p87, %p88
    %p91 = scmp.ne.s32.totalorder %s74, %s90
    %p92 = scmp.eq.s32.totalorder %s20, 0
    %p93 = por %p91, %p92
    %s95 = sadd.s32 %s94, 1
    %p98 = scmp.eq.s32.totalorder %s14, 1
    %p99 = scmp.ne.s32.totalorder %s94, %s96
    %p100 = scmp.eq.s32.totalorder %s14, 0
    %p101 = por %p99, %p100
    %p102 = scmp.ne.s32.totalorder %s94, %s96
    %p103 = scmp.eq.s32.totalorder %s19, 1
    %p104 = por %p102, %p103
    %p105 = scmp.ne.s32.totalorder %s96, %s97
    %p106 = scmp.eq.s32.totalorder %s19, 0
    %p107 = por %p105, %p106
    %p108 = scmp.ne.s32.totalorder %s96, %s97
    %p109 = scmp.eq.s32.totalorder %s20, 1
    %p110 = por %p108, %p109
    %p112 = scmp.ne.s32.totalorder %s97, %s111
    %p113 = scmp.eq.s32.totalorder %s20, 0
    %p114 = por %p112, %p113
    %s116 = sadd.s32 %s115, 1
    %p119 = scmp.eq.s32.totalorder %s14, 1
    %p120 = scmp.ne.s32.totalorder %s115, %s117
    %p121 = scmp.eq.s32.totalorder %s14, 0
    %p122 = por %p120, %p121
    %p123 = scmp.ne.s32.totalorder %s115, %s117
    %p124 = scmp.eq.s32.totalorder %s19, 1
    %p125 = por %p123, %p124
    %p126 = scmp.ne.s32.totalorder %s117, %s118
    %p127 = scmp.eq.s32.totalorder %s19, 0
    %p128 = por %p126, %p127
    %p129 = scmp.ne.s32.totalorder %s117, %s118
    %p130 = scmp.eq.s32.totalorder %s20, 1
    %p131 = por %p129, %p130
    %p133 = scmp.ne.s32.totalorder %s118, %s132
    %p134 = scmp.eq.s32.totalorder %s20, 0
    %p135 = por %p133, %p134
    %s137 = sadd.s32 %s136, 1
    %p140 = scmp.eq.s32.totalorder %s14, 1
    %p141 = scmp.ne.s32.totalorder %s136, %s138
    %p142 = scmp.eq.s32.totalorder %s14, 0
    %p143 = por %p141, %p142
    %p144 = scmp.ne.s32.totalorder %s136, %s138
    %p145 = scmp.eq.s32.totalorder %s19, 1
    %p146 = por %p144, %p145
    %p147 = scmp.ne.s32.totalorder %s138, %s139
    %p148 = scmp.eq.s32.totalorder %s19, 0
    %p149 = por %p147, %p148
    %p150 = scmp.ne.s32.totalorder %s138, %s139
    %p151 = scmp.eq.s32.totalorder %s20, 1
    %p152 = por %p150, %p151
    %p154 = scmp.ne.s32.totalorder %s139, %s153
    %p155 = scmp.eq.s32.totalorder %s20, 0
    %p156 = por %p154, %p155
    %s158 = sadd.s32 %s157, 1
    %p161 = scmp.eq.s32.totalorder %s14, 1
    %p162 = scmp.ne.s32.totalorder %s157, %s159
    %p163 = scmp.eq.s32.totalorder %s14, 0
    %p164 = por %p162, %p163
    %p165 = scmp.ne.s32.totalorder %s157, %s159
    %p166 = scmp.eq.s32.totalorder %s19, 1
    %p167 = por %p165, %p166
    %p168 = scmp.ne.s32.totalorder %s159, %s160
    %p169 = scmp.eq.s32.totalorder %s19, 0
    %p170 = por %p168, %p169
    %p171 = scmp.ne.s32.totalorder %s159, %s160
    %p172 = scmp.eq.s32.totalorder %s20, 1
    %p173 = por %p171, %p172
    %p175 = scmp.ne.s32.totalorder %s160, %s174
    %p176 = scmp.eq.s32.totalorder %s20, 0
    %p177 = por %p175, %p176
    %s179 = sadd.s32 %s178, 1
    %p182 = scmp.eq.s32.totalorder %s14, 1
    %p183 = scmp.ne.s32.totalorder %s178, %s180
    %p184 = scmp.eq.s32.totalorder %s14, 0
    %p185 = por %p183, %p184
    %p186 = scmp.ne.s32.totalorder %s178, %s180
    %p187 = scmp.eq.s32.totalorder %s19, 1
    %p188 = por %p186, %p187
    %p189 = scmp.ne.s32.totalorder %s180, %s181
    %p190 = scmp.eq.s32.totalorder %s19, 0
    %p191 = por %p189, %p190
    %p192 = scmp.ne.s32.totalorder %s180, %s181
    %p193 = scmp.eq.s32.totalorder %s20, 1
    %p194 = por %p192, %p193
    %p196 = scmp.ne.s32.totalorder %s181, %s195
    %p197 = scmp.eq.s32.totalorder %s20, 0
    %p198 = por %p196, %p197
    %s200 = sadd.s32 %s199, 1
    %p203 = scmp.eq.s32.totalorder %s14, 1
    %p204 = scmp.ne.s32.totalorder %s199, %s201
    %p205 = scmp.eq.s32.totalorder %s14, 0
    %p206 = por %p204, %p205
    %p207 = scmp.ne.s32.totalorder %s199, %s201
    %p208 = scmp.eq.s32.totalorder %s19, 1
    %p209 = por %p207, %p208
    %p210 = scmp.ne.s32.totalorder %s201, %s202
    %p211 = scmp.eq.s32.totalorder %s19, 0
    %p212 = por %p210, %p211
    %p213 = scmp.ne.s32.totalorder %s201, %s202
    %p214 = scmp.eq.s32.totalorder %s20, 1
    %p215 = por %p213, %p214
    %p217 = scmp.ne.s32.totalorder %s202, %s216
    %p218 = scmp.eq.s32.totalorder %s20, 0
    %p219 = por %p217, %p218
    %s220 = ssub.s32 %s21, %s33
    %s221 = ssub.s32 %s22, %s29
    %s222 = sor.u32 %s220, %s221
    %p223 = scmp.eq.s32.totalorder %s222, 0
    %s225 = sadd.s32 %s224, 1
    %s226 = scalar_select %p223, %s224, %s225
    %p229 = pneg %p223
    %p230 = scmp.eq.s32.totalorder %s14, 1
    %p231 = por %p229, %p230
    %p232 = scmp.ne.s32.totalorder %s224, %s227
    %p233 = scmp.eq.s32.totalorder %s14, 0
    %p234 = por %p232, %p233
    %p235 = scmp.ne.s32.totalorder %s224, %s227
    %p236 = scmp.eq.s32.totalorder %s19, 1
    %p237 = por %p235, %p236
    %p238 = scmp.ne.s32.totalorder %s227, %s228
    %p239 = scmp.eq.s32.totalorder %s19, 0
    %p240 = por %p238, %p239
    %p241 = scmp.ne.s32.totalorder %s227, %s228
    %p242 = scmp.eq.s32.totalorder %s20, 1
    %p243 = por %p241, %p242
    %p245 = scmp.ne.s32.totalorder %s228, %s244
    %p246 = scmp.eq.s32.totalorder %s20, 0
    %p247 = por %p245, %p246
    %p248 = scmp.le.s32.totalorder 1, %s14
    %p249 = scmp.lt.s32.totalorder %s14, 3
    %p250 = pnand %p248, %p249
    %p251 = pneg %p250
    // Predicated region
    $region9: #{double_conv_pallas.1} parent=5 // pred_check
      _
    $region10: #{double_conv_pallas.1} parent=5 // pred_check_branch
      %253 = sbr.rel (%p250) target = $region12
    $region11: #{double_conv_pallas.1} parent=5 // pred_region
      %s254 = ssub.s32 %s14, 1
      // Predicated region
      $region13: #{double_conv_pallas.1} parent=11 // pred_check
        %p255 = pneg %p107
      $region14: #{double_conv_pallas.1} parent=11 // pred_check_branch
        %257 = sbr.rel (%p255) target = $region16
      $region15: #{double_conv_pallas.1} parent=11 // pred_region
        _
      $region16: #{double_conv_pallas.1} parent=11 // pred_fallthru
        _
      // Predicated region
      $region17: #{double_conv_pallas.1} parent=11 // pred_check
        %p258 = pneg %p128
      $region18: #{double_conv_pallas.1} parent=11 // pred_check_branch
        %260 = sbr.rel (%p258) target = $region20
      $region19: #{double_conv_pallas.1} parent=11 // pred_region
        _
      $region20: #{double_conv_pallas.1} parent=11 // pred_fallthru
        _
      // Predicated region
      $region21: #{double_conv_pallas.1} parent=11 // pred_check
        %p261 = pneg %p149
      $region22: #{double_conv_pallas.1} parent=11 // pred_check_branch
        %263 = sbr.rel (%p261) target = $region24
      $region23: #{double_conv_pallas.1} parent=11 // pred_region
        _
      $region24: #{double_conv_pallas.1} parent=11 // pred_fallthru
        _
      // Predicated region
      $region25: #{double_conv_pallas.1} parent=11 // pred_check
        %p264 = pneg %p170
      $region26: #{double_conv_pallas.1} parent=11 // pred_check_branch
        %266 = sbr.rel (%p264) target = $region28
      $region27: #{double_conv_pallas.1} parent=11 // pred_region
        _
      $region28: #{double_conv_pallas.1} parent=11 // pred_fallthru
        _
      // Predicated region
      $region29: #{double_conv_pallas.1} parent=11 // pred_check
        %p267 = pneg %p191
      $region30: #{double_conv_pallas.1} parent=11 // pred_check_branch
        %269 = sbr.rel (%p267) target = $region32
      $region31: #{double_conv_pallas.1} parent=11 // pred_region
        _
      $region32: #{double_conv_pallas.1} parent=11 // pred_fallthru
        _
      // Predicated region
      $region33: #{double_conv_pallas.1} parent=11 // pred_check
        %p270 = pneg %p212
      $region34: #{double_conv_pallas.1} parent=11 // pred_check_branch
        %272 = sbr.rel (%p270) target = $region36
      $region35: #{double_conv_pallas.1} parent=11 // pred_region
        _
      $region36: #{double_conv_pallas.1} parent=11 // pred_fallthru
        _
    $region12: #{double_conv_pallas.1} parent=5 // pred_fallthru
      _
    %p273 = scmp.lt.s32.totalorder %s14, 2
    // Predicated region
    $region37: #{double_conv_pallas.1} parent=5 // pred_check
      %p274 = pneg %p273
    $region38: #{double_conv_pallas.1} parent=5 // pred_check_branch
      %276 = sbr.rel (%p274) target = $region40
    $region39: #{double_conv_pallas.1} parent=5 // pred_region
      // Predicated region
      $region41: #{double_conv_pallas.1} parent=39 // pred_check
        %p277 = pneg %p48
      $region42: #{double_conv_pallas.1} parent=39 // pred_check_branch
        %279 = sbr.rel (%p277) target = $region44
      $region43: #{double_conv_pallas.1} parent=39 // pred_region
        %s280 = smul.u32 16, %s22
        %s281 = ssub.s32 20, %s280
        %p282 = scmp.lt.s32.totalorder %s281, 16
        %s283 = scalar_select %p282, %s281, 16
        %s284 = smul.u32 64, %s283
        %s285 = smul.u32 %s284, 3
        %p286 = scmp.lt.s32.totalorder %s21, 1
        %s287 = scalar_select %p286, %s21, 1
        %p288 = scmp.lt.s32.totalorder %s280, 19
        %s289 = scalar_select %p288, %s280, 19
        %s290 = smul.addr %s289, 3
        %s291 = smul.addr %s287, 60
        %s292 = sadd.s32 %s290, %s291
        %s293 = smul.addr %s292, 4
        %s294 = scalar_lea.vmem %s0, %s293
        %s295 = smul.u32 16, %s22
        %s296 = ssub.s32 20, %s295
        %p297 = scmp.lt.s32.totalorder %s296, 16
        %s298 = scalar_select %p297, %s296, 16
        %s299 = smul.u32 64, %s298
        %s300 = smul.u32 %s299, 3
      $region44: #{double_conv_pallas.1} parent=39 // pred_fallthru
        _
      // Predicated region
      $region45: #{double_conv_pallas.1} parent=39 // pred_check
        %p301 = pneg %p80
      $region46: #{double_conv_pallas.1} parent=39 // pred_check_branch
        %303 = sbr.rel (%p301) target = $region48
      $region47: #{double_conv_pallas.1} parent=39 // pred_region
        %s304 = sadd.s32 %s22, 1
        %s305 = smul.u32 %s304, 4
        %s306 = smul.u32 4, %s305
        %p307 = scmp.lt.s32.totalorder %s21, 1
        %s308 = scalar_select %p307, %s21, 1
        %p309 = scmp.lt.s32.totalorder %s306, 19
        %s310 = scalar_select %p309, %s306, 19
        %s311 = smul.addr %s310, 3
        %s312 = smul.addr %s308, 60
        %s313 = sadd.s32 %s311, %s312
        %s314 = smul.addr %s313, 4
        %s315 = scalar_lea.vmem %s1, %s314
        %s316 = sadd.s32 %s22, 1
        %s317 = smul.u32 %s316, 4
        %s318 = smul.u32 4, %s317
      $region48: #{double_conv_pallas.1} parent=39 // pred_fallthru
        _
    $region40: #{double_conv_pallas.1} parent=5 // pred_fallthru
      _
    %p319 = scmp.le.s32.totalorder 1, %s14
    %p320 = scmp.lt.s32.totalorder %s14, 3
    %p321 = pnand %p319, %p320
    %p322 = pneg %p321
    // Predicated region
    $region49: #{double_conv_pallas.1} parent=5 // pred_check
      _
    $region50: #{double_conv_pallas.1} parent=5 // pred_check_branch
      %324 = sbr.rel (%p321) target = $region52
    $region51: #{double_conv_pallas.1} parent=5 // pred_region
      %s325 = ssub.s32 %s14, 1
      %s326 = smul.u32 16, %s24
      %s327 = ssub.s32 20, %s326
      %p328 = scmp.lt.s32.totalorder %s327, 16
      %s329 = scalar_select %p328, %s327, 16
      %s330 = smul.u32 64, %s329
      %s331 = smul.u32 %s330, 3
      %p332 = scmp.lt.s32.totalorder %s23, 1
      %s333 = scalar_select %p332, %s23, 1
      %p334 = scmp.lt.s32.totalorder %s326, 19
      %s335 = scalar_select %p334, %s326, 19
      %s336 = smul.addr %s335, 3
      %s337 = smul.addr %s333, 60
      %s338 = sadd.s32 %s336, %s337
      %s339 = smul.addr %s338, 4
      %s340 = scalar_lea.vmem %s0, %s339
      %p341 = pneg %p54
      %p342 = pneg %p51
      %s343 = sadd.s32 %s24, 1
      %s344 = smul.u32 %s343, 4
      %s345 = smul.u32 4, %s344
      %p346 = scmp.lt.s32.totalorder %s23, 1
      %s347 = scalar_select %p346, %s23, 1
      %p348 = scmp.lt.s32.totalorder %s345, 19
      %s349 = scalar_select %p348, %s345, 19
      %s350 = smul.addr %s349, 3
      %s351 = smul.addr %s347, 60
      %s352 = sadd.s32 %s350, %s351
      %s353 = smul.addr %s352, 4
      %s354 = scalar_lea.vmem %s1, %s353
      %p355 = pneg %p86
      %p356 = pneg %p83
      %p357 = pneg %p107
      %p358 = pneg %p104
      %p359 = pneg %p128
      %p360 = pneg %p125
      %p361 = pneg %p149
      %p362 = pneg %p146
      %p363 = pneg %p170
      %p364 = pneg %p167
      %p365 = pneg %p191
      %p366 = pneg %p188
      %p367 = pneg %p212
      %p368 = pneg %p209
      %p369 = pneg %p240
      %p370 = pneg %p237
      %s371 = smul.u32 16, %s24
      %p372 = scmp.lt.s32.totalorder %s23, 1
      %s373 = scalar_select %p372, %s23, 1
      %p374 = scmp.lt.s32.totalorder %s371, 15
      %s375 = scalar_select %p374, %s371, 15
      %s376 = smul.addr %s375, 2
      %s377 = smul.addr %s373, 32
      %s378 = sadd.s32 %s376, %s377
      %s379 = smul.addr %s378, 8
      %s380 = scalar_lea.vmem %s8, %s379
      %s381 = smul.u32 16, %s24
      %s382 = ssub.s32 20, %s381
      %p383 = scmp.lt.s32.totalorder %s382, 16
      %s384 = scalar_select %p383, %s382, 16
      %s385 = smul.u32 64, %s384
      %s386 = smul.u32 %s385, 3
      %p387 = scmp.lt.s32.totalorder %s23, 1
      %s388 = scalar_select %p387, %s23, 1
      %p389 = scmp.lt.s32.totalorder %s381, 19
      %s390 = scalar_select %p389, %s381, 19
      %s391 = smul.addr %s390, 3
      %s392 = smul.addr %s388, 60
      %s393 = sadd.s32 %s391, %s392
      %s394 = smul.addr %s393, 4
      %s395 = scalar_lea.vmem %s0, %s394
      %s396 = smul.u32 16, %s24
      %s397 = ssub.s32 20, %s396
      %p398 = scmp.lt.s32.totalorder %s397, 16
      %s399 = scalar_select %p398, %s397, 16
      %s400 = smul.u32 64, %s399
      %s401 = smul.u32 %s400, 3
      %s402 = sadd.s32 %s24, 1
      %s403 = smul.u32 %s402, 4
      %s404 = smul.u32 4, %s403
      %p405 = scmp.lt.s32.totalorder %s23, 1
      %s406 = scalar_select %p405, %s23, 1
      %p407 = scmp.lt.s32.totalorder %s404, 19
      %s408 = scalar_select %p407, %s404, 19
      %s409 = smul.addr %s408, 3
      %s410 = smul.addr %s406, 60
      %s411 = sadd.s32 %s409, %s410
      %s412 = smul.addr %s411, 4
      %s413 = scalar_lea.vmem %s1, %s412
      %s414 = sadd.s32 %s24, 1
      %s415 = smul.u32 %s414, 4
      %s416 = smul.u32 4, %s415
      %s417 = smul.u32 16, %s24
      %p418 = scmp.lt.s32.totalorder %s23, 1
      %s419 = scalar_select %p418, %s23, 1
      %p420 = scmp.lt.s32.totalorder %s417, 15
      %s421 = scalar_select %p420, %s417, 15
      %s422 = smul.addr %s421, 2
      %s423 = smul.addr %s419, 32
      %s424 = sadd.s32 %s422, %s423
      %s425 = smul.addr %s424, 8
      %s426 = scalar_lea.vmem %s8, %s425
      %s427 = smul.u32 16, %s24
      %v429 = vld [vmem:[%s395] sm:$0xf]
      %v430 = vld [vmem:[%s395 + $0x4] sm:$0xf]
      %v431 = vld [vmem:[%s395 + $0x8] sm:$0x1]
      %v432 = vld [vmem:[%s395 + $0xc] sm:$0xf]
      %v433 = vld [vmem:[%s395 + $0x10] sm:$0xf]
      %v434 = vld [vmem:[%s395 + $0x14] sm:$0x1]
      %v435 = vld [vmem:[%s395 + $0x18] sm:$0xf]
      %v436 = vld [vmem:[%s395 + $0x1c] sm:$0xf]
      %v437 = vld [vmem:[%s395 + $0x20] sm:$0x1]
      %v438 = vld [vmem:[%s395 + $0x24] sm:$0xf]
      %v439 = vld [vmem:[%s395 + $0x28] sm:$0xf]
      %v440 = vld [vmem:[%s395 + $0x2c] sm:$0x1]
      %v441 = vld [vmem:[%s395 + $0x30] sm:$0xf]
      %v442 = vld [vmem:[%s395 + $0x34] sm:$0xf]
      %v443 = vld [vmem:[%s395 + $0x38] sm:$0x1]
      %v444 = vld [vmem:[%s395 + $0x3c] sm:$0xf]
      %v445 = vld [vmem:[%s395 + $0x40] sm:$0xf]
      %v446 = vld [vmem:[%s395 + $0x44] sm:$0x1]
      %v447 = vld [vmem:[%s395 + $0x48] sm:$0xf]
      %v448 = vld [vmem:[%s395 + $0x4c] sm:$0xf]
      %v449 = vld [vmem:[%s395 + $0x50] sm:$0x1]
      %v450 = vld [vmem:[%s395 + $0x54] sm:$0xf]
      %v451 = vld [vmem:[%s395 + $0x58] sm:$0xf]
      %v452 = vld [vmem:[%s395 + $0x5c] sm:$0x1]
      %v453 = vld [vmem:[%s395 + $0x60] sm:$0xf]
      %v454 = vld [vmem:[%s395 + $0x64] sm:$0xf]
      %v455 = vld [vmem:[%s395 + $0x68] sm:$0x1]
      %v456 = vld [vmem:[%s395 + $0x6c] sm:$0xf]
      %v457 = vld [vmem:[%s395 + $0x70] sm:$0xf]
      %v458 = vld [vmem:[%s395 + $0x74] sm:$0x1]
      %v459 = vld [vmem:[%s395 + $0x78] sm:$0xf]
      %v460 = vld [vmem:[%s395 + $0x7c] sm:$0xf]
      %v461 = vld [vmem:[%s395 + $0x80] sm:$0x1]
      %v462 = vld [vmem:[%s395 + $0x84] sm:$0xf]
      %v463 = vld [vmem:[%s395 + $0x88] sm:$0xf]
      %v464 = vld [vmem:[%s395 + $0x8c] sm:$0x1]
      %v465 = vld [vmem:[%s395 + $0x90] sm:$0xf]
      %v466 = vld [vmem:[%s395 + $0x94] sm:$0xf]
      %v467 = vld [vmem:[%s395 + $0x98] sm:$0x1]
      %v468 = vld [vmem:[%s395 + $0x9c] sm:$0xf]
      %v469 = vld [vmem:[%s395 + $0xa0] sm:$0xf]
      %v470 = vld [vmem:[%s395 + $0xa4] sm:$0x1]
      %v471 = vld [vmem:[%s395 + $0xa8] sm:$0xf]
      %v472 = vld [vmem:[%s395 + $0xac] sm:$0xf]
      %v473 = vld [vmem:[%s395 + $0xb0] sm:$0x1]
      %v474 = vld [vmem:[%s395 + $0xb4] sm:$0xf]
      %v475 = vld [vmem:[%s395 + $0xb8] sm:$0xf]
      %v476 = vld [vmem:[%s395 + $0xbc] sm:$0x1]
      %v477 = vld [vmem:[%s413] sm:$0xf]
      %v478 = vld [vmem:[%s413 + $0x4] sm:$0xf]
      %v479 = vld [vmem:[%s413 + $0x8] sm:$0x1]
      %v480 = vld [vmem:[%s413 + $0xc] sm:$0xf]
      %v481 = vld [vmem:[%s413 + $0x10] sm:$0xf]
      %v482 = vld [vmem:[%s413 + $0x14] sm:$0x1]
      %v483 = vld [vmem:[%s413 + $0x18] sm:$0xf]
      %v484 = vld [vmem:[%s413 + $0x1c] sm:$0xf]
      %v485 = vld [vmem:[%s413 + $0x20] sm:$0x1]
      %v486 = vld [vmem:[%s413 + $0x24] sm:$0xf]
      %v487 = vld [vmem:[%s413 + $0x28] sm:$0xf]
      %v488 = vld [vmem:[%s413 + $0x2c] sm:$0x1]
      %v525 = vunpack.c.l.b16 %v429
      %v526 = vunpack.c.l.b16 %v430
      %v527 = vunpack.c.l.b16 %v432
      %v528 = vunpack.c.l.b16 %v433
      %v529 = vunpack.c.l.b16 %v435
      %v530 = vunpack.c.l.b16 %v436
      %v531 = vunpack.c.l.b16 %v438
      %v532 = vunpack.c.l.b16 %v439
      %v533 = vunpack.c.l.b16 %v441
      %v534 = vunpack.c.l.b16 %v442
      %v535 = vunpack.c.l.b16 %v444
      %v536 = vunpack.c.l.b16 %v445
      %v537 = vunpack.c.l.b16 %v447
      %v538 = vunpack.c.l.b16 %v448
      %v539 = vunpack.c.l.b16 %v450
      %v540 = vunpack.c.l.b16 %v451
      %v541 = vunpack.c.l.b16 %v453
      %v542 = vunpack.c.l.b16 %v454
      %v543 = vunpack.c.l.b16 %v456
      %v544 = vunpack.c.l.b16 %v457
      %v545 = vunpack.c.l.b16 %v459
      %v546 = vunpack.c.l.b16 %v460
      %v547 = vunpack.c.l.b16 %v462
      %v548 = vunpack.c.l.b16 %v463
      %v549 = vunpack.c.l.b16 %v465
      %v550 = vunpack.c.l.b16 %v466
      %v551 = vunpack.c.l.b16 %v468
      %v552 = vunpack.c.l.b16 %v469
      %v553 = vunpack.c.l.b16 %v471
      %v554 = vunpack.c.l.b16 %v472
      %v555 = vunpack.c.l.b16 %v474
      %v556 = vunpack.c.l.b16 %v475
      %v557 = vunpack.c.l.b16 %v477
      %v558 = vunpack.c.l.b16 %v478
      %v559 = vunpack.c.l.b16 %v480
      %v560 = vunpack.c.l.b16 %v481
      %v561 = vpack.c.b16 %v526, %v525
      %v562 = vpack.c.b16 %v528, %v527
      %v563 = vpack.c.b16 %v530, %v529
      %v564 = vpack.c.b16 %v532, %v531
      %v565 = vpack.c.b16 %v534, %v533
      %v566 = vpack.c.b16 %v536, %v535
      %v567 = vpack.c.b16 %v538, %v537
      %v568 = vpack.c.b16 %v540, %v539
      %v569 = vpack.c.b16 %v542, %v541
      %v570 = vpack.c.b16 %v544, %v543
      %v571 = vpack.c.b16 %v546, %v545
      %v572 = vpack.c.b16 %v548, %v547
      %v573 = vpack.c.b16 %v550, %v549
      %v574 = vpack.c.b16 %v552, %v551
      %v575 = vpack.c.b16 %v554, %v553
      %v576 = vpack.c.b16 %v556, %v555
      %v577 = vpack.c.b16 %v558, %v557
      %v578 = vpack.c.b16 %v560, %v559
      %v597 = vunpack.c.l.b16 %v431
      %v598 = vunpack.c.l.b16 %v434
      %v599 = vunpack.c.l.b16 %v437
      %v600 = vunpack.c.l.b16 %v440
      %v601 = vunpack.c.l.b16 %v443
      %v602 = vunpack.c.l.b16 %v446
      %v603 = vunpack.c.l.b16 %v449
      %v604 = vunpack.c.l.b16 %v452
      %v605 = vunpack.c.l.b16 %v455
      %v606 = vunpack.c.l.b16 %v458
      %v607 = vunpack.c.l.b16 %v461
      %v608 = vunpack.c.l.b16 %v464
      %v609 = vunpack.c.l.b16 %v467
      %v610 = vunpack.c.l.b16 %v470
      %v611 = vunpack.c.l.b16 %v473
      %v612 = vunpack.c.l.b16 %v476
      %v613 = vunpack.c.l.b16 %v479
      %v614 = vunpack.c.l.b16 %v482
      %v615 = vpack.c.b16 %v597, %v597
      %v616 = vpack.c.b16 %v598, %v598
      %v617 = vpack.c.b16 %v599, %v599
      %v618 = vpack.c.b16 %v600, %v600
      %v619 = vpack.c.b16 %v601, %v601
      %v620 = vpack.c.b16 %v602, %v602
      %v621 = vpack.c.b16 %v603, %v603
      %v622 = vpack.c.b16 %v604, %v604
      %v623 = vpack.c.b16 %v605, %v605
      %v624 = vpack.c.b16 %v606, %v606
      %v625 = vpack.c.b16 %v607, %v607
      %v626 = vpack.c.b16 %v608, %v608
      %v627 = vpack.c.b16 %v609, %v609
      %v628 = vpack.c.b16 %v610, %v610
      %v629 = vpack.c.b16 %v611, %v611
      %v630 = vpack.c.b16 %v612, %v612
      %v631 = vpack.c.b16 %v613, %v613
      %v632 = vpack.c.b16 %v614, %v614
      %vm633 = vsmask.f32 7424
      %v635 = vshrl.u32 %v561, 16
      %v637 = vshll.u32 %v561, 16
      %v639 = vrot.slane %v637, 1
      %v640 = vor.u32 %v635, %v639
      %v642 = vshll.u32 %v615, 16
      %v644 = vrot.slane %v642, 1
      %v645 = vsel %vm633, %v640, %v644
      %v647 = vshrl.u32 %v562, 16
      %v649 = vshll.u32 %v562, 16
      %v651 = vrot.slane %v649, 1
      %v652 = vor.u32 %v647, %v651
      %v654 = vshll.u32 %v616, 16
      %v656 = vrot.slane %v654, 1
      %v657 = vsel %vm633, %v652, %v656
      %v659 = vshrl.u32 %v563, 16
      %v661 = vshll.u32 %v563, 16
      %v663 = vrot.slane %v661, 1
      %v664 = vor.u32 %v659, %v663
      %v666 = vshll.u32 %v617, 16
      %v668 = vrot.slane %v666, 1
      %v669 = vsel %vm633, %v664, %v668
      %v671 = vshrl.u32 %v564, 16
      %v673 = vshll.u32 %v564, 16
      %v675 = vrot.slane %v673, 1
      %v676 = vor.u32 %v671, %v675
      %v678 = vshll.u32 %v618, 16
      %v680 = vrot.slane %v678, 1
      %v681 = vsel %vm633, %v676, %v680
      %v683 = vshrl.u32 %v565, 16
      %v685 = vshll.u32 %v565, 16
      %v687 = vrot.slane %v685, 1
      %v688 = vor.u32 %v683, %v687
      %v690 = vshll.u32 %v619, 16
      %v692 = vrot.slane %v690, 1
      %v693 = vsel %vm633, %v688, %v692
      %v695 = vshrl.u32 %v566, 16
      %v697 = vshll.u32 %v566, 16
      %v699 = vrot.slane %v697, 1
      %v700 = vor.u32 %v695, %v699
      %v702 = vshll.u32 %v620, 16
      %v704 = vrot.slane %v702, 1
      %v705 = vsel %vm633, %v700, %v704
      %v707 = vshrl.u32 %v567, 16
      %v709 = vshll.u32 %v567, 16
      %v711 = vrot.slane %v709, 1
      %v712 = vor.u32 %v707, %v711
      %v714 = vshll.u32 %v621, 16
      %v716 = vrot.slane %v714, 1
      %v717 = vsel %vm633, %v712, %v716
      %v719 = vshrl.u32 %v568, 16
      %v721 = vshll.u32 %v568, 16
      %v723 = vrot.slane %v721, 1
      %v724 = vor.u32 %v719, %v723
      %v726 = vshll.u32 %v622, 16
      %v728 = vrot.slane %v726, 1
      %v729 = vsel %vm633, %v724, %v728
      %v731 = vshrl.u32 %v569, 16
      %v733 = vshll.u32 %v569, 16
      %v735 = vrot.slane %v733, 1
      %v736 = vor.u32 %v731, %v735
      %v738 = vshll.u32 %v623, 16
      %v740 = vrot.slane %v738, 1
      %v741 = vsel %vm633, %v736, %v740
      %v743 = vshrl.u32 %v570, 16
      %v745 = vshll.u32 %v570, 16
      %v747 = vrot.slane %v745, 1
      %v748 = vor.u32 %v743, %v747
      %v750 = vshll.u32 %v624, 16
      %v752 = vrot.slane %v750, 1
      %v753 = vsel %vm633, %v748, %v752
      %v755 = vshrl.u32 %v571, 16
      %v757 = vshll.u32 %v571, 16
      %v759 = vrot.slane %v757, 1
      %v760 = vor.u32 %v755, %v759
      %v762 = vshll.u32 %v625, 16
      %v764 = vrot.slane %v762, 1
      %v765 = vsel %vm633, %v760, %v764
      %v767 = vshrl.u32 %v572, 16
      %v769 = vshll.u32 %v572, 16
      %v771 = vrot.slane %v769, 1
      %v772 = vor.u32 %v767, %v771
      %v774 = vshll.u32 %v626, 16
      %v776 = vrot.slane %v774, 1
      %v777 = vsel %vm633, %v772, %v776
      %v779 = vshrl.u32 %v573, 16
      %v781 = vshll.u32 %v573, 16
      %v783 = vrot.slane %v781, 1
      %v784 = vor.u32 %v779, %v783
      %v786 = vshll.u32 %v627, 16
      %v788 = vrot.slane %v786, 1
      %v789 = vsel %vm633, %v784, %v788
      %v791 = vshrl.u32 %v574, 16
      %v793 = vshll.u32 %v574, 16
      %v795 = vrot.slane %v793, 1
      %v796 = vor.u32 %v791, %v795
      %v798 = vshll.u32 %v628, 16
      %v800 = vrot.slane %v798, 1
      %v801 = vsel %vm633, %v796, %v800
      %v803 = vshrl.u32 %v575, 16
      %v805 = vshll.u32 %v575, 16
      %v807 = vrot.slane %v805, 1
      %v808 = vor.u32 %v803, %v807
      %v810 = vshll.u32 %v629, 16
      %v812 = vrot.slane %v810, 1
      %v813 = vsel %vm633, %v808, %v812
      %v815 = vshrl.u32 %v576, 16
      %v817 = vshll.u32 %v576, 16
      %v819 = vrot.slane %v817, 1
      %v820 = vor.u32 %v815, %v819
      %v822 = vshll.u32 %v630, 16
      %v824 = vrot.slane %v822, 1
      %v825 = vsel %vm633, %v820, %v824
      %v827 = vshrl.u32 %v577, 16
      %v829 = vshll.u32 %v577, 16
      %v831 = vrot.slane %v829, 1
      %v832 = vor.u32 %v827, %v831
      %v834 = vshll.u32 %v631, 16
      %v836 = vrot.slane %v834, 1
      %v837 = vsel %vm633, %v832, %v836
      %v839 = vshrl.u32 %v578, 16
      %v841 = vshll.u32 %v578, 16
      %v843 = vrot.slane %v841, 1
      %v844 = vor.u32 %v839, %v843
      %v846 = vshll.u32 %v632, 16
      %v848 = vrot.slane %v846, 1
      %v849 = vsel %vm633, %v844, %v848
      %850 = vrot.lane.b32.xlu0 %v645, 4
      %v851 = vpop.permute.xlu0 %850
      %852 = vrot.lane.b32.xlu0 %v657, 4
      %v853 = vpop.permute.xlu0 %852
      %854 = vrot.lane.b32.xlu0 %v669, 4
      %v855 = vpop.permute.xlu0 %854
      %856 = vrot.lane.b32.xlu0 %v681, 4
      %v857 = vpop.permute.xlu0 %856
      %858 = vrot.lane.b32.xlu0 %v693, 4
      %v859 = vpop.permute.xlu0 %858
      %860 = vrot.lane.b32.xlu0 %v705, 4
      %v861 = vpop.permute.xlu0 %860
      %862 = vrot.lane.b32.xlu0 %v717, 4
      %v863 = vpop.permute.xlu0 %862
      %864 = vrot.lane.b32.xlu0 %v729, 4
      %v865 = vpop.permute.xlu0 %864
      %866 = vrot.lane.b32.xlu0 %v741, 4
      %v867 = vpop.permute.xlu0 %866
      %868 = vrot.lane.b32.xlu0 %v753, 4
      %v869 = vpop.permute.xlu0 %868
      %870 = vrot.lane.b32.xlu0 %v765, 4
      %v871 = vpop.permute.xlu0 %870
      %872 = vrot.lane.b32.xlu0 %v777, 4
      %v873 = vpop.permute.xlu0 %872
      %874 = vrot.lane.b32.xlu0 %v789, 4
      %v875 = vpop.permute.xlu0 %874
      %876 = vrot.lane.b32.xlu0 %v801, 4
      %v877 = vpop.permute.xlu0 %876
      %878 = vrot.lane.b32.xlu0 %v813, 4
      %v879 = vpop.permute.xlu0 %878
      %880 = vrot.lane.b32.xlu0 %v825, 4
      %v881 = vpop.permute.xlu0 %880
      %882 = vrot.lane.b32.xlu0 %v837, 4
      %v883 = vpop.permute.xlu0 %882
      %884 = vrot.lane.b32.xlu0 %v849, 4
      %v885 = vpop.permute.xlu0 %884
      %vm886 = vcmask 1046528
      %v887 = vrot.slane %v561, 1
      %v888 = vrot.slane %v615, 1
      %v889 = vsel %vm886, %v887, %v888
      %v890 = vrot.slane %v562, 1
      %v891 = vrot.slane %v616, 1
      %v892 = vsel %vm886, %v890, %v891
      %v893 = vrot.slane %v563, 1
      %v894 = vrot.slane %v617, 1
      %v895 = vsel %vm886, %v893, %v894
      %v896 = vrot.slane %v564, 1
      %v897 = vrot.slane %v618, 1
      %v898 = vsel %vm886, %v896, %v897
      %v899 = vrot.slane %v565, 1
      %v900 = vrot.slane %v619, 1
      %v901 = vsel %vm886, %v899, %v900
      %v902 = vrot.slane %v566, 1
      %v903 = vrot.slane %v620, 1
      %v904 = vsel %vm886, %v902, %v903
      %v905 = vrot.slane %v567, 1
      %v906 = vrot.slane %v621, 1
      %v907 = vsel %vm886, %v905, %v906
      %v908 = vrot.slane %v568, 1
      %v909 = vrot.slane %v622, 1
      %v910 = vsel %vm886, %v908, %v909
      %v911 = vrot.slane %v569, 1
      %v912 = vrot.slane %v623, 1
      %v913 = vsel %vm886, %v911, %v912
      %v914 = vrot.slane %v570, 1
      %v915 = vrot.slane %v624, 1
      %v916 = vsel %vm886, %v914, %v915
      %v917 = vrot.slane %v571, 1
      %v918 = vrot.slane %v625, 1
      %v919 = vsel %vm886, %v917, %v918
      %v920 = vrot.slane %v572, 1
      %v921 = vrot.slane %v626, 1
      %v922 = vsel %vm886, %v920, %v921
      %v923 = vrot.slane %v573, 1
      %v924 = vrot.slane %v627, 1
      %v925 = vsel %vm886, %v923, %v924
      %v926 = vrot.slane %v574, 1
      %v927 = vrot.slane %v628, 1
      %v928 = vsel %vm886, %v926, %v927
      %v929 = vrot.slane %v575, 1
      %v930 = vrot.slane %v629, 1
      %v931 = vsel %vm886, %v929, %v930
      %v932 = vrot.slane %v576, 1
      %v933 = vrot.slane %v630, 1
      %v934 = vsel %vm886, %v932, %v933
      %v935 = vrot.slane %v577, 1
      %v936 = vrot.slane %v631, 1
      %v937 = vsel %vm886, %v935, %v936
      %v938 = vrot.slane %v578, 1
      %v939 = vrot.slane %v632, 1
      %v940 = vsel %vm886, %v938, %v939
      %941 = vrot.lane.b32.xlu0 %v889, 8
      %v942 = vpop.permute.xlu0 %941
      %943 = vrot.lane.b32.xlu0 %v892, 8
      %v944 = vpop.permute.xlu0 %943
      %945 = vrot.lane.b32.xlu0 %v895, 8
      %v946 = vpop.permute.xlu0 %945
      %947 = vrot.lane.b32.xlu0 %v898, 8
      %v948 = vpop.permute.xlu0 %947
      %949 = vrot.lane.b32.xlu0 %v901, 8
      %v950 = vpop.permute.xlu0 %949
      %951 = vrot.lane.b32.xlu0 %v904, 8
      %v952 = vpop.permute.xlu0 %951
      %953 = vrot.lane.b32.xlu0 %v907, 8
      %v954 = vpop.permute.xlu0 %953
      %955 = vrot.lane.b32.xlu0 %v910, 8
      %v956 = vpop.permute.xlu0 %955
      %957 = vrot.lane.b32.xlu0 %v913, 8
      %v958 = vpop.permute.xlu0 %957
      %959 = vrot.lane.b32.xlu0 %v916, 8
      %v960 = vpop.permute.xlu0 %959
      %961 = vrot.lane.b32.xlu0 %v919, 8
      %v962 = vpop.permute.xlu0 %961
      %963 = vrot.lane.b32.xlu0 %v922, 8
      %v964 = vpop.permute.xlu0 %963
      %965 = vrot.lane.b32.xlu0 %v925, 8
      %v966 = vpop.permute.xlu0 %965
      %967 = vrot.lane.b32.xlu0 %v928, 8
      %v968 = vpop.permute.xlu0 %967
      %969 = vrot.lane.b32.xlu0 %v931, 8
      %v970 = vpop.permute.xlu0 %969
      %971 = vrot.lane.b32.xlu0 %v934, 8
      %v972 = vpop.permute.xlu0 %971
      %973 = vrot.lane.b32.xlu0 %v937, 8
      %v974 = vpop.permute.xlu0 %973
      %975 = vrot.lane.b32.xlu0 %v940, 8
      %v976 = vpop.permute.xlu0 %975
      %vm977 = vcmask 31744
      %v979 = vsel %vm977, %v561, %v851
      %v981 = vsel %vm977, %v562, %v853
      %v983 = vsel %vm977, %v563, %v855
      %v985 = vsel %vm977, %v564, %v857
      %v987 = vsel %vm977, %v565, %v859
      %v989 = vsel %vm977, %v566, %v861
      %v991 = vsel %vm977, %v567, %v863
      %v993 = vsel %vm977, %v568, %v865
      %v995 = vsel %vm977, %v569, %v867
      %v997 = vsel %vm977, %v570, %v869
      %v999 = vsel %vm977, %v571, %v871
      %v1001 = vsel %vm977, %v572, %v873
      %v1003 = vsel %vm977, %v573, %v875
      %v1005 = vsel %vm977, %v574, %v877
      %v1007 = vsel %vm977, %v575, %v879
      %v1009 = vsel %vm977, %v576, %v881
      %v1011 = vsel %vm977, %v577, %v883
      %v1013 = vsel %vm977, %v578, %v885
      %vm1014 = vcmask 64512
      %v1016 = vsel %vm1014, %v979, %v942
      %v1018 = vsel %vm1014, %v981, %v944
      %v1020 = vsel %vm1014, %v983, %v946
      %v1022 = vsel %vm1014, %v985, %v948
      %v1024 = vsel %vm1014, %v987, %v950
      %v1026 = vsel %vm1014, %v989, %v952
      %v1028 = vsel %vm1014, %v991, %v954
      %v1030 = vsel %vm1014, %v993, %v956
      %v1032 = vsel %vm1014, %v995, %v958
      %v1034 = vsel %vm1014, %v997, %v960
      %v1036 = vsel %vm1014, %v999, %v962
      %v1038 = vsel %vm1014, %v1001, %v964
      %v1040 = vsel %vm1014, %v1003, %v966
      %v1042 = vsel %vm1014, %v1005, %v968
      %v1044 = vsel %vm1014, %v1007, %v970
      %v1046 = vsel %vm1014, %v1009, %v972
      %v1048 = vsel %vm1014, %v1011, %v974
      %v1050 = vsel %vm1014, %v1013, %v976
      %v1051 = vld [vmem:[%s2] sm:$0xf]
      %v1052 = vld [vmem:[%s2 + $0x4] sm:$0x3]
      %v1055 = vunpack.c.l.b16 %v483
      %v1056 = vunpack.c.l.b16 %v484
      %v1057 = vpack.c.b16 %v1056, %v1055
      %v1059 = vunpack.c.l.b16 %v485
      %v1060 = vpack.c.b16 %v1059, %v1059
      %v1062 = vshrl.u32 %v1057, 16
      %v1064 = vshll.u32 %v1057, 16
      %v1066 = vrot.slane %v1064, 1
      %v1067 = vor.u32 %v1062, %v1066
      %v1069 = vshll.u32 %v1060, 16
      %v1071 = vrot.slane %v1069, 1
      %v1072 = vsel %vm633, %v1067, %v1071
      %1073 = vrot.lane.b32.xlu0 %v1072, 4
      %v1074 = vpop.permute.xlu0 %1073
      %v1075 = vrot.slane %v1057, 1
      %v1076 = vrot.slane %v1060, 1
      %v1077 = vsel %vm886, %v1075, %v1076
      %1078 = vrot.lane.b32.xlu0 %v1077, 8
      %v1079 = vpop.permute.xlu0 %1078
      %v1081 = vsel %vm977, %v1057, %v1074
      %v1083 = vsel %vm1014, %v1081, %v1079
      %s1084 = scalar_lea.vmem %s2, 8
      %v1085 = vld [vmem:[%s1084] sm:$0xf]
      %v1086 = vld [vmem:[%s1084 + $0x4] sm:$0x3]
      %v1089 = vunpack.c.l.b16 %v1085
      %v1090 = vunpack.c.l.b16 %v1086
      %v1091 = vpack.c.b16 %v1090, %v1089
      %vm1092 = vcmask 97280
      %v1093 = vsel %vm1092, %v1018, 0
      %v1095 = vsel %vm1092, %v1020, 0
      %v1097 = vsel %vm1092, %v1022, 0
      %v1099 = vsel %vm1092, %v1024, 0
      %v1101 = vsel %vm1092, %v1026, 0
      %v1103 = vsel %vm1092, %v1028, 0
      %v1105 = vsel %vm1092, %v1030, 0
      %v1107 = vsel %vm1092, %v1032, 0
      %v1109 = vsel %vm1092, %v1034, 0
      %v1111 = vsel %vm1092, %v1036, 0
      %v1113 = vsel %vm1092, %v1038, 0
      %v1115 = vsel %vm1092, %v1040, 0
      %v1117 = vsel %vm1092, %v1042, 0
      %v1119 = vsel %vm1092, %v1044, 0
      %v1121 = vsel %vm1092, %v1046, 0
      %v1123 = vsel %vm1092, %v1048, 0
      %v1125 = vsel %vm1092, %v1050, 0
      %v1127 = vsel %vm1092, %v1083, 0
      %vm1129 = vcmask 1045504
      %v1131 = vsel %vm1129, %v1091, 0
      %1133 = vmatprep.subr.bf16.mxu0 0
      %1134 = vmatpush1.bf16.msra.mxu0 %v1131
      %1135 = vmatprep.subr.bf16.mxu0 0
      %1136 = vmatpush1.bf16.msra.mxu0 0
      %1137 = vmatprep.subr.bf16.mxu0 0
      %1138 = vmatpush1.bf16.msra.mxu0 0
      %1139 = vmatprep.subr.bf16.mxu0 0
      %1140 = vmatpush1.bf16.msra.mxu0 0
      %1141 = vmatprep.subr.bf16.mxu0 0
      %1142 = vmatpush1.bf16.msra.mxu0 0
      %1143 = vmatprep.subr.bf16.mxu0 0
      %1144 = vmatpush1.bf16.msra.mxu0 0
      %1145 = vmatprep.subr.bf16.mxu0 0
      %1146 = vmatpush1.bf16.msra.mxu0 0
      %1147 = vmatprep.subr.bf16.mxu0 0
      %1148 = vmatpush1.bf16.msra.mxu0 0
      %1149 = vmatprep.subr.bf16.mxu0 0
      %1150 = vmatpush1.bf16.msra.mxu0 0
      %1151 = vmatprep.subr.bf16.mxu0 0
      %1152 = vmatpush1.bf16.msra.mxu0 0
      %1153 = vmatprep.subr.bf16.mxu0 0
      %1154 = vmatpush1.bf16.msra.mxu0 0
      %1155 = vmatprep.subr.bf16.mxu0 0
      %1156 = vmatpush1.bf16.msra.mxu0 0
      %1157 = vmatprep.subr.bf16.mxu0 0
      %1158 = vmatpush1.bf16.msra.mxu0 0
      %1159 = vmatprep.subr.bf16.mxu0 0
      %1160 = vmatpush1.bf16.msra.mxu0 0
      %1161 = vmatprep.subr.bf16.mxu0 0
      %1162 = vmatpush1.bf16.msra.mxu0 0
      %1163 = vmatprep.subr.bf16.mxu0 0
      %1164 = vmatpush1.bf16.msra.mxu0 0
      %1165 = vmatprep.mubr.bf16.mxu0 0
      %1166 = vmatmul.mubr.bf16.gmra.mrb[0].mxu0 %v1093
      %v1167 = vpop.f32.mrb[0].mxu0
      %v1168 = vadd.f32 0.0, %v1167
      %v1169 = vpop.f32.mrb[0].mxu0
      %v1170 = vpop.f32.mrb[0].mxu0
      %v1171 = vadd.f32 0.0, %v1170
      %v1172 = vpop.f32.mrb[0].mxu0
      %1173 = vmatprep.mubr.bf16.mxu0 0
      %1174 = vmatmul.mubr.bf16.gmra.mrb[0].mxu0 %v1095
      %v1175 = vpop.f32.mrb[0].mxu0
      %v1176 = vadd.f32 0.0, %v1175
      %v1177 = vpop.f32.mrb[0].mxu0
      %v1178 = vpop.f32.mrb[0].mxu0
      %v1179 = vadd.f32 0.0, %v1178
      %v1180 = vpop.f32.mrb[0].mxu0
      %1181 = vmatprep.mubr.bf16.mxu0 0
      %1182 = vmatmul.mubr.bf16.gmra.mrb[0].mxu0 %v1097
      %v1183 = vpop.f32.mrb[0].mxu0
      %v1184 = vadd.f32 0.0, %v1183
      %v1185 = vpop.f32.mrb[0].mxu0
      %v1186 = vpop.f32.mrb[0].mxu0
      %v1187 = vadd.f32 0.0, %v1186
      %v1188 = vpop.f32.mrb[0].mxu0
      %1189 = vmatprep.mubr.bf16.mxu0 0
      %1190 = vmatmul.mubr.bf16.gmra.mrb[0].mxu0 %v1099
      %v1191 = vpop.f32.mrb[0].mxu0
      %v1192 = vadd.f32 0.0, %v1191
      %v1193 = vpop.f32.mrb[0].mxu0
      %v1194 = vpop.f32.mrb[0].mxu0
      %v1195 = vadd.f32 0.0, %v1194
      %v1196 = vpop.f32.mrb[0].mxu0
      %1197 = vmatprep.mubr.bf16.mxu0 0
      %1198 = vmatmul.mubr.bf16.gmra.mrb[0].mxu0 %v1101
      %v1199 = vpop.f32.mrb[0].mxu0
      %v1200 = vadd.f32 0.0, %v1199
      %v1201 = vpop.f32.mrb[0].mxu0
      %v1202 = vpop.f32.mrb[0].mxu0
      %v1203 = vadd.f32 0.0, %v1202
      %v1204 = vpop.f32.mrb[0].mxu0
      %1205 = vmatprep.mubr.bf16.mxu0 0
      %1206 = vmatmul.mubr.bf16.gmra.mrb[0].mxu0 %v1103
      %v1207 = vpop.f32.mrb[0].mxu0
      %v1208 = vadd.f32 0.0, %v1207
      %v1209 = vpop.f32.mrb[0].mxu0
      %v1210 = vpop.f32.mrb[0].mxu0
      %v1211 = vadd.f32 0.0, %v1210
      %v1212 = vpop.f32.mrb[0].mxu0
      %1213 = vmatprep.mubr.bf16.mxu0 0
      %1214 = vmatmul.mubr.bf16.gmra.mrb[0].mxu0 %v1105
      %v1215 = vpop.f32.mrb[0].mxu0
      %v1216 = vadd.f32 0.0, %v1215
      %v1217 = vpop.f32.mrb[0].mxu0
      %v1218 = vpop.f32.mrb[0].mxu0
      %v1219 = vadd.f32 0.0, %v1218
      %v1220 = vpop.f32.mrb[0].mxu0
      %1221 = vmatprep.mubr.bf16.mxu0 0
      %1222 = vmatmul.mubr.bf16.gmra.mrb[0].mxu0 %v1107
      %v1223 = vpop.f32.mrb[0].mxu0
      %v1224 = vadd.f32 0.0, %v1223
      %v1225 = vpop.f32.mrb[0].mxu0
      %v1226 = vpop.f32.mrb[0].mxu0
      %v1227 = vadd.f32 0.0, %v1226
      %v1228 = vpop.f32.mrb[0].mxu0
      %1229 = vmatprep.mubr.bf16.mxu0 0
      %1230 = vmatmul.mubr.bf16.gmra.mrb[0].mxu0 %v1109
      %v1231 = vpop.f32.mrb[0].mxu0
      %v1232 = vadd.f32 0.0, %v1231
      %v1233 = vpop.f32.mrb[0].mxu0
      %v1234 = vpop.f32.mrb[0].mxu0
      %v1235 = vadd.f32 0.0, %v1234
      %v1236 = vpop.f32.mrb[0].mxu0
      %1237 = vmatprep.mubr.bf16.mxu0 0
      %1238 = vmatmul.mubr.bf16.gmra.mrb[0].mxu0 %v1111
      %v1239 = vpop.f32.mrb[0].mxu0
      %v1240 = vadd.f32 0.0, %v1239
      %v1241 = vpop.f32.mrb[0].mxu0
      %v1242 = vpop.f32.mrb[0].mxu0
      %v1243 = vadd.f32 0.0, %v1242
      %v1244 = vpop.f32.mrb[0].mxu0
      %1245 = vmatprep.mubr.bf16.mxu0 0
      %1246 = vmatmul.mubr.bf16.gmra.mrb[0].mxu0 %v1113
      %v1247 = vpop.f32.mrb[0].mxu0
      %v1248 = vadd.f32 0.0, %v1247
      %v1249 = vpop.f32.mrb[0].mxu0
      %v1250 = vpop.f32.mrb[0].mxu0
      %v1251 = vadd.f32 0.0, %v1250
      %v1252 = vpop.f32.mrb[0].mxu0
      %1253 = vmatprep.mubr.bf16.mxu0 0
      %1254 = vmatmul.mubr.bf16.gmra.mrb[0].mxu0 %v1115
      %v1255 = vpop.f32.mrb[0].mxu0
      %v1256 = vadd.f32 0.0, %v1255
      %v1257 = vpop.f32.mrb[0].mxu0
      %v1258 = vpop.f32.mrb[0].mxu0
      %v1259 = vadd.f32 0.0, %v1258
      %v1260 = vpop.f32.mrb[0].mxu0
      %1261 = vmatprep.mubr.bf16.mxu0 0
      %1262 = vmatmul.mubr.bf16.gmra.mrb[0].mxu0 %v1117
      %v1263 = vpop.f32.mrb[0].mxu0
      %v1264 = vadd.f32 0.0, %v1263
      %v1265 = vpop.f32.mrb[0].mxu0
      %v1266 = vpop.f32.mrb[0].mxu0
      %v1267 = vadd.f32 0.0, %v1266
      %v1268 = vpop.f32.mrb[0].mxu0
      %1269 = vmatprep.mubr.bf16.mxu0 0
      %1270 = vmatmul.mubr.bf16.gmra.mrb[0].mxu0 %v1119
      %v1271 = vpop.f32.mrb[0].mxu0
      %v1272 = vadd.f32 0.0, %v1271
      %v1273 = vpop.f32.mrb[0].mxu0
      %v1274 = vpop.f32.mrb[0].mxu0
      %v1275 = vadd.f32 0.0, %v1274
      %v1276 = vpop.f32.mrb[0].mxu0
      %1277 = vmatprep.mubr.bf16.mxu0 0
      %1278 = vmatmul.mubr.bf16.gmra.mrb[0].mxu0 %v1121
      %v1279 = vpop.f32.mrb[0].mxu0
      %v1280 = vadd.f32 0.0, %v1279
      %v1281 = vpop.f32.mrb[0].mxu0
      %v1282 = vpop.f32.mrb[0].mxu0
      %v1283 = vadd.f32 0.0, %v1282
      %v1284 = vpop.f32.mrb[0].mxu0
      %1285 = vmatprep.mubr.bf16.mxu0 0
      %1286 = vmatmul.mubr.bf16.gmra.mrb[0].mxu0 %v1123
      %v1287 = vpop.f32.mrb[0].mxu0
      %v1288 = vadd.f32 0.0, %v1287
      %v1289 = vpop.f32.mrb[0].mxu0
      %v1290 = vpop.f32.mrb[0].mxu0
      %v1291 = vadd.f32 0.0, %v1290
      %v1292 = vpop.f32.mrb[0].mxu0
      %1293 = vmatprep.mubr.bf16.mxu0 0
      %1294 = vmatmul.mubr.bf16.gmra.mrb[0].mxu0 %v1125
      %v1295 = vpop.f32.mrb[0].mxu0
      %v1296 = vadd.f32 0.0, %v1295
      %v1297 = vpop.f32.mrb[0].mxu0
      %v1298 = vpop.f32.mrb[0].mxu0
      %v1299 = vadd.f32 0.0, %v1298
      %v1300 = vpop.f32.mrb[0].mxu0
      %1301 = vmatprep.mubr.bf16.mxu0 0
      %1302 = vmatmul.mubr.bf16.gmra.mrb[0].mxu0 %v1127
      %v1303 = vpop.f32.mrb[0].mxu0
      %v1304 = vadd.f32 0.0, %v1303
      %v1305 = vpop.f32.mrb[0].mxu0
      %v1306 = vpop.f32.mrb[0].mxu0
      %v1307 = vadd.f32 0.0, %v1306
      %v1308 = vpop.f32.mrb[0].mxu0
      %1309 = vdwg.mxu0
      %v1312 = vunpack.c.l.b16 %v1051
      %v1313 = vunpack.c.l.b16 %v1052
      %v1314 = vpack.c.b16 %v1313, %v1312
      %v1315 = vsel %vm1092, %v1016, 0
      %v1318 = vsel %vm1129, %v1314, 0
      %1320 = vmatprep.subr.bf16.mxu0 0
      %1321 = vmatpush1.bf16.msra.mxu0 %v1318
      %1322 = vmatprep.subr.bf16.mxu0 0
      %1323 = vmatpush1.bf16.msra.mxu0 0
      %1324 = vmatprep.subr.bf16.mxu0 0
      %1325 = vmatpush1.bf16.msra.mxu0 0
      %1326 = vmatprep.subr.bf16.mxu0 0
      %1327 = vmatpush1.bf16.msra.mxu0 0
      %1328 = vmatprep.subr.bf16.mxu0 0
      %1329 = vmatpush1.bf16.msra.mxu0 0
      %1330 = vmatprep.subr.bf16.mxu0 0
      %1331 = vmatpush1.bf16.msra.mxu0 0
      %1332 = vmatprep.subr.bf16.mxu0 0
      %1333 = vmatpush1.bf16.msra.mxu0 0
      %1334 = vmatprep.subr.bf16.mxu0 0
      %1335 = vmatpush1.bf16.msra.mxu0 0
      %1336 = vmatprep.subr.bf16.mxu0 0
      %1337 = vmatpush1.bf16.msra.mxu0 0
      %1338 = vmatprep.subr.bf16.mxu0 0
      %1339 = vmatpush1.bf16.msra.mxu0 0
      %1340 = vmatprep.subr.bf16.mxu0 0
      %1341 = vmatpush1.bf16.msra.mxu0 0
      %1342 = vmatprep.subr.bf16.mxu0 0
      %1343 = vmatpush1.bf16.msra.mxu0 0
      %1344 = vmatprep.subr.bf16.mxu0 0
      %1345 = vmatpush1.bf16.msra.mxu0 0
      %1346 = vmatprep.subr.bf16.mxu0 0
      %1347 = vmatpush1.bf16.msra.mxu0 0
      %1348 = vmatprep.subr.bf16.mxu0 0
      %1349 = vmatpush1.bf16.msra.mxu0 0
      %1350 = vmatprep.subr.bf16.mxu0 0
      %1351 = vmatpush1.bf16.msra.mxu0 0
      %1352 = vmatprep.mubr.bf16.mxu0 0
      %1353 = vmatmul.mubr.bf16.gmra.mrb[0].mxu0 %v1315
      %v1354 = vpop.f32.mrb[0].mxu0
      %v1355 = vadd.f32 %v1168, %v1354
      %v1356 = vpop.f32.mrb[0].mxu0
      %v1357 = vpop.f32.mrb[0].mxu0
      %v1358 = vadd.f32 %v1171, %v1357
      %v1359 = vpop.f32.mrb[0].mxu0
      %1360 = vmatprep.mubr.bf16.mxu0 0
      %1361 = vmatmul.mubr.bf16.gmra.mrb[0].mxu0 %v1093
      %v1362 = vpop.f32.mrb[0].mxu0
      %v1363 = vadd.f32 %v1176, %v1362
      %v1364 = vpop.f32.mrb[0].mxu0
      %v1365 = vpop.f32.mrb[0].mxu0
      %v1366 = vadd.f32 %v1179, %v1365
      %v1367 = vpop.f32.mrb[0].mxu0
      %1368 = vmatprep.mubr.bf16.mxu0 0
      %1369 = vmatmul.mubr.bf16.gmra.mrb[0].mxu0 %v1095
      %v1370 = vpop.f32.mrb[0].mxu0
      %v1371 = vadd.f32 %v1184, %v1370
      %v1372 = vpop.f32.mrb[0].mxu0
      %v1373 = vpop.f32.mrb[0].mxu0
      %v1374 = vadd.f32 %v1187, %v1373
      %v1375 = vpop.f32.mrb[0].mxu0
      %1376 = vmatprep.mubr.bf16.mxu0 0
      %1377 = vmatmul.mubr.bf16.gmra.mrb[0].mxu0 %v1097
      %v1378 = vpop.f32.mrb[0].mxu0
      %v1379 = vadd.f32 %v1192, %v1378
      %v1380 = vpop.f32.mrb[0].mxu0
      %v1381 = vpop.f32.mrb[0].mxu0
      %v1382 = vadd.f32 %v1195, %v1381
      %v1383 = vpop.f32.mrb[0].mxu0
      %1384 = vmatprep.mubr.bf16.mxu0 0
      %1385 = vmatmul.mubr.bf16.gmra.mrb[0].mxu0 %v1099
      %v1386 = vpop.f32.mrb[0].mxu0
      %v1387 = vadd.f32 %v1200, %v1386
      %v1388 = vpop.f32.mrb[0].mxu0
      %v1389 = vpop.f32.mrb[0].mxu0
      %v1390 = vadd.f32 %v1203, %v1389
      %v1391 = vpop.f32.mrb[0].mxu0
      %1392 = vmatprep.mubr.bf16.mxu0 0
      %1393 = vmatmul.mubr.bf16.gmra.mrb[0].mxu0 %v1101
      %v1394 = vpop.f32.mrb[0].mxu0
      %v1395 = vadd.f32 %v1208, %v1394
      %v1396 = vpop.f32.mrb[0].mxu0
      %v1397 = vpop.f32.mrb[0].mxu0
      %v1398 = vadd.f32 %v1211, %v1397
      %v1399 = vpop.f32.mrb[0].mxu0
      %1400 = vmatprep.mubr.bf16.mxu0 0
      %1401 = vmatmul.mubr.bf16.gmra.mrb[0].mxu0 %v1103
      %v1402 = vpop.f32.mrb[0].mxu0
      %v1403 = vadd.f32 %v1216, %v1402
      %v1404 = vpop.f32.mrb[0].mxu0
      %v1405 = vpop.f32.mrb[0].mxu0
      %v1406 = vadd.f32 %v1219, %v1405
      %v1407 = vpop.f32.mrb[0].mxu0
      %1408 = vmatprep.mubr.bf16.mxu0 0
      %1409 = vmatmul.mubr.bf16.gmra.mrb[0].mxu0 %v1105
      %v1410 = vpop.f32.mrb[0].mxu0
      %v1411 = vadd.f32 %v1224, %v1410
      %v1412 = vpop.f32.mrb[0].mxu0
      %v1413 = vpop.f32.mrb[0].mxu0
      %v1414 = vadd.f32 %v1227, %v1413
      %v1415 = vpop.f32.mrb[0].mxu0
      %1416 = vmatprep.mubr.bf16.mxu0 0
      %1417 = vmatmul.mubr.bf16.gmra.mrb[0].mxu0 %v1107
      %v1418 = vpop.f32.mrb[0].mxu0
      %v1419 = vadd.f32 %v1232, %v1418
      %v1420 = vpop.f32.mrb[0].mxu0
      %v1421 = vpop.f32.mrb[0].mxu0
      %v1422 = vadd.f32 %v1235, %v1421
      %v1423 = vpop.f32.mrb[0].mxu0
      %1424 = vmatprep.mubr.bf16.mxu0 0
      %1425 = vmatmul.mubr.bf16.gmra.mrb[0].mxu0 %v1109
      %v1426 = vpop.f32.mrb[0].mxu0
      %v1427 = vadd.f32 %v1240, %v1426
      %v1428 = vpop.f32.mrb[0].mxu0
      %v1429 = vpop.f32.mrb[0].mxu0
      %v1430 = vadd.f32 %v1243, %v1429
      %v1431 = vpop.f32.mrb[0].mxu0
      %1432 = vmatprep.mubr.bf16.mxu0 0
      %1433 = vmatmul.mubr.bf16.gmra.mrb[0].mxu0 %v1111
      %v1434 = vpop.f32.mrb[0].mxu0
      %v1435 = vadd.f32 %v1248, %v1434
      %v1436 = vpop.f32.mrb[0].mxu0
      %v1437 = vpop.f32.mrb[0].mxu0
      %v1438 = vadd.f32 %v1251, %v1437
      %v1439 = vpop.f32.mrb[0].mxu0
      %1440 = vmatprep.mubr.bf16.mxu0 0
      %1441 = vmatmul.mubr.bf16.gmra.mrb[0].mxu0 %v1113
      %v1442 = vpop.f32.mrb[0].mxu0
      %v1443 = vadd.f32 %v1256, %v1442
      %v1444 = vpop.f32.mrb[0].mxu0
      %v1445 = vpop.f32.mrb[0].mxu0
      %v1446 = vadd.f32 %v1259, %v1445
      %v1447 = vpop.f32.mrb[0].mxu0
      %1448 = vmatprep.mubr.bf16.mxu0 0
      %1449 = vmatmul.mubr.bf16.gmra.mrb[0].mxu0 %v1115
      %v1450 = vpop.f32.mrb[0].mxu0
      %v1451 = vadd.f32 %v1264, %v1450
      %v1452 = vpop.f32.mrb[0].mxu0
      %v1453 = vpop.f32.mrb[0].mxu0
      %v1454 = vadd.f32 %v1267, %v1453
      %v1455 = vpop.f32.mrb[0].mxu0
      %1456 = vmatprep.mubr.bf16.mxu0 0
      %1457 = vmatmul.mubr.bf16.gmra.mrb[0].mxu0 %v1117
      %v1458 = vpop.f32.mrb[0].mxu0
      %v1459 = vadd.f32 %v1272, %v1458
      %v1460 = vpop.f32.mrb[0].mxu0
      %v1461 = vpop.f32.mrb[0].mxu0
      %v1462 = vadd.f32 %v1275, %v1461
      %v1463 = vpop.f32.mrb[0].mxu0
      %1464 = vmatprep.mubr.bf16.mxu0 0
      %1465 = vmatmul.mubr.bf16.gmra.mrb[0].mxu0 %v1119
      %v1466 = vpop.f32.mrb[0].mxu0
      %v1467 = vadd.f32 %v1280, %v1466
      %v1468 = vpop.f32.mrb[0].mxu0
      %v1469 = vpop.f32.mrb[0].mxu0
      %v1470 = vadd.f32 %v1283, %v1469
      %v1471 = vpop.f32.mrb[0].mxu0
      %1472 = vmatprep.mubr.bf16.mxu0 0
      %1473 = vmatmul.mubr.bf16.gmra.mrb[0].mxu0 %v1121
      %v1474 = vpop.f32.mrb[0].mxu0
      %v1475 = vadd.f32 %v1288, %v1474
      %v1476 = vpop.f32.mrb[0].mxu0
      %v1477 = vpop.f32.mrb[0].mxu0
      %v1478 = vadd.f32 %v1291, %v1477
      %v1479 = vpop.f32.mrb[0].mxu0
      %1480 = vmatprep.mubr.bf16.mxu0 0
      %1481 = vmatmul.mubr.bf16.gmra.mrb[0].mxu0 %v1123
      %v1482 = vpop.f32.mrb[0].mxu0
      %v1483 = vadd.f32 %v1296, %v1482
      %v1484 = vpop.f32.mrb[0].mxu0
      %v1485 = vpop.f32.mrb[0].mxu0
      %v1486 = vadd.f32 %v1299, %v1485
      %v1487 = vpop.f32.mrb[0].mxu0
      %1488 = vmatprep.mubr.bf16.mxu0 0
      %1489 = vmatmul.mubr.bf16.gmra.mrb[0].mxu0 %v1125
      %v1490 = vpop.f32.mrb[0].mxu0
      %v1491 = vadd.f32 %v1304, %v1490
      %v1492 = vpop.f32.mrb[0].mxu0
      %v1493 = vpop.f32.mrb[0].mxu0
      %v1494 = vadd.f32 %v1307, %v1493
      %v1495 = vpop.f32.mrb[0].mxu0
      %1496 = vdwg.mxu0
      %v1499 = vunpack.c.l.b16 %v486
      %v1500 = vunpack.c.l.b16 %v487
      %v1501 = vpack.c.b16 %v1500, %v1499
      %v1503 = vunpack.c.l.b16 %v488
      %v1504 = vpack.c.b16 %v1503, %v1503
      %v1506 = vshrl.u32 %v1501, 16
      %v1508 = vshll.u32 %v1501, 16
      %v1510 = vrot.slane %v1508, 1
      %v1511 = vor.u32 %v1506, %v1510
      %v1513 = vshll.u32 %v1504, 16
      %v1515 = vrot.slane %v1513, 1
      %v1516 = vsel %vm633, %v1511, %v1515
      %1517 = vrot.lane.b32.xlu0 %v1516, 4
      %v1518 = vpop.permute.xlu0 %1517
      %v1519 = vrot.slane %v1501, 1
      %v1520 = vrot.slane %v1504, 1
      %v1521 = vsel %vm886, %v1519, %v1520
      %1522 = vrot.lane.b32.xlu0 %v1521, 8
      %v1523 = vpop.permute.xlu0 %1522
      %v1525 = vsel %vm977, %v1501, %v1518
      %v1527 = vsel %vm1014, %v1525, %v1523
      %s1528 = scalar_lea.vmem %s2, 16
      %v1529 = vld [vmem:[%s1528] sm:$0xf]
      %v1530 = vld [vmem:[%s1528 + $0x4] sm:$0x3]
      %v1533 = vunpack.c.l.b16 %v1529
      %v1534 = vunpack.c.l.b16 %v1530
      %v1535 = vpack.c.b16 %v1534, %v1533
      %v1536 = vsel %vm1092, %v1527, 0
      %v1539 = vsel %vm1129, %v1535, 0
      %1541 = vmatprep.subr.bf16.mxu0 0
      %1542 = vmatpush1.bf16.msra.mxu0 %v1539
      %1543 = vmatprep.subr.bf16.mxu0 0
      %1544 = vmatpush1.bf16.msra.mxu0 0
      %1545 = vmatprep.subr.bf16.mxu0 0
      %1546 = vmatpush1.bf16.msra.mxu0 0
      %1547 = vmatprep.subr.bf16.mxu0 0
      %1548 = vmatpush1.bf16.msra.mxu0 0
      %1549 = vmatprep.subr.bf16.mxu0 0
      %1550 = vmatpush1.bf16.msra.mxu0 0
      %1551 = vmatprep.subr.bf16.mxu0 0
      %1552 = vmatpush1.bf16.msra.mxu0 0
      %1553 = vmatprep.subr.bf16.mxu0 0
      %1554 = vmatpush1.bf16.msra.mxu0 0
      %1555 = vmatprep.subr.bf16.mxu0 0
      %1556 = vmatpush1.bf16.msra.mxu0 0
      %1557 = vmatprep.subr.bf16.mxu0 0
      %1558 = vmatpush1.bf16.msra.mxu0 0
      %1559 = vmatprep.subr.bf16.mxu0 0
      %1560 = vmatpush1.bf16.msra.mxu0 0
      %1561 = vmatprep.subr.bf16.mxu0 0
      %1562 = vmatpush1.bf16.msra.mxu0 0
      %1563 = vmatprep.subr.bf16.mxu0 0
      %1564 = vmatpush1.bf16.msra.mxu0 0
      %1565 = vmatprep.subr.bf16.mxu0 0
      %1566 = vmatpush1.bf16.msra.mxu0 0
      %1567 = vmatprep.subr.bf16.mxu0 0
      %1568 = vmatpush1.bf16.msra.mxu0 0
      %1569 = vmatprep.subr.bf16.mxu0 0
      %1570 = vmatpush1.bf16.msra.mxu0 0
      %1571 = vmatprep.subr.bf16.mxu0 0
      %1572 = vmatpush1.bf16.msra.mxu0 0
      %1573 = vmatprep.mubr.bf16.mxu0 0
      %1574 = vmatmul.mubr.bf16.gmra.mrb[0].mxu0 %v1095
      %v1575 = vpop.f32.mrb[0].mxu0
      %v1576 = vadd.f32 0.0, %v1575
      %v1577 = vpop.f32.mrb[0].mxu0
      %v1578 = vpop.f32.mrb[0].mxu0
      %v1579 = vadd.f32 0.0, %v1578
      %v1580 = vpop.f32.mrb[0].mxu0
      %1581 = vmatprep.mubr.bf16.mxu0 0
      %1582 = vmatmul.mubr.bf16.gmra.mrb[0].mxu0 %v1097
      %v1583 = vpop.f32.mrb[0].mxu0
      %v1584 = vadd.f32 0.0, %v1583
      %v1585 = vpop.f32.mrb[0].mxu0
      %v1586 = vpop.f32.mrb[0].mxu0
      %v1587 = vadd.f32 0.0, %v1586
      %v1588 = vpop.f32.mrb[0].mxu0
      %1589 = vmatprep.mubr.bf16.mxu0 0
      %1590 = vmatmul.mubr.bf16.gmra.mrb[0].mxu0 %v1099
      %v1591 = vpop.f32.mrb[0].mxu0
      %v1592 = vadd.f32 0.0, %v1591
      %v1593 = vpop.f32.mrb[0].mxu0
      %v1594 = vpop.f32.mrb[0].mxu0
      %v1595 = vadd.f32 0.0, %v1594
      %v1596 = vpop.f32.mrb[0].mxu0
      %1597 = vmatprep.mubr.bf16.mxu0 0
      %1598 = vmatmul.mubr.bf16.gmra.mrb[0].mxu0 %v1101
      %v1599 = vpop.f32.mrb[0].mxu0
      %v1600 = vadd.f32 0.0, %v1599
      %v1601 = vpop.f32.mrb[0].mxu0
      %v1602 = vpop.f32.mrb[0].mxu0
      %v1603 = vadd.f32 0.0, %v1602
      %v1604 = vpop.f32.mrb[0].mxu0
      %1605 = vmatprep.mubr.bf16.mxu0 0
      %1606 = vmatmul.mubr.bf16.gmra.mrb[0].mxu0 %v1103
      %v1607 = vpop.f32.mrb[0].mxu0
      %v1608 = vadd.f32 0.0, %v1607
      %v1609 = vpop.f32.mrb[0].mxu0
      %v1610 = vpop.f32.mrb[0].mxu0
      %v1611 = vadd.f32 0.0, %v1610
      %v1612 = vpop.f32.mrb[0].mxu0
      %1613 = vmatprep.mubr.bf16.mxu0 0
      %1614 = vmatmul.mubr.bf16.gmra.mrb[0].mxu0 %v1105
      %v1615 = vpop.f32.mrb[0].mxu0
      %v1616 = vadd.f32 0.0, %v1615
      %v1617 = vpop.f32.mrb[0].mxu0
      %v1618 = vpop.f32.mrb[0].mxu0
      %v1619 = vadd.f32 0.0, %v1618
      %v1620 = vpop.f32.mrb[0].mxu0
      %1621 = vmatprep.mubr.bf16.mxu0 0
      %1622 = vmatmul.mubr.bf16.gmra.mrb[0].mxu0 %v1107
      %v1623 = vpop.f32.mrb[0].mxu0
      %v1624 = vadd.f32 0.0, %v1623
      %v1625 = vpop.f32.mrb[0].mxu0
      %v1626 = vpop.f32.mrb[0].mxu0
      %v1627 = vadd.f32 0.0, %v1626
      %v1628 = vpop.f32.mrb[0].mxu0
      %1629 = vmatprep.mubr.bf16.mxu0 0
      %1630 = vmatmul.mubr.bf16.gmra.mrb[0].mxu0 %v1109
      %v1631 = vpop.f32.mrb[0].mxu0
      %v1632 = vadd.f32 0.0, %v1631
      %v1633 = vpop.f32.mrb[0].mxu0
      %v1634 = vpop.f32.mrb[0].mxu0
      %v1635 = vadd.f32 0.0, %v1634
      %v1636 = vpop.f32.mrb[0].mxu0
      %1637 = vmatprep.mubr.bf16.mxu0 0
      %1638 = vmatmul.mubr.bf16.gmra.mrb[0].mxu0 %v1111
      %v1639 = vpop.f32.mrb[0].mxu0
      %v1640 = vadd.f32 0.0, %v1639
      %v1641 = vpop.f32.mrb[0].mxu0
      %v1642 = vpop.f32.mrb[0].mxu0
      %v1643 = vadd.f32 0.0, %v1642
      %v1644 = vpop.f32.mrb[0].mxu0
      %1645 = vmatprep.mubr.bf16.mxu0 0
      %1646 = vmatmul.mubr.bf16.gmra.mrb[0].mxu0 %v1113
      %v1647 = vpop.f32.mrb[0].mxu0
      %v1648 = vadd.f32 0.0, %v1647
      %v1649 = vpop.f32.mrb[0].mxu0
      %v1650 = vpop.f32.mrb[0].mxu0
      %v1651 = vadd.f32 0.0, %v1650
      %v1652 = vpop.f32.mrb[0].mxu0
      %1653 = vmatprep.mubr.bf16.mxu0 0
      %1654 = vmatmul.mubr.bf16.gmra.mrb[0].mxu0 %v1115
      %v1655 = vpop.f32.mrb[0].mxu0
      %v1656 = vadd.f32 0.0, %v1655
      %v1657 = vpop.f32.mrb[0].mxu0
      %v1658 = vpop.f32.mrb[0].mxu0
      %v1659 = vadd.f32 0.0, %v1658
      %v1660 = vpop.f32.mrb[0].mxu0
      %1661 = vmatprep.mubr.bf16.mxu0 0
      %1662 = vmatmul.mubr.bf16.gmra.mrb[0].mxu0 %v1117
      %v1663 = vpop.f32.mrb[0].mxu0
      %v1664 = vadd.f32 0.0, %v1663
      %v1665 = vpop.f32.mrb[0].mxu0
      %v1666 = vpop.f32.mrb[0].mxu0
      %v1667 = vadd.f32 0.0, %v1666
      %v1668 = vpop.f32.mrb[0].mxu0
      %1669 = vmatprep.mubr.bf16.mxu0 0
      %1670 = vmatmul.mubr.bf16.gmra.mrb[0].mxu0 %v1119
      %v1671 = vpop.f32.mrb[0].mxu0
      %v1672 = vadd.f32 0.0, %v1671
      %v1673 = vpop.f32.mrb[0].mxu0
      %v1674 = vpop.f32.mrb[0].mxu0
      %v1675 = vadd.f32 0.0, %v1674
      %v1676 = vpop.f32.mrb[0].mxu0
      %1677 = vmatprep.mubr.bf16.mxu0 0
      %1678 = vmatmul.mubr.bf16.gmra.mrb[0].mxu0 %v1121
      %v1679 = vpop.f32.mrb[0].mxu0
      %v1680 = vadd.f32 0.0, %v1679
      %v1681 = vpop.f32.mrb[0].mxu0
      %v1682 = vpop.f32.mrb[0].mxu0
      %v1683 = vadd.f32 0.0, %v1682
      %v1684 = vpop.f32.mrb[0].mxu0
      %1685 = vmatprep.mubr.bf16.mxu0 0
      %1686 = vmatmul.mubr.bf16.gmra.mrb[0].mxu0 %v1123
      %v1687 = vpop.f32.mrb[0].mxu0
      %v1688 = vadd.f32 0.0, %v1687
      %v1689 = vpop.f32.mrb[0].mxu0
      %v1690 = vpop.f32.mrb[0].mxu0
      %v1691 = vadd.f32 0.0, %v1690
      %v1692 = vpop.f32.mrb[0].mxu0
      %1693 = vmatprep.mubr.bf16.mxu0 0
      %1694 = vmatmul.mubr.bf16.gmra.mrb[0].mxu0 %v1125
      %v1695 = vpop.f32.mrb[0].mxu0
      %v1696 = vadd.f32 0.0, %v1695
      %v1697 = vpop.f32.mrb[0].mxu0
      %v1698 = vpop.f32.mrb[0].mxu0
      %v1699 = vadd.f32 0.0, %v1698
      %v1700 = vpop.f32.mrb[0].mxu0
      %1701 = vmatprep.mubr.bf16.mxu0 0
      %1702 = vmatmul.mubr.bf16.gmra.mrb[0].mxu0 %v1127
      %v1703 = vpop.f32.mrb[0].mxu0
      %v1704 = vadd.f32 0.0, %v1703
      %v1705 = vpop.f32.mrb[0].mxu0
      %v1706 = vpop.f32.mrb[0].mxu0
      %v1707 = vadd.f32 0.0, %v1706
      %v1708 = vpop.f32.mrb[0].mxu0
      %1709 = vmatprep.mubr.bf16.mxu0 0
      %1710 = vmatmul.mubr.bf16.gmra.mrb[0].mxu0 %v1536
      %v1711 = vpop.f32.mrb[0].mxu0
      %v1712 = vadd.f32 0.0, %v1711
      %v1713 = vpop.f32.mrb[0].mxu0
      %v1714 = vpop.f32.mrb[0].mxu0
      %v1715 = vadd.f32 0.0, %v1714
      %v1716 = vpop.f32.mrb[0].mxu0
      %1717 = vdwg.mxu0
      %v1718 = vadd.f32 %v1355, %v1576
      %v1719 = vadd.f32 %v1358, %v1579
      %v1720 = vadd.f32 %v1363, %v1584
      %v1721 = vadd.f32 %v1366, %v1587
      %v1722 = vadd.f32 %v1371, %v1592
      %v1723 = vadd.f32 %v1374, %v1595
      %v1724 = vadd.f32 %v1379, %v1600
      %v1725 = vadd.f32 %v1382, %v1603
      %v1726 = vadd.f32 %v1387, %v1608
      %v1727 = vadd.f32 %v1390, %v1611
      %v1728 = vadd.f32 %v1395, %v1616
      %v1729 = vadd.f32 %v1398, %v1619
      %v1730 = vadd.f32 %v1403, %v1624
      %v1731 = vadd.f32 %v1406, %v1627
      %v1732 = vadd.f32 %v1411, %v1632
      %v1733 = vadd.f32 %v1414, %v1635
      %v1734 = vadd.f32 %v1419, %v1640
      %v1735 = vadd.f32 %v1422, %v1643
      %v1736 = vadd.f32 %v1427, %v1648
      %v1737 = vadd.f32 %v1430, %v1651
      %v1738 = vadd.f32 %v1435, %v1656
      %v1739 = vadd.f32 %v1438, %v1659
      %v1740 = vadd.f32 %v1443, %v1664
      %v1741 = vadd.f32 %v1446, %v1667
      %v1742 = vadd.f32 %v1451, %v1672
      %v1743 = vadd.f32 %v1454, %v1675
      %v1744 = vadd.f32 %v1459, %v1680
      %v1745 = vadd.f32 %v1462, %v1683
      %v1746 = vadd.f32 %v1467, %v1688
      %v1747 = vadd.f32 %v1470, %v1691
      %v1748 = vadd.f32 %v1475, %v1696
      %v1749 = vadd.f32 %v1478, %v1699
      %v1750 = vadd.f32 %v1483, %v1704
      %v1751 = vadd.f32 %v1486, %v1707
      %v1752 = vadd.f32 %v1491, %v1712
      %v1753 = vadd.f32 %v1494, %v1715
      %v1754 = vld [vmem:[%s3] sm:$0x1]
      %v1756 = vlaneseq
      %v1757 = vshrl.u32 %v1756, 7
      %v1758 = vsub.s32 0, %v1757
      %v1759 = vrot.slane %v1754, %v1758
      %v1761 = vmul.f32 %v1718, %v1759
      %v1762 = vmul.f32 %v1719, %v1759
      %v1763 = vmul.f32 %v1720, %v1759
      %v1764 = vmul.f32 %v1721, %v1759
      %v1765 = vmul.f32 %v1722, %v1759
      %v1766 = vmul.f32 %v1723, %v1759
      %v1767 = vmul.f32 %v1724, %v1759
      %v1768 = vmul.f32 %v1725, %v1759
      %v1769 = vmul.f32 %v1726, %v1759
      %v1770 = vmul.f32 %v1727, %v1759
      %v1771 = vmul.f32 %v1728, %v1759
      %v1772 = vmul.f32 %v1729, %v1759
      %v1773 = vmul.f32 %v1730, %v1759
      %v1774 = vmul.f32 %v1731, %v1759
      %v1775 = vmul.f32 %v1732, %v1759
      %v1776 = vmul.f32 %v1733, %v1759
      %v1777 = vmul.f32 %v1734, %v1759
      %v1778 = vmul.f32 %v1735, %v1759
      %v1779 = vmul.f32 %v1736, %v1759
      %v1780 = vmul.f32 %v1737, %v1759
      %v1781 = vmul.f32 %v1738, %v1759
      %v1782 = vmul.f32 %v1739, %v1759
      %v1783 = vmul.f32 %v1740, %v1759
      %v1784 = vmul.f32 %v1741, %v1759
      %v1785 = vmul.f32 %v1742, %v1759
      %v1786 = vmul.f32 %v1743, %v1759
      %v1787 = vmul.f32 %v1744, %v1759
      %v1788 = vmul.f32 %v1745, %v1759
      %v1789 = vmul.f32 %v1746, %v1759
      %v1790 = vmul.f32 %v1747, %v1759
      %v1791 = vmul.f32 %v1748, %v1759
      %v1792 = vmul.f32 %v1749, %v1759
      %v1793 = vmul.f32 %v1750, %v1759
      %v1794 = vmul.f32 %v1751, %v1759
      %v1795 = vmul.f32 %v1752, %v1759
      %v1796 = vmul.f32 %v1753, %v1759
      %v1797 = vld [vmem:[%s4] sm:$0x1]
      %v1799 = vlaneseq
      %v1800 = vshrl.u32 %v1799, 7
      %v1801 = vsub.s32 0, %v1800
      %v1802 = vrot.slane %v1797, %v1801
      %v1804 = vadd.f32 %v1761, %v1802
      %v1805 = vadd.f32 %v1762, %v1802
      %v1806 = vadd.f32 %v1763, %v1802
      %v1807 = vadd.f32 %v1764, %v1802
      %v1808 = vadd.f32 %v1765, %v1802
      %v1809 = vadd.f32 %v1766, %v1802
      %v1810 = vadd.f32 %v1767, %v1802
      %v1811 = vadd.f32 %v1768, %v1802
      %v1812 = vadd.f32 %v1769, %v1802
      %v1813 = vadd.f32 %v1770, %v1802
      %v1814 = vadd.f32 %v1771, %v1802
      %v1815 = vadd.f32 %v1772, %v1802
      %v1816 = vadd.f32 %v1773, %v1802
      %v1817 = vadd.f32 %v1774, %v1802
      %v1818 = vadd.f32 %v1775, %v1802
      %v1819 = vadd.f32 %v1776, %v1802
      %v1820 = vadd.f32 %v1777, %v1802
      %v1821 = vadd.f32 %v1778, %v1802
      %v1822 = vadd.f32 %v1779, %v1802
      %v1823 = vadd.f32 %v1780, %v1802
      %v1824 = vadd.f32 %v1781, %v1802
      %v1825 = vadd.f32 %v1782, %v1802
      %v1826 = vadd.f32 %v1783, %v1802
      %v1827 = vadd.f32 %v1784, %v1802
      %v1828 = vadd.f32 %v1785, %v1802
      %v1829 = vadd.f32 %v1786, %v1802
      %v1830 = vadd.f32 %v1787, %v1802
      %v1831 = vadd.f32 %v1788, %v1802
      %v1832 = vadd.f32 %v1789, %v1802
      %v1833 = vadd.f32 %v1790, %v1802
      %v1834 = vadd.f32 %v1791, %v1802
      %v1835 = vadd.f32 %v1792, %v1802
      %v1836 = vadd.f32 %v1793, %v1802
      %v1837 = vadd.f32 %v1794, %v1802
      %v1838 = vadd.f32 %v1795, %v1802
      %v1839 = vadd.f32 %v1796, %v1802
      %v1840 = vmax.f32 %v1804, 0.0
      %v1841 = vmax.f32 %v1805, 0.0
      %v1842 = vmax.f32 %v1806, 0.0
      %v1843 = vmax.f32 %v1807, 0.0
      %v1844 = vmax.f32 %v1808, 0.0
      %v1845 = vmax.f32 %v1809, 0.0
      %v1846 = vmax.f32 %v1810, 0.0
      %v1847 = vmax.f32 %v1811, 0.0
      %v1848 = vmax.f32 %v1812, 0.0
      %v1849 = vmax.f32 %v1813, 0.0
      %v1850 = vmax.f32 %v1814, 0.0
      %v1851 = vmax.f32 %v1815, 0.0
      %v1852 = vmax.f32 %v1816, 0.0
      %v1853 = vmax.f32 %v1817, 0.0
      %v1854 = vmax.f32 %v1818, 0.0
      %v1855 = vmax.f32 %v1819, 0.0
      %v1856 = vmax.f32 %v1820, 0.0
      %v1857 = vmax.f32 %v1821, 0.0
      %v1858 = vmax.f32 %v1822, 0.0
      %v1859 = vmax.f32 %v1823, 0.0
      %v1860 = vmax.f32 %v1824, 0.0
      %v1861 = vmax.f32 %v1825, 0.0
      %v1862 = vmax.f32 %v1826, 0.0
      %v1863 = vmax.f32 %v1827, 0.0
      %v1864 = vmax.f32 %v1828, 0.0
      %v1865 = vmax.f32 %v1829, 0.0
      %v1866 = vmax.f32 %v1830, 0.0
      %v1867 = vmax.f32 %v1831, 0.0
      %v1868 = vmax.f32 %v1832, 0.0
      %v1869 = vmax.f32 %v1833, 0.0
      %v1870 = vmax.f32 %v1834, 0.0
      %v1871 = vmax.f32 %v1835, 0.0
      %v1872 = vmax.f32 %v1836, 0.0
      %v1873 = vmax.f32 %v1837, 0.0
      %v1874 = vmax.f32 %v1838, 0.0
      %v1875 = vmax.f32 %v1839, 0.0
      %p1876 = scmp.gt.s32.totalorder %s24, 0
      %s1877 = scalar_select %p1876, 1.0, 0.0
      %p1878 = scmp.lt.s32.totalorder %s24, 0
      %s1879 = scalar_select %p1878, 1.0, 0.0
      %v1880 = vstv %s1877
      %v1881 = vmul.f32 %v1840, %v1880
      %v1882 = vmul.f32 %v1841, %v1880
      %v1883 = vstv %s1879
      %v1884 = vmul.f32 %v1874, %v1883
      %v1885 = vmul.f32 %v1875, %v1883
      %v1886 = vpack.c.bf16 %v1882, %v1881
      %v1887 = vpack.c.bf16 %v1843, %v1842
      %v1888 = vpack.c.bf16 %v1845, %v1844
      %v1889 = vpack.c.bf16 %v1847, %v1846
      %v1890 = vpack.c.bf16 %v1849, %v1848
      %v1891 = vpack.c.bf16 %v1851, %v1850
      %v1892 = vpack.c.bf16 %v1853, %v1852
      %v1893 = vpack.c.bf16 %v1855, %v1854
      %v1894 = vpack.c.bf16 %v1857, %v1856
      %v1895 = vpack.c.bf16 %v1859, %v1858
      %v1896 = vpack.c.bf16 %v1861, %v1860
      %v1897 = vpack.c.bf16 %v1863, %v1862
      %v1898 = vpack.c.bf16 %v1865, %v1864
      %v1899 = vpack.c.bf16 %v1867, %v1866
      %v1900 = vpack.c.bf16 %v1869, %v1868
      %v1901 = vpack.c.bf16 %v1871, %v1870
      %v1902 = vpack.c.bf16 %v1873, %v1872
      %v1903 = vpack.c.bf16 %v1885, %v1884
      %v1905 = vshrl.u32 %v1886, 16
      %v1907 = vrot.slane %v1905, 7
      %v1908 = vshll.u32 %v1886, 16
      %v1910 = vor.u32 %v1907, %v1908
      %v1912 = vshrl.u32 %v1887, 16
      %v1914 = vrot.slane %v1912, 7
      %v1915 = vshll.u32 %v1887, 16
      %v1917 = vor.u32 %v1914, %v1915
      %v1919 = vshrl.u32 %v1888, 16
      %v1921 = vrot.slane %v1919, 7
      %v1922 = vshll.u32 %v1888, 16
      %v1924 = vor.u32 %v1921, %v1922
      %v1926 = vshrl.u32 %v1889, 16
      %v1928 = vrot.slane %v1926, 7
      %v1929 = vshll.u32 %v1889, 16
      %v1931 = vor.u32 %v1928, %v1929
      %v1933 = vshrl.u32 %v1890, 16
      %v1935 = vrot.slane %v1933, 7
      %v1936 = vshll.u32 %v1890, 16
      %v1938 = vor.u32 %v1935, %v1936
      %v1940 = vshrl.u32 %v1891, 16
      %v1942 = vrot.slane %v1940, 7
      %v1943 = vshll.u32 %v1891, 16
      %v1945 = vor.u32 %v1942, %v1943
      %v1947 = vshrl.u32 %v1892, 16
      %v1949 = vrot.slane %v1947, 7
      %v1950 = vshll.u32 %v1892, 16
      %v1952 = vor.u32 %v1949, %v1950
      %v1954 = vshrl.u32 %v1893, 16
      %v1956 = vrot.slane %v1954, 7
      %v1957 = vshll.u32 %v1893, 16
      %v1959 = vor.u32 %v1956, %v1957
      %v1961 = vshrl.u32 %v1894, 16
      %v1963 = vrot.slane %v1961, 7
      %v1964 = vshll.u32 %v1894, 16
      %v1966 = vor.u32 %v1963, %v1964
      %v1968 = vshrl.u32 %v1895, 16
      %v1970 = vrot.slane %v1968, 7
      %v1971 = vshll.u32 %v1895, 16
      %v1973 = vor.u32 %v1970, %v1971
      %v1975 = vshrl.u32 %v1896, 16
      %v1977 = vrot.slane %v1975, 7
      %v1978 = vshll.u32 %v1896, 16
      %v1980 = vor.u32 %v1977, %v1978
      %v1982 = vshrl.u32 %v1897, 16
      %v1984 = vrot.slane %v1982, 7
      %v1985 = vshll.u32 %v1897, 16
      %v1987 = vor.u32 %v1984, %v1985
      %v1989 = vshrl.u32 %v1898, 16
      %v1991 = vrot.slane %v1989, 7
      %v1992 = vshll.u32 %v1898, 16
      %v1994 = vor.u32 %v1991, %v1992
      %v1996 = vshrl.u32 %v1899, 16
      %v1998 = vrot.slane %v1996, 7
      %v1999 = vshll.u32 %v1899, 16
      %v2001 = vor.u32 %v1998, %v1999
      %v2003 = vshrl.u32 %v1900, 16
      %v2005 = vrot.slane %v2003, 7
      %v2006 = vshll.u32 %v1900, 16
      %v2008 = vor.u32 %v2005, %v2006
      %v2010 = vshrl.u32 %v1901, 16
      %v2012 = vrot.slane %v2010, 7
      %v2013 = vshll.u32 %v1901, 16
      %v2015 = vor.u32 %v2012, %v2013
      %v2017 = vshrl.u32 %v1902, 16
      %v2019 = vrot.slane %v2017, 7
      %v2020 = vshll.u32 %v1902, 16
      %v2022 = vor.u32 %v2019, %v2020
      %v2024 = vshrl.u32 %v1903, 16
      %v2026 = vrot.slane %v2024, 7
      %v2027 = vshll.u32 %v1903, 16
      %v2029 = vor.u32 %v2026, %v2027
      %vm2066 = vcmask 1040384
      %vm2067 = vsmask.f32 256
      %vm2068 = vmand %vm2066, %vm2067
      %v2069 = vsel %vm2068, 0, %v1910
      %v2070 = vsel %vm2068, 0, %v1917
      %v2071 = vsel %vm2068, 0, %v1924
      %v2072 = vsel %vm2068, 0, %v1931
      %v2073 = vsel %vm2068, 0, %v1938
      %v2074 = vsel %vm2068, 0, %v1945
      %v2075 = vsel %vm2068, 0, %v1952
      %v2076 = vsel %vm2068, 0, %v1959
      %v2077 = vsel %vm2068, 0, %v1966
      %v2078 = vsel %vm2068, 0, %v1973
      %v2079 = vsel %vm2068, 0, %v1980
      %v2080 = vsel %vm2068, 0, %v1987
      %v2081 = vsel %vm2068, 0, %v1994
      %v2082 = vsel %vm2068, 0, %v2001
      %v2083 = vsel %vm2068, 0, %v2008
      %v2084 = vsel %vm2068, 0, %v2015
      %v2085 = vsel %vm2068, 0, %v2022
      %v2086 = vsel %vm2068, 0, %v2029
      %v2087 = vsel %vm2068, %v1907, 0
      %v2088 = vsel %vm2068, %v1914, 0
      %v2089 = vsel %vm2068, %v1921, 0
      %v2090 = vsel %vm2068, %v1928, 0
      %v2091 = vsel %vm2068, %v1935, 0
      %v2092 = vsel %vm2068, %v1942, 0
      %v2093 = vsel %vm2068, %v1949, 0
      %v2094 = vsel %vm2068, %v1956, 0
      %v2095 = vsel %vm2068, %v1963, 0
      %v2096 = vsel %vm2068, %v1970, 0
      %v2097 = vsel %vm2068, %v1977, 0
      %v2098 = vsel %vm2068, %v1984, 0
      %v2099 = vsel %vm2068, %v1991, 0
      %v2100 = vsel %vm2068, %v1998, 0
      %v2101 = vsel %vm2068, %v2005, 0
      %v2102 = vsel %vm2068, %v2012, 0
      %v2103 = vsel %vm2068, %v2019, 0
      %v2104 = vsel %vm2068, %v2026, 0
      %v2106 = vshrl.u32 %v2069, 16
      %v2108 = vshll.u32 %v2069, 16
      %v2110 = vrot.slane %v2108, 1
      %v2111 = vor.u32 %v2106, %v2110
      %v2113 = vshll.u32 %v2087, 16
      %v2115 = vrot.slane %v2113, 1
      %v2116 = vsel %vm633, %v2111, %v2115
      %v2118 = vshrl.u32 %v2070, 16
      %v2120 = vshll.u32 %v2070, 16
      %v2122 = vrot.slane %v2120, 1
      %v2123 = vor.u32 %v2118, %v2122
      %v2125 = vshll.u32 %v2088, 16
      %v2127 = vrot.slane %v2125, 1
      %v2128 = vsel %vm633, %v2123, %v2127
      %v2130 = vshrl.u32 %v2071, 16
      %v2132 = vshll.u32 %v2071, 16
      %v2134 = vrot.slane %v2132, 1
      %v2135 = vor.u32 %v2130, %v2134
      %v2137 = vshll.u32 %v2089, 16
      %v2139 = vrot.slane %v2137, 1
      %v2140 = vsel %vm633, %v2135, %v2139
      %v2142 = vshrl.u32 %v2072, 16
      %v2144 = vshll.u32 %v2072, 16
      %v2146 = vrot.slane %v2144, 1
      %v2147 = vor.u32 %v2142, %v2146
      %v2149 = vshll.u32 %v2090, 16
      %v2151 = vrot.slane %v2149, 1
      %v2152 = vsel %vm633, %v2147, %v2151
      %v2154 = vshrl.u32 %v2073, 16
      %v2156 = vshll.u32 %v2073, 16
      %v2158 = vrot.slane %v2156, 1
      %v2159 = vor.u32 %v2154, %v2158
      %v2161 = vshll.u32 %v2091, 16
      %v2163 = vrot.slane %v2161, 1
      %v2164 = vsel %vm633, %v2159, %v2163
      %v2166 = vshrl.u32 %v2074, 16
      %v2168 = vshll.u32 %v2074, 16
      %v2170 = vrot.slane %v2168, 1
      %v2171 = vor.u32 %v2166, %v2170
      %v2173 = vshll.u32 %v2092, 16
      %v2175 = vrot.slane %v2173, 1
      %v2176 = vsel %vm633, %v2171, %v2175
      %v2178 = vshrl.u32 %v2075, 16
      %v2180 = vshll.u32 %v2075, 16
      %v2182 = vrot.slane %v2180, 1
      %v2183 = vor.u32 %v2178, %v2182
      %v2185 = vshll.u32 %v2093, 16
      %v2187 = vrot.slane %v2185, 1
      %v2188 = vsel %vm633, %v2183, %v2187
      %v2190 = vshrl.u32 %v2076, 16
      %v2192 = vshll.u32 %v2076, 16
      %v2194 = vrot.slane %v2192, 1
      %v2195 = vor.u32 %v2190, %v2194
      %v2197 = vshll.u32 %v2094, 16
      %v2199 = vrot.slane %v2197, 1
      %v2200 = vsel %vm633, %v2195, %v2199
      %v2202 = vshrl.u32 %v2077, 16
      %v2204 = vshll.u32 %v2077, 16
      %v2206 = vrot.slane %v2204, 1
      %v2207 = vor.u32 %v2202, %v2206
      %v2209 = vshll.u32 %v2095, 16
      %v2211 = vrot.slane %v2209, 1
      %v2212 = vsel %vm633, %v2207, %v2211
      %v2214 = vshrl.u32 %v2078, 16
      %v2216 = vshll.u32 %v2078, 16
      %v2218 = vrot.slane %v2216, 1
      %v2219 = vor.u32 %v2214, %v2218
      %v2221 = vshll.u32 %v2096, 16
      %v2223 = vrot.slane %v2221, 1
      %v2224 = vsel %vm633, %v2219, %v2223
      %v2226 = vshrl.u32 %v2079, 16
      %v2228 = vshll.u32 %v2079, 16
      %v2230 = vrot.slane %v2228, 1
      %v2231 = vor.u32 %v2226, %v2230
      %v2233 = vshll.u32 %v2097, 16
      %v2235 = vrot.slane %v2233, 1
      %v2236 = vsel %vm633, %v2231, %v2235
      %v2238 = vshrl.u32 %v2080, 16
      %v2240 = vshll.u32 %v2080, 16
      %v2242 = vrot.slane %v2240, 1
      %v2243 = vor.u32 %v2238, %v2242
      %v2245 = vshll.u32 %v2098, 16
      %v2247 = vrot.slane %v2245, 1
      %v2248 = vsel %vm633, %v2243, %v2247
      %v2250 = vshrl.u32 %v2081, 16
      %v2252 = vshll.u32 %v2081, 16
      %v2254 = vrot.slane %v2252, 1
      %v2255 = vor.u32 %v2250, %v2254
      %v2257 = vshll.u32 %v2099, 16
      %v2259 = vrot.slane %v2257, 1
      %v2260 = vsel %vm633, %v2255, %v2259
      %v2262 = vshrl.u32 %v2082, 16
      %v2264 = vshll.u32 %v2082, 16
      %v2266 = vrot.slane %v2264, 1
      %v2267 = vor.u32 %v2262, %v2266
      %v2269 = vshll.u32 %v2100, 16
      %v2271 = vrot.slane %v2269, 1
      %v2272 = vsel %vm633, %v2267, %v2271
      %v2274 = vshrl.u32 %v2083, 16
      %v2276 = vshll.u32 %v2083, 16
      %v2278 = vrot.slane %v2276, 1
      %v2279 = vor.u32 %v2274, %v2278
      %v2281 = vshll.u32 %v2101, 16
      %v2283 = vrot.slane %v2281, 1
      %v2284 = vsel %vm633, %v2279, %v2283
      %v2286 = vshrl.u32 %v2084, 16
      %v2288 = vshll.u32 %v2084, 16
      %v2290 = vrot.slane %v2288, 1
      %v2291 = vor.u32 %v2286, %v2290
      %v2293 = vshll.u32 %v2102, 16
      %v2295 = vrot.slane %v2293, 1
      %v2296 = vsel %vm633, %v2291, %v2295
      %2297 = vrot.lane.b32.xlu0 %v2116, 8
      %v2298 = vpop.permute.xlu0 %2297
      %2299 = vrot.lane.b32.xlu0 %v2128, 8
      %v2300 = vpop.permute.xlu0 %2299
      %2301 = vrot.lane.b32.xlu0 %v2140, 8
      %v2302 = vpop.permute.xlu0 %2301
      %2303 = vrot.lane.b32.xlu0 %v2152, 8
      %v2304 = vpop.permute.xlu0 %2303
      %2305 = vrot.lane.b32.xlu0 %v2164, 8
      %v2306 = vpop.permute.xlu0 %2305
      %2307 = vrot.lane.b32.xlu0 %v2176, 8
      %v2308 = vpop.permute.xlu0 %2307
      %2309 = vrot.lane.b32.xlu0 %v2188, 8
      %v2310 = vpop.permute.xlu0 %2309
      %2311 = vrot.lane.b32.xlu0 %v2200, 8
      %v2312 = vpop.permute.xlu0 %2311
      %2313 = vrot.lane.b32.xlu0 %v2212, 8
      %v2314 = vpop.permute.xlu0 %2313
      %2315 = vrot.lane.b32.xlu0 %v2224, 8
      %v2316 = vpop.permute.xlu0 %2315
      %2317 = vrot.lane.b32.xlu0 %v2236, 8
      %v2318 = vpop.permute.xlu0 %2317
      %2319 = vrot.lane.b32.xlu0 %v2248, 8
      %v2320 = vpop.permute.xlu0 %2319
      %2321 = vrot.lane.b32.xlu0 %v2260, 8
      %v2322 = vpop.permute.xlu0 %2321
      %2323 = vrot.lane.b32.xlu0 %v2272, 8
      %v2324 = vpop.permute.xlu0 %2323
      %2325 = vrot.lane.b32.xlu0 %v2284, 8
      %v2326 = vpop.permute.xlu0 %2325
      %2327 = vrot.lane.b32.xlu0 %v2296, 8
      %v2328 = vpop.permute.xlu0 %2327
      %v2361 = vrot.slane %v2069, 1
      %v2362 = vrot.slane %v2087, 1
      %v2363 = vsel %vm886, %v2361, %v2362
      %v2364 = vrot.slane %v2070, 1
      %v2365 = vrot.slane %v2088, 1
      %v2366 = vsel %vm886, %v2364, %v2365
      %v2367 = vrot.slane %v2071, 1
      %v2368 = vrot.slane %v2089, 1
      %v2369 = vsel %vm886, %v2367, %v2368
      %v2370 = vrot.slane %v2072, 1
      %v2371 = vrot.slane %v2090, 1
      %v2372 = vsel %vm886, %v2370, %v2371
      %v2373 = vrot.slane %v2073, 1
      %v2374 = vrot.slane %v2091, 1
      %v2375 = vsel %vm886, %v2373, %v2374
      %v2376 = vrot.slane %v2074, 1
      %v2377 = vrot.slane %v2092, 1
      %v2378 = vsel %vm886, %v2376, %v2377
      %v2379 = vrot.slane %v2075, 1
      %v2380 = vrot.slane %v2093, 1
      %v2381 = vsel %vm886, %v2379, %v2380
      %v2382 = vrot.slane %v2076, 1
      %v2383 = vrot.slane %v2094, 1
      %v2384 = vsel %vm886, %v2382, %v2383
      %v2385 = vrot.slane %v2077, 1
      %v2386 = vrot.slane %v2095, 1
      %v2387 = vsel %vm886, %v2385, %v2386
      %v2388 = vrot.slane %v2078, 1
      %v2389 = vrot.slane %v2096, 1
      %v2390 = vsel %vm886, %v2388, %v2389
      %v2391 = vrot.slane %v2079, 1
      %v2392 = vrot.slane %v2097, 1
      %v2393 = vsel %vm886, %v2391, %v2392
      %v2394 = vrot.slane %v2080, 1
      %v2395 = vrot.slane %v2098, 1
      %v2396 = vsel %vm886, %v2394, %v2395
      %v2397 = vrot.slane %v2081, 1
      %v2398 = vrot.slane %v2099, 1
      %v2399 = vsel %vm886, %v2397, %v2398
      %v2400 = vrot.slane %v2082, 1
      %v2401 = vrot.slane %v2100, 1
      %v2402 = vsel %vm886, %v2400, %v2401
      %v2403 = vrot.slane %v2083, 1
      %v2404 = vrot.slane %v2101, 1
      %v2405 = vsel %vm886, %v2403, %v2404
      %v2406 = vrot.slane %v2084, 1
      %v2407 = vrot.slane %v2102, 1
      %v2408 = vsel %vm886, %v2406, %v2407
      %2409 = vrot.lane.b32.xlu0 %v2363, 16
      %v2410 = vpop.permute.xlu0 %2409
      %2411 = vrot.lane.b32.xlu0 %v2366, 16
      %v2412 = vpop.permute.xlu0 %2411
      %2413 = vrot.lane.b32.xlu0 %v2369, 16
      %v2414 = vpop.permute.xlu0 %2413
      %2415 = vrot.lane.b32.xlu0 %v2372, 16
      %v2416 = vpop.permute.xlu0 %2415
      %2417 = vrot.lane.b32.xlu0 %v2375, 16
      %v2418 = vpop.permute.xlu0 %2417
      %2419 = vrot.lane.b32.xlu0 %v2378, 16
      %v2420 = vpop.permute.xlu0 %2419
      %2421 = vrot.lane.b32.xlu0 %v2381, 16
      %v2422 = vpop.permute.xlu0 %2421
      %2423 = vrot.lane.b32.xlu0 %v2384, 16
      %v2424 = vpop.permute.xlu0 %2423
      %2425 = vrot.lane.b32.xlu0 %v2387, 16
      %v2426 = vpop.permute.xlu0 %2425
      %2427 = vrot.lane.b32.xlu0 %v2390, 16
      %v2428 = vpop.permute.xlu0 %2427
      %2429 = vrot.lane.b32.xlu0 %v2393, 16
      %v2430 = vpop.permute.xlu0 %2429
      %2431 = vrot.lane.b32.xlu0 %v2396, 16
      %v2432 = vpop.permute.xlu0 %2431
      %2433 = vrot.lane.b32.xlu0 %v2399, 16
      %v2434 = vpop.permute.xlu0 %2433
      %2435 = vrot.lane.b32.xlu0 %v2402, 16
      %v2436 = vpop.permute.xlu0 %2435
      %2437 = vrot.lane.b32.xlu0 %v2405, 16
      %v2438 = vpop.permute.xlu0 %2437
      %2439 = vrot.lane.b32.xlu0 %v2408, 16
      %v2440 = vpop.permute.xlu0 %2439
      %v2442 = vsel %vm1014, %v2069, %v2298
      %v2444 = vsel %vm1014, %v2070, %v2300
      %v2446 = vsel %vm1014, %v2071, %v2302
      %v2448 = vsel %vm1014, %v2072, %v2304
      %v2450 = vsel %vm1014, %v2073, %v2306
      %v2452 = vsel %vm1014, %v2074, %v2308
      %v2454 = vsel %vm1014, %v2075, %v2310
      %v2456 = vsel %vm1014, %v2076, %v2312
      %v2458 = vsel %vm1014, %v2077, %v2314
      %v2460 = vsel %vm1014, %v2078, %v2316
      %v2462 = vsel %vm1014, %v2079, %v2318
      %v2464 = vsel %vm1014, %v2080, %v2320
      %v2466 = vsel %vm1014, %v2081, %v2322
      %v2468 = vsel %vm1014, %v2082, %v2324
      %v2470 = vsel %vm1014, %v2083, %v2326
      %v2472 = vsel %vm1014, %v2084, %v2328
      %vm2473 = vcmask 130048
      %v2475 = vsel %vm2473, %v2442, %v2410
      %v2477 = vsel %vm2473, %v2444, %v2412
      %v2479 = vsel %vm2473, %v2446, %v2414
      %v2481 = vsel %vm2473, %v2448, %v2416
      %v2483 = vsel %vm2473, %v2450, %v2418
      %v2485 = vsel %vm2473, %v2452, %v2420
      %v2487 = vsel %vm2473, %v2454, %v2422
      %v2489 = vsel %vm2473, %v2456, %v2424
      %v2491 = vsel %vm2473, %v2458, %v2426
      %v2493 = vsel %vm2473, %v2460, %v2428
      %v2495 = vsel %vm2473, %v2462, %v2430
      %v2497 = vsel %vm2473, %v2464, %v2432
      %v2499 = vsel %vm2473, %v2466, %v2434
      %v2501 = vsel %vm2473, %v2468, %v2436
      %v2503 = vsel %vm2473, %v2470, %v2438
      %v2505 = vsel %vm2473, %v2472, %v2440
      %v2506 = vld [vmem:[%s5] sm:$0xf]
      %v2507 = vld [vmem:[%s5 + $0x4] sm:$0xf]
      %v2508 = vld [vmem:[%s5 + $0x8] sm:$0xf]
      %v2510 = vshrl.u32 %v2085, 16
      %v2512 = vshll.u32 %v2085, 16
      %v2514 = vrot.slane %v2512, 1
      %v2515 = vor.u32 %v2510, %v2514
      %v2517 = vshll.u32 %v2103, 16
      %v2519 = vrot.slane %v2517, 1
      %v2520 = vsel %vm633, %v2515, %v2519
      %2521 = vrot.lane.b32.xlu0 %v2520, 8
      %v2522 = vpop.permute.xlu0 %2521
      %v2525 = vrot.slane %v2085, 1
      %v2526 = vrot.slane %v2103, 1
      %v2527 = vsel %vm886, %v2525, %v2526
      %2528 = vrot.lane.b32.xlu0 %v2527, 16
      %v2529 = vpop.permute.xlu0 %2528
      %v2531 = vsel %vm1014, %v2085, %v2522
      %v2533 = vsel %vm2473, %v2531, %v2529
      %s2534 = scalar_lea.vmem %s5, 12
      %v2535 = vld [vmem:[%s2534] sm:$0xf]
      %v2536 = vld [vmem:[%s2534 + $0x4] sm:$0xf]
      %v2537 = vld [vmem:[%s2534 + $0x8] sm:$0xf]
      %v2541 = vunpack.c.l.b16 %v2535
      %v2542 = vunpack.c.l.b16 %v2536
      %v2543 = vunpack.c.l.b16 %v2537
      %v2544 = vpack.c.b16 %v2542, %v2541
      %v2545 = vpack.c.b16 %v2543, %v2543
      %vm2547 = vcmask 195584
      %v2548 = vsel %vm2547, %v2477, 0
      %v2550 = vsel %vm2547, %v2479, 0
      %v2552 = vsel %vm2547, %v2481, 0
      %v2554 = vsel %vm2547, %v2483, 0
      %v2556 = vsel %vm2547, %v2485, 0
      %v2558 = vsel %vm2547, %v2487, 0
      %v2560 = vsel %vm2547, %v2489, 0
      %v2562 = vsel %vm2547, %v2491, 0
      %v2564 = vsel %vm2547, %v2493, 0
      %v2566 = vsel %vm2547, %v2495, 0
      %v2568 = vsel %vm2547, %v2497, 0
      %v2570 = vsel %vm2547, %v2499, 0
      %v2572 = vsel %vm2547, %v2501, 0
      %v2574 = vsel %vm2547, %v2503, 0
      %v2576 = vsel %vm2547, %v2505, 0
      %v2578 = vsel %vm2547, %v2533, 0
      %vm2580 = vcmask 1043456
      %v2582 = vsel %vm2580, %v2545, 0
      %2584 = vmatprep.subr.bf16.mxu0 0
      %2585 = vmatpush1.bf16.msra.mxu0 %v2544
      %2586 = vmatprep.subr.bf16.mxu0 0
      %2587 = vmatpush1.bf16.msra.mxu0 %v2582
      %2588 = vmatprep.subr.bf16.mxu0 0
      %2589 = vmatpush1.bf16.msra.mxu0 0
      %2590 = vmatprep.subr.bf16.mxu0 0
      %2591 = vmatpush1.bf16.msra.mxu0 0
      %2592 = vmatprep.subr.bf16.mxu0 0
      %2593 = vmatpush1.bf16.msra.mxu0 0
      %2594 = vmatprep.subr.bf16.mxu0 0
      %2595 = vmatpush1.bf16.msra.mxu0 0
      %2596 = vmatprep.subr.bf16.mxu0 0
      %2597 = vmatpush1.bf16.msra.mxu0 0
      %2598 = vmatprep.subr.bf16.mxu0 0
      %2599 = vmatpush1.bf16.msra.mxu0 0
      %2600 = vmatprep.subr.bf16.mxu0 0
      %2601 = vmatpush1.bf16.msra.mxu0 0
      %2602 = vmatprep.subr.bf16.mxu0 0
      %2603 = vmatpush1.bf16.msra.mxu0 0
      %2604 = vmatprep.subr.bf16.mxu0 0
      %2605 = vmatpush1.bf16.msra.mxu0 0
      %2606 = vmatprep.subr.bf16.mxu0 0
      %2607 = vmatpush1.bf16.msra.mxu0 0
      %2608 = vmatprep.subr.bf16.mxu0 0
      %2609 = vmatpush1.bf16.msra.mxu0 0
      %2610 = vmatprep.subr.bf16.mxu0 0
      %2611 = vmatpush1.bf16.msra.mxu0 0
      %2612 = vmatprep.subr.bf16.mxu0 0
      %2613 = vmatpush1.bf16.msra.mxu0 0
      %2614 = vmatprep.subr.bf16.mxu0 0
      %2615 = vmatpush1.bf16.msra.mxu0 0
      %2616 = vmatprep.mubr.bf16.mxu0 0
      %2617 = vmatmul.mubr.bf16.gmra.mrb[0].mxu0 %v2548
      %v2618 = vpop.f32.mrb[0].mxu0
      %v2619 = vadd.f32 0.0, %v2618
      %v2620 = vpop.f32.mrb[0].mxu0
      %v2621 = vpop.f32.mrb[0].mxu0
      %v2622 = vadd.f32 0.0, %v2621
      %v2623 = vpop.f32.mrb[0].mxu0
      %2624 = vmatprep.mubr.bf16.mxu0 0
      %2625 = vmatmul.mubr.bf16.gmra.mrb[0].mxu0 %v2550
      %v2626 = vpop.f32.mrb[0].mxu0
      %v2627 = vadd.f32 0.0, %v2626
      %v2628 = vpop.f32.mrb[0].mxu0
      %v2629 = vpop.f32.mrb[0].mxu0
      %v2630 = vadd.f32 0.0, %v2629
      %v2631 = vpop.f32.mrb[0].mxu0
      %2632 = vmatprep.mubr.bf16.mxu0 0
      %2633 = vmatmul.mubr.bf16.gmra.mrb[0].mxu0 %v2552
      %v2634 = vpop.f32.mrb[0].mxu0
      %v2635 = vadd.f32 0.0, %v2634
      %v2636 = vpop.f32.mrb[0].mxu0
      %v2637 = vpop.f32.mrb[0].mxu0
      %v2638 = vadd.f32 0.0, %v2637
      %v2639 = vpop.f32.mrb[0].mxu0
      %2640 = vmatprep.mubr.bf16.mxu0 0
      %2641 = vmatmul.mubr.bf16.gmra.mrb[0].mxu0 %v2554
      %v2642 = vpop.f32.mrb[0].mxu0
      %v2643 = vadd.f32 0.0, %v2642
      %v2644 = vpop.f32.mrb[0].mxu0
      %v2645 = vpop.f32.mrb[0].mxu0
      %v2646 = vadd.f32 0.0, %v2645
      %v2647 = vpop.f32.mrb[0].mxu0
      %2648 = vmatprep.mubr.bf16.mxu0 0
      %2649 = vmatmul.mubr.bf16.gmra.mrb[0].mxu0 %v2556
      %v2650 = vpop.f32.mrb[0].mxu0
      %v2651 = vadd.f32 0.0, %v2650
      %v2652 = vpop.f32.mrb[0].mxu0
      %v2653 = vpop.f32.mrb[0].mxu0
      %v2654 = vadd.f32 0.0, %v2653
      %v2655 = vpop.f32.mrb[0].mxu0
      %2656 = vmatprep.mubr.bf16.mxu0 0
      %2657 = vmatmul.mubr.bf16.gmra.mrb[0].mxu0 %v2558
      %v2658 = vpop.f32.mrb[0].mxu0
      %v2659 = vadd.f32 0.0, %v2658
      %v2660 = vpop.f32.mrb[0].mxu0
      %v2661 = vpop.f32.mrb[0].mxu0
      %v2662 = vadd.f32 0.0, %v2661
      %v2663 = vpop.f32.mrb[0].mxu0
      %2664 = vmatprep.mubr.bf16.mxu0 0
      %2665 = vmatmul.mubr.bf16.gmra.mrb[0].mxu0 %v2560
      %v2666 = vpop.f32.mrb[0].mxu0
      %v2667 = vadd.f32 0.0, %v2666
      %v2668 = vpop.f32.mrb[0].mxu0
      %v2669 = vpop.f32.mrb[0].mxu0
      %v2670 = vadd.f32 0.0, %v2669
      %v2671 = vpop.f32.mrb[0].mxu0
      %2672 = vmatprep.mubr.bf16.mxu0 0
      %2673 = vmatmul.mubr.bf16.gmra.mrb[0].mxu0 %v2562
      %v2674 = vpop.f32.mrb[0].mxu0
      %v2675 = vadd.f32 0.0, %v2674
      %v2676 = vpop.f32.mrb[0].mxu0
      %v2677 = vpop.f32.mrb[0].mxu0
      %v2678 = vadd.f32 0.0, %v2677
      %v2679 = vpop.f32.mrb[0].mxu0
      %2680 = vmatprep.mubr.bf16.mxu0 0
      %2681 = vmatmul.mubr.bf16.gmra.mrb[0].mxu0 %v2564
      %v2682 = vpop.f32.mrb[0].mxu0
      %v2683 = vadd.f32 0.0, %v2682
      %v2684 = vpop.f32.mrb[0].mxu0
      %v2685 = vpop.f32.mrb[0].mxu0
      %v2686 = vadd.f32 0.0, %v2685
      %v2687 = vpop.f32.mrb[0].mxu0
      %2688 = vmatprep.mubr.bf16.mxu0 0
      %2689 = vmatmul.mubr.bf16.gmra.mrb[0].mxu0 %v2566
      %v2690 = vpop.f32.mrb[0].mxu0
      %v2691 = vadd.f32 0.0, %v2690
      %v2692 = vpop.f32.mrb[0].mxu0
      %v2693 = vpop.f32.mrb[0].mxu0
      %v2694 = vadd.f32 0.0, %v2693
      %v2695 = vpop.f32.mrb[0].mxu0
      %2696 = vmatprep.mubr.bf16.mxu0 0
      %2697 = vmatmul.mubr.bf16.gmra.mrb[0].mxu0 %v2568
      %v2698 = vpop.f32.mrb[0].mxu0
      %v2699 = vadd.f32 0.0, %v2698
      %v2700 = vpop.f32.mrb[0].mxu0
      %v2701 = vpop.f32.mrb[0].mxu0
      %v2702 = vadd.f32 0.0, %v2701
      %v2703 = vpop.f32.mrb[0].mxu0
      %2704 = vmatprep.mubr.bf16.mxu0 0
      %2705 = vmatmul.mubr.bf16.gmra.mrb[0].mxu0 %v2570
      %v2706 = vpop.f32.mrb[0].mxu0
      %v2707 = vadd.f32 0.0, %v2706
      %v2708 = vpop.f32.mrb[0].mxu0
      %v2709 = vpop.f32.mrb[0].mxu0
      %v2710 = vadd.f32 0.0, %v2709
      %v2711 = vpop.f32.mrb[0].mxu0
      %2712 = vmatprep.mubr.bf16.mxu0 0
      %2713 = vmatmul.mubr.bf16.gmra.mrb[0].mxu0 %v2572
      %v2714 = vpop.f32.mrb[0].mxu0
      %v2715 = vadd.f32 0.0, %v2714
      %v2716 = vpop.f32.mrb[0].mxu0
      %v2717 = vpop.f32.mrb[0].mxu0
      %v2718 = vadd.f32 0.0, %v2717
      %v2719 = vpop.f32.mrb[0].mxu0
      %2720 = vmatprep.mubr.bf16.mxu0 0
      %2721 = vmatmul.mubr.bf16.gmra.mrb[0].mxu0 %v2574
      %v2722 = vpop.f32.mrb[0].mxu0
      %v2723 = vadd.f32 0.0, %v2722
      %v2724 = vpop.f32.mrb[0].mxu0
      %v2725 = vpop.f32.mrb[0].mxu0
      %v2726 = vadd.f32 0.0, %v2725
      %v2727 = vpop.f32.mrb[0].mxu0
      %2728 = vmatprep.mubr.bf16.mxu0 0
      %2729 = vmatmul.mubr.bf16.gmra.mrb[0].mxu0 %v2576
      %v2730 = vpop.f32.mrb[0].mxu0
      %v2731 = vadd.f32 0.0, %v2730
      %v2732 = vpop.f32.mrb[0].mxu0
      %v2733 = vpop.f32.mrb[0].mxu0
      %v2734 = vadd.f32 0.0, %v2733
      %v2735 = vpop.f32.mrb[0].mxu0
      %2736 = vmatprep.mubr.bf16.mxu0 0
      %2737 = vmatmul.mubr.bf16.gmra.mrb[0].mxu0 %v2578
      %v2738 = vpop.f32.mrb[0].mxu0
      %v2739 = vadd.f32 0.0, %v2738
      %v2740 = vpop.f32.mrb[0].mxu0
      %v2741 = vpop.f32.mrb[0].mxu0
      %v2742 = vadd.f32 0.0, %v2741
      %v2743 = vpop.f32.mrb[0].mxu0
      %2744 = vdwg.mxu0
      %v2748 = vunpack.c.l.b16 %v2506
      %v2749 = vunpack.c.l.b16 %v2507
      %v2750 = vunpack.c.l.b16 %v2508
      %v2751 = vpack.c.b16 %v2749, %v2748
      %v2752 = vpack.c.b16 %v2750, %v2750
      %v2754 = vsel %vm2547, %v2475, 0
      %v2757 = vsel %vm2580, %v2752, 0
      %2759 = vmatprep.subr.bf16.mxu0 0
      %2760 = vmatpush1.bf16.msra.mxu0 %v2751
      %2761 = vmatprep.subr.bf16.mxu0 0
      %2762 = vmatpush1.bf16.msra.mxu0 %v2757
      %2763 = vmatprep.subr.bf16.mxu0 0
      %2764 = vmatpush1.bf16.msra.mxu0 0
      %2765 = vmatprep.subr.bf16.mxu0 0
      %2766 = vmatpush1.bf16.msra.mxu0 0
      %2767 = vmatprep.subr.bf16.mxu0 0
      %2768 = vmatpush1.bf16.msra.mxu0 0
      %2769 = vmatprep.subr.bf16.mxu0 0
      %2770 = vmatpush1.bf16.msra.mxu0 0
      %2771 = vmatprep.subr.bf16.mxu0 0
      %2772 = vmatpush1.bf16.msra.mxu0 0
      %2773 = vmatprep.subr.bf16.mxu0 0
      %2774 = vmatpush1.bf16.msra.mxu0 0
      %2775 = vmatprep.subr.bf16.mxu0 0
      %2776 = vmatpush1.bf16.msra.mxu0 0
      %2777 = vmatprep.subr.bf16.mxu0 0
      %2778 = vmatpush1.bf16.msra.mxu0 0
      %2779 = vmatprep.subr.bf16.mxu0 0
      %2780 = vmatpush1.bf16.msra.mxu0 0
      %2781 = vmatprep.subr.bf16.mxu0 0
      %2782 = vmatpush1.bf16.msra.mxu0 0
      %2783 = vmatprep.subr.bf16.mxu0 0
      %2784 = vmatpush1.bf16.msra.mxu0 0
      %2785 = vmatprep.subr.bf16.mxu0 0
      %2786 = vmatpush1.bf16.msra.mxu0 0
      %2787 = vmatprep.subr.bf16.mxu0 0
      %2788 = vmatpush1.bf16.msra.mxu0 0
      %2789 = vmatprep.subr.bf16.mxu0 0
      %2790 = vmatpush1.bf16.msra.mxu0 0
      %2791 = vmatprep.mubr.bf16.mxu0 0
      %2792 = vmatmul.mubr.bf16.gmra.mrb[0].mxu0 %v2754
      %v2793 = vpop.f32.mrb[0].mxu0
      %v2794 = vadd.f32 %v2619, %v2793
      %v2795 = vpop.f32.mrb[0].mxu0
      %v2796 = vpop.f32.mrb[0].mxu0
      %v2797 = vadd.f32 %v2622, %v2796
      %v2798 = vpop.f32.mrb[0].mxu0
      %2799 = vmatprep.mubr.bf16.mxu0 0
      %2800 = vmatmul.mubr.bf16.gmra.mrb[0].mxu0 %v2548
      %v2801 = vpop.f32.mrb[0].mxu0
      %v2802 = vadd.f32 %v2627, %v2801
      %v2803 = vpop.f32.mrb[0].mxu0
      %v2804 = vpop.f32.mrb[0].mxu0
      %v2805 = vadd.f32 %v2630, %v2804
      %v2806 = vpop.f32.mrb[0].mxu0
      %2807 = vmatprep.mubr.bf16.mxu0 0
      %2808 = vmatmul.mubr.bf16.gmra.mrb[0].mxu0 %v2550
      %v2809 = vpop.f32.mrb[0].mxu0
      %v2810 = vadd.f32 %v2635, %v2809
      %v2811 = vpop.f32.mrb[0].mxu0
      %v2812 = vpop.f32.mrb[0].mxu0
      %v2813 = vadd.f32 %v2638, %v2812
      %v2814 = vpop.f32.mrb[0].mxu0
      %2815 = vmatprep.mubr.bf16.mxu0 0
      %2816 = vmatmul.mubr.bf16.gmra.mrb[0].mxu0 %v2552
      %v2817 = vpop.f32.mrb[0].mxu0
      %v2818 = vadd.f32 %v2643, %v2817
      %v2819 = vpop.f32.mrb[0].mxu0
      %v2820 = vpop.f32.mrb[0].mxu0
      %v2821 = vadd.f32 %v2646, %v2820
      %v2822 = vpop.f32.mrb[0].mxu0
      %2823 = vmatprep.mubr.bf16.mxu0 0
      %2824 = vmatmul.mubr.bf16.gmra.mrb[0].mxu0 %v2554
      %v2825 = vpop.f32.mrb[0].mxu0
      %v2826 = vadd.f32 %v2651, %v2825
      %v2827 = vpop.f32.mrb[0].mxu0
      %v2828 = vpop.f32.mrb[0].mxu0
      %v2829 = vadd.f32 %v2654, %v2828
      %v2830 = vpop.f32.mrb[0].mxu0
      %2831 = vmatprep.mubr.bf16.mxu0 0
      %2832 = vmatmul.mubr.bf16.gmra.mrb[0].mxu0 %v2556
      %v2833 = vpop.f32.mrb[0].mxu0
      %v2834 = vadd.f32 %v2659, %v2833
      %v2835 = vpop.f32.mrb[0].mxu0
      %v2836 = vpop.f32.mrb[0].mxu0
      %v2837 = vadd.f32 %v2662, %v2836
      %v2838 = vpop.f32.mrb[0].mxu0
      %2839 = vmatprep.mubr.bf16.mxu0 0
      %2840 = vmatmul.mubr.bf16.gmra.mrb[0].mxu0 %v2558
      %v2841 = vpop.f32.mrb[0].mxu0
      %v2842 = vadd.f32 %v2667, %v2841
      %v2843 = vpop.f32.mrb[0].mxu0
      %v2844 = vpop.f32.mrb[0].mxu0
      %v2845 = vadd.f32 %v2670, %v2844
      %v2846 = vpop.f32.mrb[0].mxu0
      %2847 = vmatprep.mubr.bf16.mxu0 0
      %2848 = vmatmul.mubr.bf16.gmra.mrb[0].mxu0 %v2560
      %v2849 = vpop.f32.mrb[0].mxu0
      %v2850 = vadd.f32 %v2675, %v2849
      %v2851 = vpop.f32.mrb[0].mxu0
      %v2852 = vpop.f32.mrb[0].mxu0
      %v2853 = vadd.f32 %v2678, %v2852
      %v2854 = vpop.f32.mrb[0].mxu0
      %2855 = vmatprep.mubr.bf16.mxu0 0
      %2856 = vmatmul.mubr.bf16.gmra.mrb[0].mxu0 %v2562
      %v2857 = vpop.f32.mrb[0].mxu0
      %v2858 = vadd.f32 %v2683, %v2857
      %v2859 = vpop.f32.mrb[0].mxu0
      %v2860 = vpop.f32.mrb[0].mxu0
      %v2861 = vadd.f32 %v2686, %v2860
      %v2862 = vpop.f32.mrb[0].mxu0
      %2863 = vmatprep.mubr.bf16.mxu0 0
      %2864 = vmatmul.mubr.bf16.gmra.mrb[0].mxu0 %v2564
      %v2865 = vpop.f32.mrb[0].mxu0
      %v2866 = vadd.f32 %v2691, %v2865
      %v2867 = vpop.f32.mrb[0].mxu0
      %v2868 = vpop.f32.mrb[0].mxu0
      %v2869 = vadd.f32 %v2694, %v2868
      %v2870 = vpop.f32.mrb[0].mxu0
      %2871 = vmatprep.mubr.bf16.mxu0 0
      %2872 = vmatmul.mubr.bf16.gmra.mrb[0].mxu0 %v2566
      %v2873 = vpop.f32.mrb[0].mxu0
      %v2874 = vadd.f32 %v2699, %v2873
      %v2875 = vpop.f32.mrb[0].mxu0
      %v2876 = vpop.f32.mrb[0].mxu0
      %v2877 = vadd.f32 %v2702, %v2876
      %v2878 = vpop.f32.mrb[0].mxu0
      %2879 = vmatprep.mubr.bf16.mxu0 0
      %2880 = vmatmul.mubr.bf16.gmra.mrb[0].mxu0 %v2568
      %v2881 = vpop.f32.mrb[0].mxu0
      %v2882 = vadd.f32 %v2707, %v2881
      %v2883 = vpop.f32.mrb[0].mxu0
      %v2884 = vpop.f32.mrb[0].mxu0
      %v2885 = vadd.f32 %v2710, %v2884
      %v2886 = vpop.f32.mrb[0].mxu0
      %2887 = vmatprep.mubr.bf16.mxu0 0
      %2888 = vmatmul.mubr.bf16.gmra.mrb[0].mxu0 %v2570
      %v2889 = vpop.f32.mrb[0].mxu0
      %v2890 = vadd.f32 %v2715, %v2889
      %v2891 = vpop.f32.mrb[0].mxu0
      %v2892 = vpop.f32.mrb[0].mxu0
      %v2893 = vadd.f32 %v2718, %v2892
      %v2894 = vpop.f32.mrb[0].mxu0
      %2895 = vmatprep.mubr.bf16.mxu0 0
      %2896 = vmatmul.mubr.bf16.gmra.mrb[0].mxu0 %v2572
      %v2897 = vpop.f32.mrb[0].mxu0
      %v2898 = vadd.f32 %v2723, %v2897
      %v2899 = vpop.f32.mrb[0].mxu0
      %v2900 = vpop.f32.mrb[0].mxu0
      %v2901 = vadd.f32 %v2726, %v2900
      %v2902 = vpop.f32.mrb[0].mxu0
      %2903 = vmatprep.mubr.bf16.mxu0 0
      %2904 = vmatmul.mubr.bf16.gmra.mrb[0].mxu0 %v2574
      %v2905 = vpop.f32.mrb[0].mxu0
      %v2906 = vadd.f32 %v2731, %v2905
      %v2907 = vpop.f32.mrb[0].mxu0
      %v2908 = vpop.f32.mrb[0].mxu0
      %v2909 = vadd.f32 %v2734, %v2908
      %v2910 = vpop.f32.mrb[0].mxu0
      %2911 = vmatprep.mubr.bf16.mxu0 0
      %2912 = vmatmul.mubr.bf16.gmra.mrb[0].mxu0 %v2576
      %v2913 = vpop.f32.mrb[0].mxu0
      %v2914 = vadd.f32 %v2739, %v2913
      %v2915 = vpop.f32.mrb[0].mxu0
      %v2916 = vpop.f32.mrb[0].mxu0
      %v2917 = vadd.f32 %v2742, %v2916
      %v2918 = vpop.f32.mrb[0].mxu0
      %2919 = vdwg.mxu0
      %v2921 = vshrl.u32 %v2086, 16
      %v2923 = vshll.u32 %v2086, 16
      %v2925 = vrot.slane %v2923, 1
      %v2926 = vor.u32 %v2921, %v2925
      %v2928 = vshll.u32 %v2104, 16
      %v2930 = vrot.slane %v2928, 1
      %v2931 = vsel %vm633, %v2926, %v2930
      %2932 = vrot.lane.b32.xlu0 %v2931, 8
      %v2933 = vpop.permute.xlu0 %2932
      %v2936 = vrot.slane %v2086, 1
      %v2937 = vrot.slane %v2104, 1
      %v2938 = vsel %vm886, %v2936, %v2937
      %2939 = vrot.lane.b32.xlu0 %v2938, 16
      %v2940 = vpop.permute.xlu0 %2939
      %v2942 = vsel %vm1014, %v2086, %v2933
      %v2944 = vsel %vm2473, %v2942, %v2940
      %s2945 = scalar_lea.vmem %s5, 24
      %v2946 = vld [vmem:[%s2945] sm:$0xf]
      %v2947 = vld [vmem:[%s2945 + $0x4] sm:$0xf]
      %v2948 = vld [vmem:[%s2945 + $0x8] sm:$0xf]
      %v2952 = vunpack.c.l.b16 %v2946
      %v2953 = vunpack.c.l.b16 %v2947
      %v2954 = vunpack.c.l.b16 %v2948
      %v2955 = vpack.c.b16 %v2953, %v2952
      %v2956 = vpack.c.b16 %v2954, %v2954
      %v2958 = vsel %vm2547, %v2944, 0
      %v2961 = vsel %vm2580, %v2956, 0
      %2963 = vmatprep.subr.bf16.mxu0 0
      %2964 = vmatpush1.bf16.msra.mxu0 %v2955
      %2965 = vmatprep.subr.bf16.mxu0 0
      %2966 = vmatpush1.bf16.msra.mxu0 %v2961
      %2967 = vmatprep.subr.bf16.mxu0 0
      %2968 = vmatpush1.bf16.msra.mxu0 0
      %2969 = vmatprep.subr.bf16.mxu0 0
      %2970 = vmatpush1.bf16.msra.mxu0 0
      %2971 = vmatprep.subr.bf16.mxu0 0
      %2972 = vmatpush1.bf16.msra.mxu0 0
      %2973 = vmatprep.subr.bf16.mxu0 0
      %2974 = vmatpush1.bf16.msra.mxu0 0
      %2975 = vmatprep.subr.bf16.mxu0 0
      %2976 = vmatpush1.bf16.msra.mxu0 0
      %2977 = vmatprep.subr.bf16.mxu0 0
      %2978 = vmatpush1.bf16.msra.mxu0 0
      %2979 = vmatprep.subr.bf16.mxu0 0
      %2980 = vmatpush1.bf16.msra.mxu0 0
      %2981 = vmatprep.subr.bf16.mxu0 0
      %2982 = vmatpush1.bf16.msra.mxu0 0
      %2983 = vmatprep.subr.bf16.mxu0 0
      %2984 = vmatpush1.bf16.msra.mxu0 0
      %2985 = vmatprep.subr.bf16.mxu0 0
      %2986 = vmatpush1.bf16.msra.mxu0 0
      %2987 = vmatprep.subr.bf16.mxu0 0
      %2988 = vmatpush1.bf16.msra.mxu0 0
      %2989 = vmatprep.subr.bf16.mxu0 0
      %2990 = vmatpush1.bf16.msra.mxu0 0
      %2991 = vmatprep.subr.bf16.mxu0 0
      %2992 = vmatpush1.bf16.msra.mxu0 0
      %2993 = vmatprep.subr.bf16.mxu0 0
      %2994 = vmatpush1.bf16.msra.mxu0 0
      %2995 = vmatprep.mubr.bf16.mxu0 0
      %2996 = vmatmul.mubr.bf16.gmra.mrb[0].mxu0 %v2550
      %v2997 = vpop.f32.mrb[0].mxu0
      %v2998 = vadd.f32 0.0, %v2997
      %v2999 = vpop.f32.mrb[0].mxu0
      %v3000 = vpop.f32.mrb[0].mxu0
      %v3001 = vadd.f32 0.0, %v3000
      %v3002 = vpop.f32.mrb[0].mxu0
      %3003 = vmatprep.mubr.bf16.mxu0 0
      %3004 = vmatmul.mubr.bf16.gmra.mrb[0].mxu0 %v2552
      %v3005 = vpop.f32.mrb[0].mxu0
      %v3006 = vadd.f32 0.0, %v3005
      %v3007 = vpop.f32.mrb[0].mxu0
      %v3008 = vpop.f32.mrb[0].mxu0
      %v3009 = vadd.f32 0.0, %v3008
      %v3010 = vpop.f32.mrb[0].mxu0
      %3011 = vmatprep.mubr.bf16.mxu0 0
      %3012 = vmatmul.mubr.bf16.gmra.mrb[0].mxu0 %v2554
      %v3013 = vpop.f32.mrb[0].mxu0
      %v3014 = vadd.f32 0.0, %v3013
      %v3015 = vpop.f32.mrb[0].mxu0
      %v3016 = vpop.f32.mrb[0].mxu0
      %v3017 = vadd.f32 0.0, %v3016
      %v3018 = vpop.f32.mrb[0].mxu0
      %3019 = vmatprep.mubr.bf16.mxu0 0
      %3020 = vmatmul.mubr.bf16.gmra.mrb[0].mxu0 %v2556
      %v3021 = vpop.f32.mrb[0].mxu0
      %v3022 = vadd.f32 0.0, %v3021
      %v3023 = vpop.f32.mrb[0].mxu0
      %v3024 = vpop.f32.mrb[0].mxu0
      %v3025 = vadd.f32 0.0, %v3024
      %v3026 = vpop.f32.mrb[0].mxu0
      %3027 = vmatprep.mubr.bf16.mxu0 0
      %3028 = vmatmul.mubr.bf16.gmra.mrb[0].mxu0 %v2558
      %v3029 = vpop.f32.mrb[0].mxu0
      %v3030 = vadd.f32 0.0, %v3029
      %v3031 = vpop.f32.mrb[0].mxu0
      %v3032 = vpop.f32.mrb[0].mxu0
      %v3033 = vadd.f32 0.0, %v3032
      %v3034 = vpop.f32.mrb[0].mxu0
      %3035 = vmatprep.mubr.bf16.mxu0 0
      %3036 = vmatmul.mubr.bf16.gmra.mrb[0].mxu0 %v2560
      %v3037 = vpop.f32.mrb[0].mxu0
      %v3038 = vadd.f32 0.0, %v3037
      %v3039 = vpop.f32.mrb[0].mxu0
      %v3040 = vpop.f32.mrb[0].mxu0
      %v3041 = vadd.f32 0.0, %v3040
      %v3042 = vpop.f32.mrb[0].mxu0
      %3043 = vmatprep.mubr.bf16.mxu0 0
      %3044 = vmatmul.mubr.bf16.gmra.mrb[0].mxu0 %v2562
      %v3045 = vpop.f32.mrb[0].mxu0
      %v3046 = vadd.f32 0.0, %v3045
      %v3047 = vpop.f32.mrb[0].mxu0
      %v3048 = vpop.f32.mrb[0].mxu0
      %v3049 = vadd.f32 0.0, %v3048
      %v3050 = vpop.f32.mrb[0].mxu0
      %3051 = vmatprep.mubr.bf16.mxu0 0
      %3052 = vmatmul.mubr.bf16.gmra.mrb[0].mxu0 %v2564
      %v3053 = vpop.f32.mrb[0].mxu0
      %v3054 = vadd.f32 0.0, %v3053
      %v3055 = vpop.f32.mrb[0].mxu0
      %v3056 = vpop.f32.mrb[0].mxu0
      %v3057 = vadd.f32 0.0, %v3056
      %v3058 = vpop.f32.mrb[0].mxu0
      %3059 = vmatprep.mubr.bf16.mxu0 0
      %3060 = vmatmul.mubr.bf16.gmra.mrb[0].mxu0 %v2566
      %v3061 = vpop.f32.mrb[0].mxu0
      %v3062 = vadd.f32 0.0, %v3061
      %v3063 = vpop.f32.mrb[0].mxu0
      %v3064 = vpop.f32.mrb[0].mxu0
      %v3065 = vadd.f32 0.0, %v3064
      %v3066 = vpop.f32.mrb[0].mxu0
      %3067 = vmatprep.mubr.bf16.mxu0 0
      %3068 = vmatmul.mubr.bf16.gmra.mrb[0].mxu0 %v2568
      %v3069 = vpop.f32.mrb[0].mxu0
      %v3070 = vadd.f32 0.0, %v3069
      %v3071 = vpop.f32.mrb[0].mxu0
      %v3072 = vpop.f32.mrb[0].mxu0
      %v3073 = vadd.f32 0.0, %v3072
      %v3074 = vpop.f32.mrb[0].mxu0
      %3075 = vmatprep.mubr.bf16.mxu0 0
      %3076 = vmatmul.mubr.bf16.gmra.mrb[0].mxu0 %v2570
      %v3077 = vpop.f32.mrb[0].mxu0
      %v3078 = vadd.f32 0.0, %v3077
      %v3079 = vpop.f32.mrb[0].mxu0
      %v3080 = vpop.f32.mrb[0].mxu0
      %v3081 = vadd.f32 0.0, %v3080
      %v3082 = vpop.f32.mrb[0].mxu0
      %3083 = vmatprep.mubr.bf16.mxu0 0
      %3084 = vmatmul.mubr.bf16.gmra.mrb[0].mxu0 %v2572
      %v3085 = vpop.f32.mrb[0].mxu0
      %v3086 = vadd.f32 0.0, %v3085
      %v3087 = vpop.f32.mrb[0].mxu0
      %v3088 = vpop.f32.mrb[0].mxu0
      %v3089 = vadd.f32 0.0, %v3088
      %v3090 = vpop.f32.mrb[0].mxu0
      %3091 = vmatprep.mubr.bf16.mxu0 0
      %3092 = vmatmul.mubr.bf16.gmra.mrb[0].mxu0 %v2574
      %v3093 = vpop.f32.mrb[0].mxu0
      %v3094 = vadd.f32 0.0, %v3093
      %v3095 = vpop.f32.mrb[0].mxu0
      %v3096 = vpop.f32.mrb[0].mxu0
      %v3097 = vadd.f32 0.0, %v3096
      %v3098 = vpop.f32.mrb[0].mxu0
      %3099 = vmatprep.mubr.bf16.mxu0 0
      %3100 = vmatmul.mubr.bf16.gmra.mrb[0].mxu0 %v2576
      %v3101 = vpop.f32.mrb[0].mxu0
      %v3102 = vadd.f32 0.0, %v3101
      %v3103 = vpop.f32.mrb[0].mxu0
      %v3104 = vpop.f32.mrb[0].mxu0
      %v3105 = vadd.f32 0.0, %v3104
      %v3106 = vpop.f32.mrb[0].mxu0
      %3107 = vmatprep.mubr.bf16.mxu0 0
      %3108 = vmatmul.mubr.bf16.gmra.mrb[0].mxu0 %v2578
      %v3109 = vpop.f32.mrb[0].mxu0
      %v3110 = vadd.f32 0.0, %v3109
      %v3111 = vpop.f32.mrb[0].mxu0
      %v3112 = vpop.f32.mrb[0].mxu0
      %v3113 = vadd.f32 0.0, %v3112
      %v3114 = vpop.f32.mrb[0].mxu0
      %3115 = vmatprep.mubr.bf16.mxu0 0
      %3116 = vmatmul.mubr.bf16.gmra.mrb[0].mxu0 %v2958
      %v3117 = vpop.f32.mrb[0].mxu0
      %v3118 = vadd.f32 0.0, %v3117
      %v3119 = vpop.f32.mrb[0].mxu0
      %v3120 = vpop.f32.mrb[0].mxu0
      %v3121 = vadd.f32 0.0, %v3120
      %v3122 = vpop.f32.mrb[0].mxu0
      %3123 = vdwg.mxu0
      %v3124 = vadd.f32 %v2794, %v2998
      %v3125 = vadd.f32 %v2797, %v3001
      %v3126 = vadd.f32 %v2802, %v3006
      %v3127 = vadd.f32 %v2805, %v3009
      %v3128 = vadd.f32 %v2810, %v3014
      %v3129 = vadd.f32 %v2813, %v3017
      %v3130 = vadd.f32 %v2818, %v3022
      %v3131 = vadd.f32 %v2821, %v3025
      %v3132 = vadd.f32 %v2826, %v3030
      %v3133 = vadd.f32 %v2829, %v3033
      %v3134 = vadd.f32 %v2834, %v3038
      %v3135 = vadd.f32 %v2837, %v3041
      %v3136 = vadd.f32 %v2842, %v3046
      %v3137 = vadd.f32 %v2845, %v3049
      %v3138 = vadd.f32 %v2850, %v3054
      %v3139 = vadd.f32 %v2853, %v3057
      %v3140 = vadd.f32 %v2858, %v3062
      %v3141 = vadd.f32 %v2861, %v3065
      %v3142 = vadd.f32 %v2866, %v3070
      %v3143 = vadd.f32 %v2869, %v3073
      %v3144 = vadd.f32 %v2874, %v3078
      %v3145 = vadd.f32 %v2877, %v3081
      %v3146 = vadd.f32 %v2882, %v3086
      %v3147 = vadd.f32 %v2885, %v3089
      %v3148 = vadd.f32 %v2890, %v3094
      %v3149 = vadd.f32 %v2893, %v3097
      %v3150 = vadd.f32 %v2898, %v3102
      %v3151 = vadd.f32 %v2901, %v3105
      %v3152 = vadd.f32 %v2906, %v3110
      %v3153 = vadd.f32 %v2909, %v3113
      %v3154 = vadd.f32 %v2914, %v3118
      %v3155 = vadd.f32 %v2917, %v3121
      %v3156 = vld [vmem:[%s6] sm:$0x1]
      %v3158 = vlaneseq
      %v3159 = vshrl.u32 %v3158, 7
      %v3160 = vsub.s32 0, %v3159
      %v3161 = vrot.slane %v3156, %v3160
      %v3163 = vmul.f32 %v3124, %v3161
      %v3164 = vmul.f32 %v3125, %v3161
      %v3165 = vmul.f32 %v3126, %v3161
      %v3166 = vmul.f32 %v3127, %v3161
      %v3167 = vmul.f32 %v3128, %v3161
      %v3168 = vmul.f32 %v3129, %v3161
      %v3169 = vmul.f32 %v3130, %v3161
      %v3170 = vmul.f32 %v3131, %v3161
      %v3171 = vmul.f32 %v3132, %v3161
      %v3172 = vmul.f32 %v3133, %v3161
      %v3173 = vmul.f32 %v3134, %v3161
      %v3174 = vmul.f32 %v3135, %v3161
      %v3175 = vmul.f32 %v3136, %v3161
      %v3176 = vmul.f32 %v3137, %v3161
      %v3177 = vmul.f32 %v3138, %v3161
      %v3178 = vmul.f32 %v3139, %v3161
      %v3179 = vmul.f32 %v3140, %v3161
      %v3180 = vmul.f32 %v3141, %v3161
      %v3181 = vmul.f32 %v3142, %v3161
      %v3182 = vmul.f32 %v3143, %v3161
      %v3183 = vmul.f32 %v3144, %v3161
      %v3184 = vmul.f32 %v3145, %v3161
      %v3185 = vmul.f32 %v3146, %v3161
      %v3186 = vmul.f32 %v3147, %v3161
      %v3187 = vmul.f32 %v3148, %v3161
      %v3188 = vmul.f32 %v3149, %v3161
      %v3189 = vmul.f32 %v3150, %v3161
      %v3190 = vmul.f32 %v3151, %v3161
      %v3191 = vmul.f32 %v3152, %v3161
      %v3192 = vmul.f32 %v3153, %v3161
      %v3193 = vmul.f32 %v3154, %v3161
      %v3194 = vmul.f32 %v3155, %v3161
      %v3195 = vld [vmem:[%s7] sm:$0x1]
      %v3197 = vlaneseq
      %v3198 = vshrl.u32 %v3197, 7
      %v3199 = vsub.s32 0, %v3198
      %v3200 = vrot.slane %v3195, %v3199
      %v3202 = vadd.f32 %v3163, %v3200
      %v3203 = vadd.f32 %v3164, %v3200
      %v3204 = vadd.f32 %v3165, %v3200
      %v3205 = vadd.f32 %v3166, %v3200
      %v3206 = vadd.f32 %v3167, %v3200
      %v3207 = vadd.f32 %v3168, %v3200
      %v3208 = vadd.f32 %v3169, %v3200
      %v3209 = vadd.f32 %v3170, %v3200
      %v3210 = vadd.f32 %v3171, %v3200
      %v3211 = vadd.f32 %v3172, %v3200
      %v3212 = vadd.f32 %v3173, %v3200
      %v3213 = vadd.f32 %v3174, %v3200
      %v3214 = vadd.f32 %v3175, %v3200
      %v3215 = vadd.f32 %v3176, %v3200
      %v3216 = vadd.f32 %v3177, %v3200
      %v3217 = vadd.f32 %v3178, %v3200
      %v3218 = vadd.f32 %v3179, %v3200
      %v3219 = vadd.f32 %v3180, %v3200
      %v3220 = vadd.f32 %v3181, %v3200
      %v3221 = vadd.f32 %v3182, %v3200
      %v3222 = vadd.f32 %v3183, %v3200
      %v3223 = vadd.f32 %v3184, %v3200
      %v3224 = vadd.f32 %v3185, %v3200
      %v3225 = vadd.f32 %v3186, %v3200
      %v3226 = vadd.f32 %v3187, %v3200
      %v3227 = vadd.f32 %v3188, %v3200
      %v3228 = vadd.f32 %v3189, %v3200
      %v3229 = vadd.f32 %v3190, %v3200
      %v3230 = vadd.f32 %v3191, %v3200
      %v3231 = vadd.f32 %v3192, %v3200
      %v3232 = vadd.f32 %v3193, %v3200
      %v3233 = vadd.f32 %v3194, %v3200
      %v3234 = vmax.f32 %v3202, 0.0
      %v3235 = vmax.f32 %v3203, 0.0
      %v3236 = vmax.f32 %v3204, 0.0
      %v3237 = vmax.f32 %v3205, 0.0
      %v3238 = vmax.f32 %v3206, 0.0
      %v3239 = vmax.f32 %v3207, 0.0
      %v3240 = vmax.f32 %v3208, 0.0
      %v3241 = vmax.f32 %v3209, 0.0
      %v3242 = vmax.f32 %v3210, 0.0
      %v3243 = vmax.f32 %v3211, 0.0
      %v3244 = vmax.f32 %v3212, 0.0
      %v3245 = vmax.f32 %v3213, 0.0
      %v3246 = vmax.f32 %v3214, 0.0
      %v3247 = vmax.f32 %v3215, 0.0
      %v3248 = vmax.f32 %v3216, 0.0
      %v3249 = vmax.f32 %v3217, 0.0
      %v3250 = vmax.f32 %v3218, 0.0
      %v3251 = vmax.f32 %v3219, 0.0
      %v3252 = vmax.f32 %v3220, 0.0
      %v3253 = vmax.f32 %v3221, 0.0
      %v3254 = vmax.f32 %v3222, 0.0
      %v3255 = vmax.f32 %v3223, 0.0
      %v3256 = vmax.f32 %v3224, 0.0
      %v3257 = vmax.f32 %v3225, 0.0
      %v3258 = vmax.f32 %v3226, 0.0
      %v3259 = vmax.f32 %v3227, 0.0
      %v3260 = vmax.f32 %v3228, 0.0
      %v3261 = vmax.f32 %v3229, 0.0
      %v3262 = vmax.f32 %v3230, 0.0
      %v3263 = vmax.f32 %v3231, 0.0
      %v3264 = vmax.f32 %v3232, 0.0
      %v3265 = vmax.f32 %v3233, 0.0
      %3266 = vst.msk [vmem:[%s426] sm:$0xff] %vm1014, %v3234
      %3267 = vst.msk [vmem:[%s426 + $0x8] sm:$0xff] %vm1014, %v3235
      %3268 = vst.msk [vmem:[%s426 + $0x10] sm:$0xff] %vm1014, %v3236
      %3269 = vst.msk [vmem:[%s426 + $0x18] sm:$0xff] %vm1014, %v3237
      %3270 = vst.msk [vmem:[%s426 + $0x20] sm:$0xff] %vm1014, %v3238
      %3271 = vst.msk [vmem:[%s426 + $0x28] sm:$0xff] %vm1014, %v3239
      %3272 = vst.msk [vmem:[%s426 + $0x30] sm:$0xff] %vm1014, %v3240
      %3273 = vst.msk [vmem:[%s426 + $0x38] sm:$0xff] %vm1014, %v3241
      %3274 = vst.msk [vmem:[%s426 + $0x40] sm:$0xff] %vm1014, %v3242
      %3275 = vst.msk [vmem:[%s426 + $0x48] sm:$0xff] %vm1014, %v3243
      %3276 = vst.msk [vmem:[%s426 + $0x50] sm:$0xff] %vm1014, %v3244
      %3277 = vst.msk [vmem:[%s426 + $0x58] sm:$0xff] %vm1014, %v3245
      %3278 = vst.msk [vmem:[%s426 + $0x60] sm:$0xff] %vm1014, %v3246
      %3279 = vst.msk [vmem:[%s426 + $0x68] sm:$0xff] %vm1014, %v3247
      %3280 = vst.msk [vmem:[%s426 + $0x70] sm:$0xff] %vm1014, %v3248
      %3281 = vst.msk [vmem:[%s426 + $0x78] sm:$0xff] %vm1014, %v3249
      %3282 = vst.msk [vmem:[%s426 + $0x80] sm:$0xff] %vm1014, %v3250
      %3283 = vst.msk [vmem:[%s426 + $0x88] sm:$0xff] %vm1014, %v3251
      %3284 = vst.msk [vmem:[%s426 + $0x90] sm:$0xff] %vm1014, %v3252
      %3285 = vst.msk [vmem:[%s426 + $0x98] sm:$0xff] %vm1014, %v3253
      %3286 = vst.msk [vmem:[%s426 + $0xa0] sm:$0xff] %vm1014, %v3254
      %3287 = vst.msk [vmem:[%s426 + $0xa8] sm:$0xff] %vm1014, %v3255
      %3288 = vst.msk [vmem:[%s426 + $0xb0] sm:$0xff] %vm1014, %v3256
      %3289 = vst.msk [vmem:[%s426 + $0xb8] sm:$0xff] %vm1014, %v3257
      %3290 = vst.msk [vmem:[%s426 + $0xc0] sm:$0xff] %vm1014, %v3258
      %3291 = vst.msk [vmem:[%s426 + $0xc8] sm:$0xff] %vm1014, %v3259
      %3292 = vst.msk [vmem:[%s426 + $0xd0] sm:$0xff] %vm1014, %v3260
      %3293 = vst.msk [vmem:[%s426 + $0xd8] sm:$0xff] %vm1014, %v3261
      %3294 = vst.msk [vmem:[%s426 + $0xe0] sm:$0xff] %vm1014, %v3262
      %3295 = vst.msk [vmem:[%s426 + $0xe8] sm:$0xff] %vm1014, %v3263
      %3296 = vst.msk [vmem:[%s426 + $0xf0] sm:$0xff] %vm1014, %v3264
      %3297 = vst.msk [vmem:[%s426 + $0xf8] sm:$0xff] %vm1014, %v3265
      %s3298 = smul.u32 16, %s24
      %p3299 = scmp.lt.s32.totalorder %s23, 1
      %s3300 = scalar_select %p3299, %s23, 1
      %p3301 = scmp.lt.s32.totalorder %s3298, 15
      %s3302 = scalar_select %p3301, %s3298, 15
      %s3303 = smul.addr %s3302, 2
      %s3304 = smul.addr %s3300, 32
      %s3305 = sadd.s32 %s3303, %s3304
      %s3306 = smul.addr %s3305, 8
      %s3307 = scalar_lea.vmem %s8, %s3306
      // Predicated region
      $region53: #{double_conv_pallas.1} parent=51 // pred_check
        %p3308 = pneg %p237
      $region54: #{double_conv_pallas.1} parent=51 // pred_check_branch
        %3310 = sbr.rel (%p3308) target = $region56
      $region55: #{double_conv_pallas.1} parent=51 // pred_region
        %s3311 = smul.u32 16, %s24
      $region56: #{double_conv_pallas.1} parent=51 // pred_fallthru
        _
    $region52: #{double_conv_pallas.1} parent=5 // pred_fallthru
      _
    %p3312 = scmp.le.s32.totalorder 2, %s14
    // Predicated region
    $region57: #{double_conv_pallas.1} parent=5 // pred_check
      %p3313 = pneg %p3312
    $region58: #{double_conv_pallas.1} parent=5 // pred_check_branch
      %3315 = sbr.rel (%p3313) target = $region60
    $region59: #{double_conv_pallas.1} parent=5 // pred_region
      %s3316 = ssub.s32 %s14, 2
      // Predicated region
      $region61: #{double_conv_pallas.1} parent=59 // pred_check
        %p3317 = pneg %p243
      $region62: #{double_conv_pallas.1} parent=59 // pred_check_branch
        %3319 = sbr.rel (%p3317) target = $region64
      $region63: #{double_conv_pallas.1} parent=59 // pred_region
        %s3320 = smul.u32 16, %s26
        %p3321 = scmp.lt.s32.totalorder %s25, 1
        %s3322 = scalar_select %p3321, %s25, 1
        %p3323 = scmp.lt.s32.totalorder %s3320, 15
        %s3324 = scalar_select %p3323, %s3320, 15
        %s3325 = smul.addr %s3324, 2
        %s3326 = smul.addr %s3322, 32
        %s3327 = sadd.s32 %s3325, %s3326
        %s3328 = smul.addr %s3327, 8
        %s3329 = scalar_lea.vmem %s8, %s3328
      $region64: #{double_conv_pallas.1} parent=59 // pred_fallthru
        _
    $region60: #{double_conv_pallas.1} parent=5 // pred_fallthru
      _
  $region6: #{double_conv_pallas.1} parent=0 // loop_footer
    %s18 = sadd.s32 1, %s14
  $region7: #{double_conv_pallas.1} parent=0 // loop_footer_branch
    %13 = sbr.rel target = $region3
  $region8: #{double_conv_pallas.1} parent=0 // loop_exit
    _

</llo_original>
